<compile_context>
chip_gen: v5e
topology: v5e:2x2
jax: 0.10.0
libtpu: 0.0.40
codegen_flags: <defaults>
</compile_context>

<pallas_src>
import functools

import jax
import jax.numpy as jnp
from jax import lax
from jax.experimental import pallas as pl
from jax.experimental.pallas import tpu as pltpu


def _pair(v):
    return (v, v) if isinstance(v, int) else tuple(v)


def _shifted_conv_kernel(x_ref, w_ref, b_ref, o_ref, acc_ref, *,
                         kh, kw, sh, sw, dh, dw, t_ho, wo):
    """One (batch, row-tile) step: out = sum_{i,j} shift_{i,j}(x) @ W[i,j] + b.

    x_ref  : (Hp, Wp, Cin)        zero-padded NHWC image of this batch element
    w_ref  : (kh*kw, Cin, N_pad)  sampled weight, zero-padded along N to 128
    b_ref  : (1, N_pad)           sampled bias (f32)
    o_ref  : (t_ho, Wo, N_pad)    output tile (lane-dense stores)
    acc_ref: (t_ho*Wo, N_pad) f32 VMEM accumulator scratch
    """
    row_base = pl.program_id(1) * (t_ho * sh)
    cin = x_ref.shape[-1]
    n_pad = o_ref.shape[-1]
    for r in range(kh * kw):                       # short static loop (unrolled)
        i, j = r // kw, r % kw
        row0 = row_base + i * dh
        rows = pl.ds(row0, t_ho) if sh == 1 else pl.ds(row0, t_ho, sh)
        cols = pl.ds(j * dw, wo) if sw == 1 else pl.ds(j * dw, wo, sw)
        slab = x_ref[rows, cols, :]                # (t_ho, Wo, Cin)
        contrib = jnp.dot(slab.reshape(t_ho * wo, cin), w_ref[r],
                          preferred_element_type=jnp.float32)
        if r == 0:
            acc_ref[...] = contrib
        else:
            acc_ref[...] += contrib
    out = acc_ref[...] + b_ref[...]                # (t_ho*Wo, N_pad) + (1, N_pad)
    o_ref[...] = out.reshape(t_ho, wo, n_pad).astype(o_ref.dtype)


def bbb_conv2d(x, w_mu, w_rho, w_eps, b_mu, b_rho, b_eps, *,
               stride=1, padding=0, dilation=1,
               compute_dtype=jnp.bfloat16, target_rows=1024,
               channels_last_out=False):
    """Pallas equivalent of BBBConv2d.forward (sample=True path), NCHW input."""
    B, Cin, H, W = x.shape
    Cout, Cin_w, kh, kw = w_mu.shape
    assert Cin == Cin_w, "groups != 1 not supported (module uses groups=1)"
    sh, sw = _pair(stride)
    ph, pw = _pair(padding)
    dh, dw = _pair(dilation)

    Ho = (H + 2 * ph - dh * (kh - 1) - 1) // sh + 1
    Wo = (W + 2 * pw - dw * (kw - 1) - 1) // sw + 1

    # --- Reparameterization sample, hoisted out of the grid loop (stable softplus). ---
    weight = w_mu + w_eps * jax.nn.softplus(w_rho)       # (Cout, Cin, kh, kw)
    bias = b_mu + b_eps * jax.nn.softplus(b_rho)         # (Cout,)

    # --- Layout plumbing: NHWC input, (kh*kw, Cin, N_pad) weights, 128-lane N. ---
    N_pad = -(-Cout // 128) * 128
    t_ho = max(1, min(Ho, max(1, target_rows // max(Wo, 1))))
    n_t = -(-Ho // t_ho)
    Ho_pad = n_t * t_ho

    # Zero-pad spatially; extra bottom rows keep the last row-tile's reads in-bounds.
    need_rows = (Ho_pad - 1) * sh + (kh - 1) * dh + 1
    extra_h = max(0, need_rows - (H + 2 * ph))
    x_nhwc = jnp.transpose(x, (0, 2, 3, 1))
    xp = jnp.pad(x_nhwc, ((0, 0), (ph, ph + extra_h), (pw, pw), (0, 0)))
    xp = xp.astype(compute_dtype)
    Hp, Wp = xp.shape[1], xp.shape[2]

    w_mat = jnp.transpose(weight, (2, 3, 1, 0)).reshape(kh * kw, Cin, Cout)
    w_mat = jnp.pad(w_mat, ((0, 0), (0, 0), (0, N_pad - Cout))).astype(compute_dtype)
    b_mat = jnp.pad(bias, (0, N_pad - Cout)).reshape(1, N_pad).astype(jnp.float32)

    kernel = functools.partial(_shifted_conv_kernel, kh=kh, kw=kw, sh=sh, sw=sw,
                               dh=dh, dw=dw, t_ho=t_ho, wo=Wo)

    out = pl.pallas_call(
        kernel,
        out_shape=jax.ShapeDtypeStruct((B, Ho_pad, Wo, N_pad), x.dtype),
        grid=(B, n_t),
        in_specs=[
            # Whole padded image of one batch element; constant in `t`, so it is
            # DMA'd once per batch element and stays resident across row tiles.
            pl.BlockSpec((None, Hp, Wp, Cin), lambda b, t: (b, 0, 0, 0)),
            # Sampled weight / bias: constant index map -> fetched once, resident.
            pl.BlockSpec((kh * kw, Cin, N_pad), lambda b, t: (0, 0, 0)),
            pl.BlockSpec((1, N_pad), lambda b, t: (0, 0)),
        ],
        out_specs=pl.BlockSpec((None, t_ho, Wo, N_pad), lambda b, t: (b, t, 0, 0)),
        scratch_shapes=[pltpu.VMEM((t_ho * Wo, N_pad), jnp.float32)],
        compiler_params=pltpu.CompilerParams(
            dimension_semantics=("parallel", "parallel"),   # megacore-shardable
            vmem_limit_bytes=64 * 1024 * 1024,
        ),
    )(xp, w_mat, b_mat)

    out = out[:, :Ho, :, :Cout]                   # drop row / lane padding
    if channels_last_out:
        return out                                # NHWC: skips the extra HBM transpose
    return jnp.transpose(out, (0, 3, 1, 2))       # NCHW, matching torch's conv2d


def calculate_kl(mu_q, sig_q, mu_p, sig_p):
    # Tiny scalar reduction over parameters; plain JAX (not worth a kernel).
    return 0.5 * (2 * jnp.log(sig_p / sig_q) - 1
                  + (sig_q / sig_p) ** 2
                  + ((mu_p - mu_q) / sig_p) ** 2).sum()


if __name__ == "__main__":
    key = jax.random.PRNGKey(0)
    keys = jax.random.split(key, 7)

    B, Cin, H, W = 2, 4, 16, 16
    Cout, ksz = 8, 3
    stride, padding, dilation = 1, 1, 1

    x = jax.random.normal(keys[0], (B, Cin, H, W), dtype=jnp.float32)

    # Posterior init per reset_parameters(): mu ~ N(0, 0.1), rho ~ N(-3, 0.1).
    w_mu = 0.1 * jax.random.normal(keys[1], (Cout, Cin, ksz, ksz), jnp.float32)
    w_rho = -3.0 + 0.1 * jax.random.normal(keys[2], (Cout, Cin, ksz, ksz), jnp.float32)
    b_mu = 0.1 * jax.random.normal(keys[3], (Cout,), jnp.float32)
    b_rho = -3.0 + 0.1 * jax.random.normal(keys[4], (Cout,), jnp.float32)

    # TODO(synk): torch draws eps inside forward() via torch.empty().normal_();
    # here the caller supplies standard-normal eps (jax.random) deterministically.
    w_eps = jax.random.normal(keys[5], (Cout, Cin, ksz, ksz), jnp.float32)
    b_eps = jax.random.normal(keys[6], (Cout,), jnp.float32)

    out = bbb_conv2d(x, w_mu, w_rho, w_eps, b_mu, b_rho, b_eps,
                     stride=stride, padding=padding, dilation=dilation)
    out = jax.block_until_ready(out)

    # --- Reference: same sampled weight/bias through lax.conv (f32, HIGHEST). ---
    w_sigma = jax.nn.softplus(w_rho)
    b_sigma = jax.nn.softplus(b_rho)
    weight = w_mu + w_eps * w_sigma
    bias = b_mu + b_eps * b_sigma

    def ref_conv(xx, ww):
        return lax.conv_general_dilated(
            xx, ww,
            window_strides=(stride, stride),
            padding=((padding, padding), (padding, padding)),
            rhs_dilation=(dilation, dilation),
            dimension_numbers=("NCHW", "OIHW", "NCHW"),
            precision=lax.Precision.HIGHEST,
        ) + bias[None, :, None, None]

    # Apples-to-apples check: reference on the same bf16-quantized operands the
    # kernel feeds the MXU (accumulation stays f32 in both).
    q = lambda a: a.astype(jnp.bfloat16).astype(jnp.float32)
    ref_q = ref_conv(q(x), q(weight))
    # Looser sanity check against the pure-f32 conv (bf16 operand quantization only).
    ref_f32 = ref_conv(x, weight)

    assert out.shape == (B, Cout, H, W), out.shape
    assert out.dtype == x.dtype
    assert bool(jnp.allclose(out, ref_q, rtol=1e-4, atol=2e-4)), \
        float(jnp.max(jnp.abs(out - ref_q)))
    assert bool(jnp.allclose(out, ref_f32, rtol=5e-2, atol=5e-2)), \
        float(jnp.max(jnp.abs(out - ref_f32)))

    # kl_loss() of the module (prior_mu=0, prior_sigma=0.1).
    kl = calculate_kl(0.0, 0.1, w_mu, w_sigma) + calculate_kl(0.0, 0.1, b_mu, b_sigma)
    assert bool(jnp.isfinite(kl))

    print("KERNEL_OK")
</pallas_src>

<mosaic_0001>
module attributes {stable_mosaic.version = 11 : i64} {
  func.func @_shifted_conv_kernel(%arg0: i32, %arg1: i32, %arg2: memref<1x18x18x4xbf16, #tpu.memory_space<vmem>>, %arg3: memref<9x4x128xbf16, #tpu.memory_space<vmem>>, %arg4: memref<1x128xf32, #tpu.memory_space<vmem>>, %arg5: memref<1x16x16x128xf32, #tpu.memory_space<vmem>>, %arg6: memref<256x128xf32, #tpu.memory_space<vmem>>) attributes {dimension_semantics = [#tpu.dimension_semantics<parallel>, #tpu.dimension_semantics<parallel>], iteration_bounds = array<i64: 2, 1>, scalar_prefetch = 0 : i64, scratch_operands = 1 : i64, tpu.core_type = #tpu.core_type<tc>, window_params = [{transform_indices = @transform_0, window_bounds = array<i64: 1, 18, 18, 4>}, {pipeline_mode = #tpu.pipeline_mode<synchronous>, transform_indices = @transform_1, window_bounds = array<i64: 9, 4, 128>}, {pipeline_mode = #tpu.pipeline_mode<synchronous>, transform_indices = @transform_2, window_bounds = array<i64: 1, 128>}, {transform_indices = @transform_3, window_bounds = array<i64: 1, 16, 16, 128>}]} {
    %c16_i32 = arith.constant 16 : i32
    %0 = arith.muli %arg1, %c16_i32 : i32
    %c0_i32 = arith.constant 0 : i32
    %1 = arith.addi %0, %c0_i32 : i32
    %c0 = arith.constant 0 : index
    %2 = arith.index_cast %1 : i32 to index
    %c0_0 = arith.constant 0 : index
    %c0_1 = arith.constant 0 : index
    %3 = vector.load %arg2[%c0, %2, %c0_0, %c0_1] : memref<1x18x18x4xbf16, #tpu.memory_space<vmem>>, vector<1x16x16x4xbf16>
    %4 = vector.shape_cast %3 : vector<1x16x16x4xbf16> to vector<16x16x4xbf16>
    %5 = vector.shape_cast %4 : vector<16x16x4xbf16> to vector<256x4xbf16>
    %c0_2 = arith.constant 0 : index
    %c0_3 = arith.constant 0 : index
    %c0_4 = arith.constant 0 : index
    %6 = vector.load %arg3[%c0_2, %c0_3, %c0_4] : memref<9x4x128xbf16, #tpu.memory_space<vmem>>, vector<1x4x128xbf16>
    %7 = vector.shape_cast %6 : vector<1x4x128xbf16> to vector<4x128xbf16>
    %cst = arith.constant dense<0.000000e+00> : vector<256x128xf32>
    %8 = tpu.matmul %5, %7, %cst {dimension_numbers = #tpu.dot_dimension_numbers<[1], [0], [0], [1], [0, 0, 1, 1], [], []>} : vector<256x4xbf16>, vector<4x128xbf16>, vector<256x128xf32> -> vector<256x128xf32>
    %c0_5 = arith.constant 0 : index
    %c0_6 = arith.constant 0 : index
    %9 = vector.load %arg6[%c0_5, %c0_6] : memref<256x128xf32, #tpu.memory_space<vmem>>, vector<256x128xf32>
    tpu.vector_store %arg6[%c0_5, %c0_6], %8 {strides = array<i32>} : memref<256x128xf32, #tpu.memory_space<vmem>>, vector<256x128xf32>,
    %c0_i32_7 = arith.constant 0 : i32
    %10 = arith.addi %0, %c0_i32_7 : i32
    %c0_8 = arith.constant 0 : index
    %11 = arith.index_cast %10 : i32 to index
    %c1 = arith.constant 1 : index
    %c0_9 = arith.constant 0 : index
    %12 = vector.load %arg2[%c0_8, %11, %c1, %c0_9] : memref<1x18x18x4xbf16, #tpu.memory_space<vmem>>, vector<1x16x16x4xbf16>
    %13 = vector.shape_cast %12 : vector<1x16x16x4xbf16> to vector<16x16x4xbf16>
    %14 = vector.shape_cast %13 : vector<16x16x4xbf16> to vector<256x4xbf16>
    %c1_10 = arith.constant 1 : index
    %c0_11 = arith.constant 0 : index
    %c0_12 = arith.constant 0 : index
    %15 = vector.load %arg3[%c1_10, %c0_11, %c0_12] : memref<9x4x128xbf16, #tpu.memory_space<vmem>>, vector<1x4x128xbf16>
    %16 = vector.shape_cast %15 : vector<1x4x128xbf16> to vector<4x128xbf16>
    %cst_13 = arith.constant dense<0.000000e+00> : vector<256x128xf32>
    %17 = tpu.matmul %14, %16, %cst_13 {dimension_numbers = #tpu.dot_dimension_numbers<[1], [0], [0], [1], [0, 0, 1, 1], [], []>} : vector<256x4xbf16>, vector<4x128xbf16>, vector<256x128xf32> -> vector<256x128xf32>
    %c0_14 = arith.constant 0 : index
    %c0_15 = arith.constant 0 : index
    %18 = vector.load %arg6[%c0_14, %c0_15] : memref<256x128xf32, #tpu.memory_space<vmem>>, vector<256x128xf32>
    %19 = arith.addf %18, %17 : vector<256x128xf32>
    %c0_16 = arith.constant 0 : index
    %c0_17 = arith.constant 0 : index
    %20 = vector.load %arg6[%c0_16, %c0_17] : memref<256x128xf32, #tpu.memory_space<vmem>>, vector<256x128xf32>
    tpu.vector_store %arg6[%c0_16, %c0_17], %19 {strides = array<i32>} : memref<256x128xf32, #tpu.memory_space<vmem>>, vector<256x128xf32>,
    %c0_i32_18 = arith.constant 0 : i32
    %21 = arith.addi %0, %c0_i32_18 : i32
    %c0_19 = arith.constant 0 : index
    %22 = arith.index_cast %21 : i32 to index
    %c2 = arith.constant 2 : index
    %c0_20 = arith.constant 0 : index
    %23 = vector.load %arg2[%c0_19, %22, %c2, %c0_20] : memref<1x18x18x4xbf16, #tpu.memory_space<vmem>>, vector<1x16x16x4xbf16>
    %24 = vector.shape_cast %23 : vector<1x16x16x4xbf16> to vector<16x16x4xbf16>
    %25 = vector.shape_cast %24 : vector<16x16x4xbf16> to vector<256x4xbf16>
    %c2_21 = arith.constant 2 : index
    %c0_22 = arith.constant 0 : index
    %c0_23 = arith.constant 0 : index
    %26 = vector.load %arg3[%c2_21, %c0_22, %c0_23] : memref<9x4x128xbf16, #tpu.memory_space<vmem>>, vector<1x4x128xbf16>
    %27 = vector.shape_cast %26 : vector<1x4x128xbf16> to vector<4x128xbf16>
    %cst_24 = arith.constant dense<0.000000e+00> : vector<256x128xf32>
    %28 = tpu.matmul %25, %27, %cst_24 {dimension_numbers = #tpu.dot_dimension_numbers<[1], [0], [0], [1], [0, 0, 1, 1], [], []>} : vector<256x4xbf16>, vector<4x128xbf16>, vector<256x128xf32> -> vector<256x128xf32>
    %c0_25 = arith.constant 0 : index
    %c0_26 = arith.constant 0 : index
    %29 = vector.load %arg6[%c0_25, %c0_26] : memref<256x128xf32, #tpu.memory_space<vmem>>, vector<256x128xf32>
    %30 = arith.addf %29, %28 : vector<256x128xf32>
    %c0_27 = arith.constant 0 : index
    %c0_28 = arith.constant 0 : index
    %31 = vector.load %arg6[%c0_27, %c0_28] : memref<256x128xf32, #tpu.memory_space<vmem>>, vector<256x128xf32>
    tpu.vector_store %arg6[%c0_27, %c0_28], %30 {strides = array<i32>} : memref<256x128xf32, #tpu.memory_space<vmem>>, vector<256x128xf32>,
    %c1_i32 = arith.constant 1 : i32
    %32 = arith.addi %0, %c1_i32 : i32
    %c0_29 = arith.constant 0 : index
    %33 = arith.index_cast %32 : i32 to index
    %c0_30 = arith.constant 0 : index
    %c0_31 = arith.constant 0 : index
    %34 = vector.load %arg2[%c0_29, %33, %c0_30, %c0_31] : memref<1x18x18x4xbf16, #tpu.memory_space<vmem>>, vector<1x16x16x4xbf16>
    %35 = vector.shape_cast %34 : vector<1x16x16x4xbf16> to vector<16x16x4xbf16>
    %36 = vector.shape_cast %35 : vector<16x16x4xbf16> to vector<256x4xbf16>
    %c3 = arith.constant 3 : index
    %c0_32 = arith.constant 0 : index
    %c0_33 = arith.constant 0 : index
    %37 = vector.load %arg3[%c3, %c0_32, %c0_33] : memref<9x4x128xbf16, #tpu.memory_space<vmem>>, vector<1x4x128xbf16>
    %38 = vector.shape_cast %37 : vector<1x4x128xbf16> to vector<4x128xbf16>
    %cst_34 = arith.constant dense<0.000000e+00> : vector<256x128xf32>
    %39 = tpu.matmul %36, %38, %cst_34 {dimension_numbers = #tpu.dot_dimension_numbers<[1], [0], [0], [1], [0, 0, 1, 1], [], []>} : vector<256x4xbf16>, vector<4x128xbf16>, vector<256x128xf32> -> vector<256x128xf32>
    %c0_35 = arith.constant 0 : index
    %c0_36 = arith.constant 0 : index
    %40 = vector.load %arg6[%c0_35, %c0_36] : memref<256x128xf32, #tpu.memory_space<vmem>>, vector<256x128xf32>
    %41 = arith.addf %40, %39 : vector<256x128xf32>
    %c0_37 = arith.constant 0 : index
    %c0_38 = arith.constant 0 : index
    %42 = vector.load %arg6[%c0_37, %c0_38] : memref<256x128xf32, #tpu.memory_space<vmem>>, vector<256x128xf32>
    tpu.vector_store %arg6[%c0_37, %c0_38], %41 {strides = array<i32>} : memref<256x128xf32, #tpu.memory_space<vmem>>, vector<256x128xf32>,
    %c1_i32_39 = arith.constant 1 : i32
    %43 = arith.addi %0, %c1_i32_39 : i32
    %c0_40 = arith.constant 0 : index
    %44 = arith.index_cast %43 : i32 to index
    %c1_41 = arith.constant 1 : index
    %c0_42 = arith.constant 0 : index
    %45 = vector.load %arg2[%c0_40, %44, %c1_41, %c0_42] : memref<1x18x18x4xbf16, #tpu.memory_space<vmem>>, vector<1x16x16x4xbf16>
    %46 = vector.shape_cast %45 : vector<1x16x16x4xbf16> to vector<16x16x4xbf16>
    %47 = vector.shape_cast %46 : vector<16x16x4xbf16> to vector<256x4xbf16>
    %c4 = arith.constant 4 : index
    %c0_43 = arith.constant 0 : index
    %c0_44 = arith.constant 0 : index
    %48 = vector.load %arg3[%c4, %c0_43, %c0_44] : memref<9x4x128xbf16, #tpu.memory_space<vmem>>, vector<1x4x128xbf16>
    %49 = vector.shape_cast %48 : vector<1x4x128xbf16> to vector<4x128xbf16>
    %cst_45 = arith.constant dense<0.000000e+00> : vector<256x128xf32>
    %50 = tpu.matmul %47, %49, %cst_45 {dimension_numbers = #tpu.dot_dimension_numbers<[1], [0], [0], [1], [0, 0, 1, 1], [], []>} : vector<256x4xbf16>, vector<4x128xbf16>, vector<256x128xf32> -> vector<256x128xf32>
    %c0_46 = arith.constant 0 : index
    %c0_47 = arith.constant 0 : index
    %51 = vector.load %arg6[%c0_46, %c0_47] : memref<256x128xf32, #tpu.memory_space<vmem>>, vector<256x128xf32>
    %52 = arith.addf %51, %50 : vector<256x128xf32>
    %c0_48 = arith.constant 0 : index
    %c0_49 = arith.constant 0 : index
    %53 = vector.load %arg6[%c0_48, %c0_49] : memref<256x128xf32, #tpu.memory_space<vmem>>, vector<256x128xf32>
    tpu.vector_store %arg6[%c0_48, %c0_49], %52 {strides = array<i32>} : memref<256x128xf32, #tpu.memory_space<vmem>>, vector<256x128xf32>,
    %c1_i32_50 = arith.constant 1 : i32
    %54 = arith.addi %0, %c1_i32_50 : i32
    %c0_51 = arith.constant 0 : index
    %55 = arith.index_cast %54 : i32 to index
    %c2_52 = arith.constant 2 : index
    %c0_53 = arith.constant 0 : index
    %56 = vector.load %arg2[%c0_51, %55, %c2_52, %c0_53] : memref<1x18x18x4xbf16, #tpu.memory_space<vmem>>, vector<1x16x16x4xbf16>
    %57 = vector.shape_cast %56 : vector<1x16x16x4xbf16> to vector<16x16x4xbf16>
    %58 = vector.shape_cast %57 : vector<16x16x4xbf16> to vector<256x4xbf16>
    %c5 = arith.constant 5 : index
    %c0_54 = arith.constant 0 : index
    %c0_55 = arith.constant 0 : index
    %59 = vector.load %arg3[%c5, %c0_54, %c0_55] : memref<9x4x128xbf16, #tpu.memory_space<vmem>>, vector<1x4x128xbf16>
    %60 = vector.shape_cast %59 : vector<1x4x128xbf16> to vector<4x128xbf16>
    %cst_56 = arith.constant dense<0.000000e+00> : vector<256x128xf32>
    %61 = tpu.matmul %58, %60, %cst_56 {dimension_numbers = #tpu.dot_dimension_numbers<[1], [0], [0], [1], [0, 0, 1, 1], [], []>} : vector<256x4xbf16>, vector<4x128xbf16>, vector<256x128xf32> -> vector<256x128xf32>
    %c0_57 = arith.constant 0 : index
    %c0_58 = arith.constant 0 : index
    %62 = vector.load %arg6[%c0_57, %c0_58] : memref<256x128xf32, #tpu.memory_space<vmem>>, vector<256x128xf32>
    %63 = arith.addf %62, %61 : vector<256x128xf32>
    %c0_59 = arith.constant 0 : index
    %c0_60 = arith.constant 0 : index
    %64 = vector.load %arg6[%c0_59, %c0_60] : memref<256x128xf32, #tpu.memory_space<vmem>>, vector<256x128xf32>
    tpu.vector_store %arg6[%c0_59, %c0_60], %63 {strides = array<i32>} : memref<256x128xf32, #tpu.memory_space<vmem>>, vector<256x128xf32>,
    %c2_i32 = arith.constant 2 : i32
    %65 = arith.addi %0, %c2_i32 : i32
    %c0_61 = arith.constant 0 : index
    %66 = arith.index_cast %65 : i32 to index
    %c0_62 = arith.constant 0 : index
    %c0_63 = arith.constant 0 : index
    %67 = vector.load %arg2[%c0_61, %66, %c0_62, %c0_63] : memref<1x18x18x4xbf16, #tpu.memory_space<vmem>>, vector<1x16x16x4xbf16>
    %68 = vector.shape_cast %67 : vector<1x16x16x4xbf16> to vector<16x16x4xbf16>
    %69 = vector.shape_cast %68 : vector<16x16x4xbf16> to vector<256x4xbf16>
    %c6 = arith.constant 6 : index
    %c0_64 = arith.constant 0 : index
    %c0_65 = arith.constant 0 : index
    %70 = vector.load %arg3[%c6, %c0_64, %c0_65] : memref<9x4x128xbf16, #tpu.memory_space<vmem>>, vector<1x4x128xbf16>
    %71 = vector.shape_cast %70 : vector<1x4x128xbf16> to vector<4x128xbf16>
    %cst_66 = arith.constant dense<0.000000e+00> : vector<256x128xf32>
    %72 = tpu.matmul %69, %71, %cst_66 {dimension_numbers = #tpu.dot_dimension_numbers<[1], [0], [0], [1], [0, 0, 1, 1], [], []>} : vector<256x4xbf16>, vector<4x128xbf16>, vector<256x128xf32> -> vector<256x128xf32>
    %c0_67 = arith.constant 0 : index
    %c0_68 = arith.constant 0 : index
    %73 = vector.load %arg6[%c0_67, %c0_68] : memref<256x128xf32, #tpu.memory_space<vmem>>, vector<256x128xf32>
    %74 = arith.addf %73, %72 : vector<256x128xf32>
    %c0_69 = arith.constant 0 : index
    %c0_70 = arith.constant 0 : index
    %75 = vector.load %arg6[%c0_69, %c0_70] : memref<256x128xf32, #tpu.memory_space<vmem>>, vector<256x128xf32>
    tpu.vector_store %arg6[%c0_69, %c0_70], %74 {strides = array<i32>} : memref<256x128xf32, #tpu.memory_space<vmem>>, vector<256x128xf32>,
    %c2_i32_71 = arith.constant 2 : i32
    %76 = arith.addi %0, %c2_i32_71 : i32
    %c0_72 = arith.constant 0 : index
    %77 = arith.index_cast %76 : i32 to index
    %c1_73 = arith.constant 1 : index
    %c0_74 = arith.constant 0 : index
    %78 = vector.load %arg2[%c0_72, %77, %c1_73, %c0_74] : memref<1x18x18x4xbf16, #tpu.memory_space<vmem>>, vector<1x16x16x4xbf16>
    %79 = vector.shape_cast %78 : vector<1x16x16x4xbf16> to vector<16x16x4xbf16>
    %80 = vector.shape_cast %79 : vector<16x16x4xbf16> to vector<256x4xbf16>
    %c7 = arith.constant 7 : index
    %c0_75 = arith.constant 0 : index
    %c0_76 = arith.constant 0 : index
    %81 = vector.load %arg3[%c7, %c0_75, %c0_76] : memref<9x4x128xbf16, #tpu.memory_space<vmem>>, vector<1x4x128xbf16>
    %82 = vector.shape_cast %81 : vector<1x4x128xbf16> to vector<4x128xbf16>
    %cst_77 = arith.constant dense<0.000000e+00> : vector<256x128xf32>
    %83 = tpu.matmul %80, %82, %cst_77 {dimension_numbers = #tpu.dot_dimension_numbers<[1], [0], [0], [1], [0, 0, 1, 1], [], []>} : vector<256x4xbf16>, vector<4x128xbf16>, vector<256x128xf32> -> vector<256x128xf32>
    %c0_78 = arith.constant 0 : index
    %c0_79 = arith.constant 0 : index
    %84 = vector.load %arg6[%c0_78, %c0_79] : memref<256x128xf32, #tpu.memory_space<vmem>>, vector<256x128xf32>
    %85 = arith.addf %84, %83 : vector<256x128xf32>
    %c0_80 = arith.constant 0 : index
    %c0_81 = arith.constant 0 : index
    %86 = vector.load %arg6[%c0_80, %c0_81] : memref<256x128xf32, #tpu.memory_space<vmem>>, vector<256x128xf32>
    tpu.vector_store %arg6[%c0_80, %c0_81], %85 {strides = array<i32>} : memref<256x128xf32, #tpu.memory_space<vmem>>, vector<256x128xf32>,
    %c2_i32_82 = arith.constant 2 : i32
    %87 = arith.addi %0, %c2_i32_82 : i32
    %c0_83 = arith.constant 0 : index
    %88 = arith.index_cast %87 : i32 to index
    %c2_84 = arith.constant 2 : index
    %c0_85 = arith.constant 0 : index
    %89 = vector.load %arg2[%c0_83, %88, %c2_84, %c0_85] : memref<1x18x18x4xbf16, #tpu.memory_space<vmem>>, vector<1x16x16x4xbf16>
    %90 = vector.shape_cast %89 : vector<1x16x16x4xbf16> to vector<16x16x4xbf16>
    %91 = vector.shape_cast %90 : vector<16x16x4xbf16> to vector<256x4xbf16>
    %c8 = arith.constant 8 : index
    %c0_86 = arith.constant 0 : index
    %c0_87 = arith.constant 0 : index
    %92 = vector.load %arg3[%c8, %c0_86, %c0_87] : memref<9x4x128xbf16, #tpu.memory_space<vmem>>, vector<1x4x128xbf16>
    %93 = vector.shape_cast %92 : vector<1x4x128xbf16> to vector<4x128xbf16>
    %cst_88 = arith.constant dense<0.000000e+00> : vector<256x128xf32>
    %94 = tpu.matmul %91, %93, %cst_88 {dimension_numbers = #tpu.dot_dimension_numbers<[1], [0], [0], [1], [0, 0, 1, 1], [], []>} : vector<256x4xbf16>, vector<4x128xbf16>, vector<256x128xf32> -> vector<256x128xf32>
    %c0_89 = arith.constant 0 : index
    %c0_90 = arith.constant 0 : index
    %95 = vector.load %arg6[%c0_89, %c0_90] : memref<256x128xf32, #tpu.memory_space<vmem>>, vector<256x128xf32>
    %96 = arith.addf %95, %94 : vector<256x128xf32>
    %c0_91 = arith.constant 0 : index
    %c0_92 = arith.constant 0 : index
    %97 = vector.load %arg6[%c0_91, %c0_92] : memref<256x128xf32, #tpu.memory_space<vmem>>, vector<256x128xf32>
    tpu.vector_store %arg6[%c0_91, %c0_92], %96 {strides = array<i32>} : memref<256x128xf32, #tpu.memory_space<vmem>>, vector<256x128xf32>,
    %c0_93 = arith.constant 0 : index
    %c0_94 = arith.constant 0 : index
    %98 = vector.load %arg6[%c0_93, %c0_94] : memref<256x128xf32, #tpu.memory_space<vmem>>, vector<256x128xf32>
    %c0_95 = arith.constant 0 : index
    %c0_96 = arith.constant 0 : index
    %99 = vector.load %arg4[%c0_95, %c0_96] : memref<1x128xf32, #tpu.memory_space<vmem>>, vector<1x128xf32>
    %100 = vector.broadcast %99 : vector<1x128xf32> to vector<256x128xf32>
    %101 = arith.addf %98, %100 : vector<256x128xf32>
    %102 = vector.shape_cast %101 : vector<256x128xf32> to vector<16x16x128xf32>
    %c0_97 = arith.constant 0 : index
    %c0_98 = arith.constant 0 : index
    %c0_99 = arith.constant 0 : index
    %c0_100 = arith.constant 0 : index
    %103 = vector.load %arg5[%c0_97, %c0_98, %c0_99, %c0_100] : memref<1x16x16x128xf32, #tpu.memory_space<vmem>>, vector<1x16x16x128xf32>
    %104 = vector.shape_cast %103 : vector<1x16x16x128xf32> to vector<16x16x128xf32>
    %105 = vector.shape_cast %102 : vector<16x16x128xf32> to vector<1x16x16x128xf32>
    tpu.vector_store %arg5[%c0_97, %c0_98, %c0_99, %c0_100], %105 {strides = array<i32>} : memref<1x16x16x128xf32, #tpu.memory_space<vmem>>, vector<1x16x16x128xf32>,
    return
  }
  func.func @transform_0(%arg0: i32, %arg1: i32) -> (i32, i32, i32, i32) {
    %c0_i32 = arith.constant 0 : i32
    %c0_i32_0 = arith.constant 0 : i32
    %c0_i32_1 = arith.constant 0 : i32
    %c0_i32_2 = arith.constant 0 : i32
    return %arg0, %c0_i32, %c0_i32_0, %c0_i32_1 : i32, i32, i32, i32
  }
  func.func @transform_1(%arg0: i32, %arg1: i32) -> (i32, i32, i32) {
    %c0_i32 = arith.constant 0 : i32
    %c0_i32_0 = arith.constant 0 : i32
    %c0_i32_1 = arith.constant 0 : i32
    %c0_i32_2 = arith.constant 0 : i32
    return %c0_i32, %c0_i32_0, %c0_i32_1 : i32, i32, i32
  }
  func.func @transform_2(%arg0: i32, %arg1: i32) -> (i32, i32) {
    %c0_i32 = arith.constant 0 : i32
    %c0_i32_0 = arith.constant 0 : i32
    %c0_i32_1 = arith.constant 0 : i32
    return %c0_i32, %c0_i32_0 : i32, i32
  }
  func.func @transform_3(%arg0: i32, %arg1: i32) -> (i32, i32, i32, i32) {
    %c0_i32 = arith.constant 0 : i32
    %c0_i32_0 = arith.constant 0 : i32
    %c0_i32_1 = arith.constant 0 : i32
    return %arg0, %arg1, %c0_i32, %c0_i32_0 : i32, i32, i32, i32
  }
}

</mosaic_0001>

<llo_original>
// kernel: tpu_custom_call.1
$region0: #{tpu_custom_call.1}
  #allocation0 [shape = 'u32[]', space=smem, size = 0x4, offset = 0x4, fixed_abs, tag = 'smem constant byte address 0x4 - core index']
  #allocation1 [shape = 'u32[72,128]{1,0:T(1,128)}', space=vmem, size = 0x9000, scoped, tag = 'internal scratch']
  #allocation2 [shape = 'f32[256,128]{1,0:T(8,128)}', space=vmem, size = 0x20000, scoped, tag = 'scratch operand']
  %s0 = inlined_call_operand.vmem [shape: bf16[2,18,18,4], index: 0, kind: input, shape index: {}]
  %s1 = inlined_call_operand.vmem [shape: bf16[9,4,128], index: 1, kind: input, shape index: {}]
  %s2 = inlined_call_operand.vmem [shape: f32[1,128], index: 2, kind: input, shape index: {}]
  %s3 = inlined_call_operand.hbm [shape: f32[2,16,16,128], index: 3, kind: output, shape index: {}]
  %s4 = sld [smem:[#allocation0]]
  $region45: #{tpu_custom_call.1} parent=0
    _
  %s6 = ssub.s32 1, %s4
  %s7 = scalar_select 0, %s6, %s4
  $region1: #{tpu_custom_call.1} parent=0
    #allocation3 [shape = 'u8[262144]{0}', space=vmem, size = 0x40000, scoped, tag = 'output window, operand 0']
    #allocation4 [shape = 's32[2]{0}', space=sflag, size = 0x8, scoped, tag = 'scoped memory for tpu_custom_call.1']
    %8 = vsyncpa [#allocation4], 0
    %s9 = scalar_lea.sflag [#allocation4], 1
    %10 = vsyncpa %s9, 0
    loop: start=0, step=1, limit=4
    $region2: #{tpu_custom_call.1} parent=1 // loop_pre_header
      _
    $region3: #{tpu_custom_call.1} parent=1 // loop_header
      %s12 = sphi 0, %s16
      %p13 = scmp.ge.s32.totalorder %s12, 4
      %s19 = sphi 0, %s31
      %s20 = sphi 0, %s27
      %s21 = sphi 0, %s19
      %s22 = sphi 0, %s20
      %s23 = sphi 0, %s21
      %s24 = sphi 0, %s22
      %s34 = sphi 0, %s36
      %s37 = sphi 0, %s34
      %s38 = sphi 0, %s37
      %s54 = sphi 0, %s38
      %s58 = sphi 0, %s58
      %s60 = sphi 0, %s58
      %s61 = sphi 0, %s60
      %s75 = sphi 0, %s61
      %s79 = sphi 0, %s79
      %s81 = sphi 0, %s79
      %s82 = sphi 0, %s81
      %s96 = sphi 0, %s82
      %s104 = sphi 0, %s106
      %s107 = sphi 0, %s104
      %s108 = sphi 0, %s107
      %s124 = sphi 0, %s108
    $region4: #{tpu_custom_call.1} parent=1 // loop_header_branch
      %15 = sbr.rel (%p13) target = $region8
    $region5: #{tpu_custom_call.1} parent=1 // loop_body
      %s17 = ssub.s32 %s12, 1
      %s18 = ssub.s32 %s12, 2
      %s25 = sadd.s32 1, %s20
      %p26 = scmp.ge.s32.totalorder %s25, 1
      %s27 = scalar_select %p26, 0, %s25
      %s28 = sadd.s32 1, %s19
      %s29 = scalar_select %p26, %s28, %s19
      %p30 = scmp.ge.s32.totalorder %s29, 2
      %s31 = scalar_select %p30, 0, %s29
      %s32 = ssub.s32 %s19, %s31
      %p33 = scmp.eq.s32.totalorder %s32, 0
      %s35 = sadd.s32 %s34, 1
      %s36 = scalar_select %p33, %s34, %s35
      %p39 = pneg %p33
      %p40 = scmp.eq.s32.totalorder %s12, 1
      %p41 = por %p39, %p40
      %p42 = scmp.ne.s32.totalorder %s34, %s37
      %p43 = scmp.eq.s32.totalorder %s12, 0
      %p44 = por %p42, %p43
      %p45 = scmp.ne.s32.totalorder %s34, %s37
      %p46 = scmp.eq.s32.totalorder %s17, 1
      %p47 = por %p45, %p46
      %p48 = scmp.ne.s32.totalorder %s37, %s38
      %p49 = scmp.eq.s32.totalorder %s17, 0
      %p50 = por %p48, %p49
      %p51 = scmp.ne.s32.totalorder %s37, %s38
      %p52 = scmp.eq.s32.totalorder %s18, 1
      %p53 = por %p51, %p52
      %p55 = scmp.ne.s32.totalorder %s38, %s54
      %p56 = scmp.eq.s32.totalorder %s18, 0
      %p57 = por %p55, %p56
      %s59 = sadd.s32 %s58, 1
      %p62 = scmp.eq.s32.totalorder %s12, 1
      %p63 = scmp.ne.s32.totalorder %s58, %s60
      %p64 = scmp.eq.s32.totalorder %s12, 0
      %p65 = por %p63, %p64
      %p66 = scmp.ne.s32.totalorder %s58, %s60
      %p67 = scmp.eq.s32.totalorder %s17, 1
      %p68 = por %p66, %p67
      %p69 = scmp.ne.s32.totalorder %s60, %s61
      %p70 = scmp.eq.s32.totalorder %s17, 0
      %p71 = por %p69, %p70
      %p72 = scmp.ne.s32.totalorder %s60, %s61
      %p73 = scmp.eq.s32.totalorder %s18, 1
      %p74 = por %p72, %p73
      %p76 = scmp.ne.s32.totalorder %s61, %s75
      %p77 = scmp.eq.s32.totalorder %s18, 0
      %p78 = por %p76, %p77
      %s80 = sadd.s32 %s79, 1
      %p83 = scmp.eq.s32.totalorder %s12, 1
      %p84 = scmp.ne.s32.totalorder %s79, %s81
      %p85 = scmp.eq.s32.totalorder %s12, 0
      %p86 = por %p84, %p85
      %p87 = scmp.ne.s32.totalorder %s79, %s81
      %p88 = scmp.eq.s32.totalorder %s17, 1
      %p89 = por %p87, %p88
      %p90 = scmp.ne.s32.totalorder %s81, %s82
      %p91 = scmp.eq.s32.totalorder %s17, 0
      %p92 = por %p90, %p91
      %p93 = scmp.ne.s32.totalorder %s81, %s82
      %p94 = scmp.eq.s32.totalorder %s18, 1
      %p95 = por %p93, %p94
      %p97 = scmp.ne.s32.totalorder %s82, %s96
      %p98 = scmp.eq.s32.totalorder %s18, 0
      %p99 = por %p97, %p98
      %s100 = ssub.s32 %s19, %s31
      %s101 = ssub.s32 %s20, %s27
      %s102 = sor.u32 %s100, %s101
      %p103 = scmp.eq.s32.totalorder %s102, 0
      %s105 = sadd.s32 %s104, 1
      %s106 = scalar_select %p103, %s104, %s105
      %p109 = pneg %p103
      %p110 = scmp.eq.s32.totalorder %s12, 1
      %p111 = por %p109, %p110
      %p112 = scmp.ne.s32.totalorder %s104, %s107
      %p113 = scmp.eq.s32.totalorder %s12, 0
      %p114 = por %p112, %p113
      %p115 = scmp.ne.s32.totalorder %s104, %s107
      %p116 = scmp.eq.s32.totalorder %s17, 1
      %p117 = por %p115, %p116
      %p118 = scmp.ne.s32.totalorder %s107, %s108
      %p119 = scmp.eq.s32.totalorder %s17, 0
      %p120 = por %p118, %p119
      %p121 = scmp.ne.s32.totalorder %s107, %s108
      %p122 = scmp.eq.s32.totalorder %s18, 1
      %p123 = por %p121, %p122
      %p125 = scmp.ne.s32.totalorder %s108, %s124
      %p126 = scmp.eq.s32.totalorder %s18, 0
      %p127 = por %p125, %p126
      %p128 = scmp.le.s32.totalorder 1, %s12
      %p129 = scmp.lt.s32.totalorder %s12, 3
      %p130 = pnand %p128, %p129
      %p131 = pneg %p130
      // Predicated region
      $region9: #{tpu_custom_call.1} parent=5 // pred_check
        _
      $region10: #{tpu_custom_call.1} parent=5 // pred_check_branch
        %133 = sbr.rel (%p130) target = $region12
      $region11: #{tpu_custom_call.1} parent=5 // pred_region
        %s134 = ssub.s32 %s12, 1
        // Predicated region
        $region13: #{tpu_custom_call.1} parent=11 // pred_check
          %p135 = pneg %p71
        $region14: #{tpu_custom_call.1} parent=11 // pred_check_branch
          %137 = sbr.rel (%p135) target = $region16
        $region15: #{tpu_custom_call.1} parent=11 // pred_region
          _
        $region16: #{tpu_custom_call.1} parent=11 // pred_fallthru
          _
        // Predicated region
        $region17: #{tpu_custom_call.1} parent=11 // pred_check
          %p138 = pneg %p92
        $region18: #{tpu_custom_call.1} parent=11 // pred_check_branch
          %140 = sbr.rel (%p138) target = $region20
        $region19: #{tpu_custom_call.1} parent=11 // pred_region
          _
        $region20: #{tpu_custom_call.1} parent=11 // pred_fallthru
          _
      $region12: #{tpu_custom_call.1} parent=5 // pred_fallthru
        _
      %p141 = scmp.lt.s32.totalorder %s12, 2
      // Predicated region
      $region21: #{tpu_custom_call.1} parent=5 // pred_check
        %p142 = pneg %p141
      $region22: #{tpu_custom_call.1} parent=5 // pred_check_branch
        %144 = sbr.rel (%p142) target = $region24
      $region23: #{tpu_custom_call.1} parent=5 // pred_region
        // Predicated region
        $region25: #{tpu_custom_call.1} parent=23 // pred_check
          %p145 = pneg %p44
        $region26: #{tpu_custom_call.1} parent=23 // pred_check_branch
          %147 = sbr.rel (%p145) target = $region28
        $region27: #{tpu_custom_call.1} parent=23 // pred_region
          %p148 = scmp.lt.s32.totalorder %s19, 1
          %s149 = scalar_select %p148, %s19, 1
          %s150 = smul.addr %s149, 54
          %s151 = smul.addr %s150, 4
          %s152 = scalar_lea.vmem %s0, %s151
        $region28: #{tpu_custom_call.1} parent=23 // pred_fallthru
          _
      $region24: #{tpu_custom_call.1} parent=5 // pred_fallthru
        _
      %p153 = scmp.le.s32.totalorder 1, %s12
      %p154 = scmp.lt.s32.totalorder %s12, 3
      %p155 = pnand %p153, %p154
      %p156 = pneg %p155
      // Predicated region
      $region29: #{tpu_custom_call.1} parent=5 // pred_check
        _
      $region30: #{tpu_custom_call.1} parent=5 // pred_check_branch
        %158 = sbr.rel (%p155) target = $region32
      $region31: #{tpu_custom_call.1} parent=5 // pred_region
        %s159 = ssub.s32 %s12, 1
        %p160 = scmp.lt.s32.totalorder %s21, 1
        %s161 = scalar_select %p160, %s21, 1
        %s162 = smul.addr %s161, 54
        %s163 = smul.addr %s162, 4
        %s164 = scalar_lea.vmem %s0, %s163
        %p165 = pneg %p50
        %p166 = pneg %p47
        %p167 = pneg %p71
        %p168 = pneg %p68
        %p169 = pneg %p92
        %p170 = pneg %p89
        %p171 = pneg %p120
        %p172 = pneg %p117
        %s173 = sand.u32 %s107, 1
        %s174 = scalar_lea.sflag [#allocation4], %s173
        %s175 = sand.u32 %s107, 1
        %s176 = smul.addr %s175, 256
        %s177 = scalar_lea.vmem [#allocation3], %s176
        %p178 = scmp.lt.s32.totalorder %s21, 1
        %s179 = scalar_select %p178, %s21, 1
        %s180 = smul.addr %s179, 54
        %s181 = smul.addr %s180, 4
        %s182 = scalar_lea.vmem %s0, %s181
        %s183 = smul.u32 16, %s22
        %s185 = smul.u32 %s22, 16
        %s186 = smul.u32 %s185, 3
        %s187 = smul.addr %s186, 4
        %s188 = scalar_lea.vmem %s182, %s187
        %v189 = vld [vmem:[%s188] sm:$0xf]
        %v190 = vld [vmem:[%s188 + $0x4] sm:$0xf]
        %v191 = vld [vmem:[%s188 + $0xc] sm:$0xf]
        %v192 = vld [vmem:[%s188 + $0x10] sm:$0xf]
        %v193 = vld [vmem:[%s188 + $0x18] sm:$0xf]
        %v194 = vld [vmem:[%s188 + $0x1c] sm:$0xf]
        %v195 = vld [vmem:[%s188 + $0x24] sm:$0xf]
        %v196 = vld [vmem:[%s188 + $0x28] sm:$0xf]
        %v197 = vld [vmem:[%s188 + $0x30] sm:$0xf]
        %v198 = vld [vmem:[%s188 + $0x34] sm:$0xf]
        %v199 = vld [vmem:[%s188 + $0x3c] sm:$0xf]
        %v200 = vld [vmem:[%s188 + $0x40] sm:$0xf]
        %v201 = vld [vmem:[%s188 + $0x48] sm:$0xf]
        %v202 = vld [vmem:[%s188 + $0x4c] sm:$0xf]
        %v203 = vld [vmem:[%s188 + $0x54] sm:$0xf]
        %v204 = vld [vmem:[%s188 + $0x58] sm:$0xf]
        %v205 = vld [vmem:[%s188 + $0x60] sm:$0xf]
        %v206 = vld [vmem:[%s188 + $0x64] sm:$0xf]
        %v207 = vld [vmem:[%s188 + $0x6c] sm:$0xf]
        %v208 = vld [vmem:[%s188 + $0x70] sm:$0xf]
        %v209 = vld [vmem:[%s188 + $0x78] sm:$0xf]
        %v210 = vld [vmem:[%s188 + $0x7c] sm:$0xf]
        %v211 = vld [vmem:[%s188 + $0x84] sm:$0xf]
        %v212 = vld [vmem:[%s188 + $0x88] sm:$0xf]
        %v213 = vld [vmem:[%s188 + $0x90] sm:$0xf]
        %v214 = vld [vmem:[%s188 + $0x94] sm:$0xf]
        %v215 = vld [vmem:[%s188 + $0x9c] sm:$0xf]
        %v216 = vld [vmem:[%s188 + $0xa0] sm:$0xf]
        %v217 = vld [vmem:[%s188 + $0xa8] sm:$0xf]
        %v218 = vld [vmem:[%s188 + $0xac] sm:$0xf]
        %v219 = vld [vmem:[%s188 + $0xb4] sm:$0xf]
        %v220 = vld [vmem:[%s188 + $0xb8] sm:$0xf]
        %v221 = vld [vmem:[%s1] sm:$0x3]
        %v254 = vunpack.c.l.b16 %v189
        %v255 = vunpack.c.l.b16 %v190
        %v256 = vunpack.c.l.b16 %v191
        %v257 = vunpack.c.l.b16 %v192
        %v258 = vunpack.c.l.b16 %v193
        %v259 = vunpack.c.l.b16 %v194
        %v260 = vunpack.c.l.b16 %v195
        %v261 = vunpack.c.l.b16 %v196
        %v262 = vunpack.c.l.b16 %v197
        %v263 = vunpack.c.l.b16 %v198
        %v264 = vunpack.c.l.b16 %v199
        %v265 = vunpack.c.l.b16 %v200
        %v266 = vunpack.c.l.b16 %v201
        %v267 = vunpack.c.l.b16 %v202
        %v268 = vunpack.c.l.b16 %v203
        %v269 = vunpack.c.l.b16 %v204
        %v270 = vunpack.c.l.b16 %v205
        %v271 = vunpack.c.l.b16 %v206
        %v272 = vunpack.c.l.b16 %v207
        %v273 = vunpack.c.l.b16 %v208
        %v274 = vunpack.c.l.b16 %v209
        %v275 = vunpack.c.l.b16 %v210
        %v276 = vunpack.c.l.b16 %v211
        %v277 = vunpack.c.l.b16 %v212
        %v278 = vunpack.c.l.b16 %v213
        %v279 = vunpack.c.l.b16 %v214
        %v280 = vunpack.c.l.b16 %v215
        %v281 = vunpack.c.l.b16 %v216
        %v282 = vunpack.c.l.b16 %v217
        %v283 = vunpack.c.l.b16 %v218
        %v284 = vunpack.c.l.b16 %v219
        %v285 = vunpack.c.l.b16 %v220
        %v286 = vpack.c.b16 %v255, %v254
        %v287 = vpack.c.b16 %v257, %v256
        %v288 = vpack.c.b16 %v259, %v258
        %v289 = vpack.c.b16 %v261, %v260
        %v290 = vpack.c.b16 %v263, %v262
        %v291 = vpack.c.b16 %v265, %v264
        %v292 = vpack.c.b16 %v267, %v266
        %v293 = vpack.c.b16 %v269, %v268
        %v294 = vpack.c.b16 %v271, %v270
        %v295 = vpack.c.b16 %v273, %v272
        %v296 = vpack.c.b16 %v275, %v274
        %v297 = vpack.c.b16 %v277, %v276
        %v298 = vpack.c.b16 %v279, %v278
        %v299 = vpack.c.b16 %v281, %v280
        %v300 = vpack.c.b16 %v283, %v282
        %v301 = vpack.c.b16 %v285, %v284
        %vm302 = vcmask 31744
        %v304 = vsel %vm302, %v286, 0
        %v307 = vsel %vm302, %v287, 0
        %v310 = vsel %vm302, %v288, 0
        %v313 = vsel %vm302, %v289, 0
        %v316 = vsel %vm302, %v290, 0
        %v319 = vsel %vm302, %v291, 0
        %v322 = vsel %vm302, %v292, 0
        %v325 = vsel %vm302, %v293, 0
        %v328 = vsel %vm302, %v294, 0
        %v331 = vsel %vm302, %v295, 0
        %v334 = vsel %vm302, %v296, 0
        %v337 = vsel %vm302, %v297, 0
        %v340 = vsel %vm302, %v298, 0
        %v343 = vsel %vm302, %v299, 0
        %v346 = vsel %vm302, %v300, 0
        %v349 = vsel %vm302, %v301, 0
        %vm351 = vcmask 1041408
        %v353 = vsel %vm351, %v221, 0
        %355 = vmatpush.bf16.msra.mxu0 0
        %356 = vmatpush.bf16.msra.mxu0 0
        %357 = vmatpush.bf16.msra.mxu0 0
        %358 = vmatpush.bf16.msra.mxu0 0
        %359 = vmatpush.bf16.msra.mxu0 0
        %360 = vmatpush.bf16.msra.mxu0 0
        %361 = vmatpush.bf16.msra.mxu0 0
        %362 = vmatpush.bf16.msra.mxu0 %v353
        %363 = vmatmul.bf16.gmra.mxu0 %v304
        %v364 = vpop.f32.mrf.mxu0
        %v365 = vadd.f32 0.0, %v364
        %v366 = vpop.f32.mrf.mxu0
        %v367 = vadd.f32 0.0, %v366
        %368 = vmatmul.bf16.gmra.mxu0 %v307
        %v369 = vpop.f32.mrf.mxu0
        %v370 = vadd.f32 0.0, %v369
        %v371 = vpop.f32.mrf.mxu0
        %v372 = vadd.f32 0.0, %v371
        %373 = vmatmul.bf16.gmra.mxu0 %v310
        %v374 = vpop.f32.mrf.mxu0
        %v375 = vadd.f32 0.0, %v374
        %v376 = vpop.f32.mrf.mxu0
        %v377 = vadd.f32 0.0, %v376
        %378 = vmatmul.bf16.gmra.mxu0 %v313
        %v379 = vpop.f32.mrf.mxu0
        %v380 = vadd.f32 0.0, %v379
        %v381 = vpop.f32.mrf.mxu0
        %v382 = vadd.f32 0.0, %v381
        %383 = vmatmul.bf16.gmra.mxu0 %v316
        %v384 = vpop.f32.mrf.mxu0
        %v385 = vadd.f32 0.0, %v384
        %v386 = vpop.f32.mrf.mxu0
        %v387 = vadd.f32 0.0, %v386
        %388 = vmatmul.bf16.gmra.mxu0 %v319
        %v389 = vpop.f32.mrf.mxu0
        %v390 = vadd.f32 0.0, %v389
        %v391 = vpop.f32.mrf.mxu0
        %v392 = vadd.f32 0.0, %v391
        %393 = vmatmul.bf16.gmra.mxu0 %v322
        %v394 = vpop.f32.mrf.mxu0
        %v395 = vadd.f32 0.0, %v394
        %v396 = vpop.f32.mrf.mxu0
        %v397 = vadd.f32 0.0, %v396
        %398 = vmatmul.bf16.gmra.mxu0 %v325
        %v399 = vpop.f32.mrf.mxu0
        %v400 = vadd.f32 0.0, %v399
        %v401 = vpop.f32.mrf.mxu0
        %v402 = vadd.f32 0.0, %v401
        %403 = vmatmul.bf16.gmra.mxu0 %v328
        %v404 = vpop.f32.mrf.mxu0
        %v405 = vadd.f32 0.0, %v404
        %v406 = vpop.f32.mrf.mxu0
        %v407 = vadd.f32 0.0, %v406
        %408 = vmatmul.bf16.gmra.mxu0 %v331
        %v409 = vpop.f32.mrf.mxu0
        %v410 = vadd.f32 0.0, %v409
        %v411 = vpop.f32.mrf.mxu0
        %v412 = vadd.f32 0.0, %v411
        %413 = vmatmul.bf16.gmra.mxu0 %v334
        %v414 = vpop.f32.mrf.mxu0
        %v415 = vadd.f32 0.0, %v414
        %v416 = vpop.f32.mrf.mxu0
        %v417 = vadd.f32 0.0, %v416
        %418 = vmatmul.bf16.gmra.mxu0 %v337
        %v419 = vpop.f32.mrf.mxu0
        %v420 = vadd.f32 0.0, %v419
        %v421 = vpop.f32.mrf.mxu0
        %v422 = vadd.f32 0.0, %v421
        %423 = vmatmul.bf16.gmra.mxu0 %v340
        %v424 = vpop.f32.mrf.mxu0
        %v425 = vadd.f32 0.0, %v424
        %v426 = vpop.f32.mrf.mxu0
        %v427 = vadd.f32 0.0, %v426
        %428 = vmatmul.bf16.gmra.mxu0 %v343
        %v429 = vpop.f32.mrf.mxu0
        %v430 = vadd.f32 0.0, %v429
        %v431 = vpop.f32.mrf.mxu0
        %v432 = vadd.f32 0.0, %v431
        %433 = vmatmul.bf16.gmra.mxu0 %v346
        %v434 = vpop.f32.mrf.mxu0
        %v435 = vadd.f32 0.0, %v434
        %v436 = vpop.f32.mrf.mxu0
        %v437 = vadd.f32 0.0, %v436
        %438 = vmatmul.bf16.gmra.mxu0 %v349
        %v439 = vpop.f32.mrf.mxu0
        %v440 = vadd.f32 0.0, %v439
        %v441 = vpop.f32.mrf.mxu0
        %v442 = vadd.f32 0.0, %v441
        %443 = vdwg.mxu0
        %444 = vst [vmem:[#allocation2] sm:$0xff] %v365
        %445 = vst [vmem:[#allocation2 + $0x8] sm:$0xff] %v367
        %446 = vst [vmem:[#allocation2 + $0x10] sm:$0xff] %v370
        %447 = vst [vmem:[#allocation2 + $0x18] sm:$0xff] %v372
        %448 = vst [vmem:[#allocation2 + $0x20] sm:$0xff] %v375
        %449 = vst [vmem:[#allocation2 + $0x28] sm:$0xff] %v377
        %450 = vst [vmem:[#allocation2 + $0x30] sm:$0xff] %v380
        %451 = vst [vmem:[#allocation2 + $0x38] sm:$0xff] %v382
        %452 = vst [vmem:[#allocation2 + $0x40] sm:$0xff] %v385
        %453 = vst [vmem:[#allocation2 + $0x48] sm:$0xff] %v387
        %454 = vst [vmem:[#allocation2 + $0x50] sm:$0xff] %v390
        %455 = vst [vmem:[#allocation2 + $0x58] sm:$0xff] %v392
        %456 = vst [vmem:[#allocation2 + $0x60] sm:$0xff] %v395
        %457 = vst [vmem:[#allocation2 + $0x68] sm:$0xff] %v397
        %458 = vst [vmem:[#allocation2 + $0x70] sm:$0xff] %v400
        %459 = vst [vmem:[#allocation2 + $0x78] sm:$0xff] %v402
        %460 = vst [vmem:[#allocation2 + $0x80] sm:$0xff] %v405
        %461 = vst [vmem:[#allocation2 + $0x88] sm:$0xff] %v407
        %462 = vst [vmem:[#allocation2 + $0x90] sm:$0xff] %v410
        %463 = vst [vmem:[#allocation2 + $0x98] sm:$0xff] %v412
        %464 = vst [vmem:[#allocation2 + $0xa0] sm:$0xff] %v415
        %465 = vst [vmem:[#allocation2 + $0xa8] sm:$0xff] %v417
        %466 = vst [vmem:[#allocation2 + $0xb0] sm:$0xff] %v420
        %467 = vst [vmem:[#allocation2 + $0xb8] sm:$0xff] %v422
        %468 = vst [vmem:[#allocation2 + $0xc0] sm:$0xff] %v425
        %469 = vst [vmem:[#allocation2 + $0xc8] sm:$0xff] %v427
        %470 = vst [vmem:[#allocation2 + $0xd0] sm:$0xff] %v430
        %471 = vst [vmem:[#allocation2 + $0xd8] sm:$0xff] %v432
        %472 = vst [vmem:[#allocation2 + $0xe0] sm:$0xff] %v435
        %473 = vst [vmem:[#allocation2 + $0xe8] sm:$0xff] %v437
        %474 = vst [vmem:[#allocation2 + $0xf0] sm:$0xff] %v440
        %475 = vst [vmem:[#allocation2 + $0xf8] sm:$0xff] %v442
        %v476 = vld [vmem:[%s188] sm:$0xf]
        %v477 = vld [vmem:[%s188 + $0x4] sm:$0xf]
        %v478 = vld [vmem:[%s188 + $0x8] sm:$0x1]
        %v479 = vld [vmem:[%s188 + $0xc] sm:$0xf]
        %v480 = vld [vmem:[%s188 + $0x10] sm:$0xf]
        %v481 = vld [vmem:[%s188 + $0x14] sm:$0x1]
        %v482 = vld [vmem:[%s188 + $0x18] sm:$0xf]
        %v483 = vld [vmem:[%s188 + $0x1c] sm:$0xf]
        %v484 = vld [vmem:[%s188 + $0x20] sm:$0x1]
        %v485 = vld [vmem:[%s188 + $0x24] sm:$0xf]
        %v486 = vld [vmem:[%s188 + $0x28] sm:$0xf]
        %v487 = vld [vmem:[%s188 + $0x2c] sm:$0x1]
        %v488 = vld [vmem:[%s188 + $0x30] sm:$0xf]
        %v489 = vld [vmem:[%s188 + $0x34] sm:$0xf]
        %v490 = vld [vmem:[%s188 + $0x38] sm:$0x1]
        %v491 = vld [vmem:[%s188 + $0x3c] sm:$0xf]
        %v492 = vld [vmem:[%s188 + $0x40] sm:$0xf]
        %v493 = vld [vmem:[%s188 + $0x44] sm:$0x1]
        %v494 = vld [vmem:[%s188 + $0x48] sm:$0xf]
        %v495 = vld [vmem:[%s188 + $0x4c] sm:$0xf]
        %v496 = vld [vmem:[%s188 + $0x50] sm:$0x1]
        %v497 = vld [vmem:[%s188 + $0x54] sm:$0xf]
        %v498 = vld [vmem:[%s188 + $0x58] sm:$0xf]
        %v499 = vld [vmem:[%s188 + $0x5c] sm:$0x1]
        %v500 = vld [vmem:[%s188 + $0x60] sm:$0xf]
        %v501 = vld [vmem:[%s188 + $0x64] sm:$0xf]
        %v502 = vld [vmem:[%s188 + $0x68] sm:$0x1]
        %v503 = vld [vmem:[%s188 + $0x6c] sm:$0xf]
        %v504 = vld [vmem:[%s188 + $0x70] sm:$0xf]
        %v505 = vld [vmem:[%s188 + $0x74] sm:$0x1]
        %v506 = vld [vmem:[%s188 + $0x78] sm:$0xf]
        %v507 = vld [vmem:[%s188 + $0x7c] sm:$0xf]
        %v508 = vld [vmem:[%s188 + $0x80] sm:$0x1]
        %v509 = vld [vmem:[%s188 + $0x84] sm:$0xf]
        %v510 = vld [vmem:[%s188 + $0x88] sm:$0xf]
        %v511 = vld [vmem:[%s188 + $0x8c] sm:$0x1]
        %v512 = vld [vmem:[%s188 + $0x90] sm:$0xf]
        %v513 = vld [vmem:[%s188 + $0x94] sm:$0xf]
        %v514 = vld [vmem:[%s188 + $0x98] sm:$0x1]
        %v515 = vld [vmem:[%s188 + $0x9c] sm:$0xf]
        %v516 = vld [vmem:[%s188 + $0xa0] sm:$0xf]
        %v517 = vld [vmem:[%s188 + $0xa4] sm:$0x1]
        %v518 = vld [vmem:[%s188 + $0xa8] sm:$0xf]
        %v519 = vld [vmem:[%s188 + $0xac] sm:$0xf]
        %v520 = vld [vmem:[%s188 + $0xb0] sm:$0x1]
        %v521 = vld [vmem:[%s188 + $0xb4] sm:$0xf]
        %v522 = vld [vmem:[%s188 + $0xb8] sm:$0xf]
        %v523 = vld [vmem:[%s188 + $0xbc] sm:$0x1]
        %vm524 = vsmask.f32 3328
        %vm525 = vsmask.f32 7440
        %vm526 = vmor %vm524, %vm525
        %v528 = vshrl.u32 %v476, 16
        %v530 = vrot.slane %v528, 4
        %v531 = vshll.u32 %v476, 16
        %v533 = vrot.slane %v531, 5
        %v534 = vor.u32 %v530, %v533
        %v535 = vrot.slane %v534, 4
        %v537 = vshll.u32 %v477, 16
        %v539 = vrot.slane %v537, 5
        %v540 = vsel %vm526, %v535, %v539
        %v541 = vshrl.u32 %v477, 16
        %v543 = vrot.slane %v541, 4
        %v544 = vor.u32 %v543, %v539
        %v545 = vrot.slane %v544, 4
        %v547 = vshll.u32 %v478, 16
        %v549 = vrot.slane %v547, 5
        %v550 = vsel %vm526, %v545, %v549
        %v552 = vshrl.u32 %v479, 16
        %v554 = vrot.slane %v552, 4
        %v555 = vshll.u32 %v479, 16
        %v557 = vrot.slane %v555, 5
        %v558 = vor.u32 %v554, %v557
        %v559 = vrot.slane %v558, 4
        %v561 = vshll.u32 %v480, 16
        %v563 = vrot.slane %v561, 5
        %v564 = vsel %vm526, %v559, %v563
        %v565 = vshrl.u32 %v480, 16
        %v567 = vrot.slane %v565, 4
        %v568 = vor.u32 %v567, %v563
        %v569 = vrot.slane %v568, 4
        %v571 = vshll.u32 %v481, 16
        %v573 = vrot.slane %v571, 5
        %v574 = vsel %vm526, %v569, %v573
        %v576 = vshrl.u32 %v482, 16
        %v578 = vrot.slane %v576, 4
        %v579 = vshll.u32 %v482, 16
        %v581 = vrot.slane %v579, 5
        %v582 = vor.u32 %v578, %v581
        %v583 = vrot.slane %v582, 4
        %v585 = vshll.u32 %v483, 16
        %v587 = vrot.slane %v585, 5
        %v588 = vsel %vm526, %v583, %v587
        %v589 = vshrl.u32 %v483, 16
        %v591 = vrot.slane %v589, 4
        %v592 = vor.u32 %v591, %v587
        %v593 = vrot.slane %v592, 4
        %v595 = vshll.u32 %v484, 16
        %v597 = vrot.slane %v595, 5
        %v598 = vsel %vm526, %v593, %v597
        %v600 = vshrl.u32 %v485, 16
        %v602 = vrot.slane %v600, 4
        %v603 = vshll.u32 %v485, 16
        %v605 = vrot.slane %v603, 5
        %v606 = vor.u32 %v602, %v605
        %v607 = vrot.slane %v606, 4
        %v609 = vshll.u32 %v486, 16
        %v611 = vrot.slane %v609, 5
        %v612 = vsel %vm526, %v607, %v611
        %v613 = vshrl.u32 %v486, 16
        %v615 = vrot.slane %v613, 4
        %v616 = vor.u32 %v615, %v611
        %v617 = vrot.slane %v616, 4
        %v619 = vshll.u32 %v487, 16
        %v621 = vrot.slane %v619, 5
        %v622 = vsel %vm526, %v617, %v621
        %v624 = vshrl.u32 %v488, 16
        %v626 = vrot.slane %v624, 4
        %v627 = vshll.u32 %v488, 16
        %v629 = vrot.slane %v627, 5
        %v630 = vor.u32 %v626, %v629
        %v631 = vrot.slane %v630, 4
        %v633 = vshll.u32 %v489, 16
        %v635 = vrot.slane %v633, 5
        %v636 = vsel %vm526, %v631, %v635
        %v637 = vshrl.u32 %v489, 16
        %v639 = vrot.slane %v637, 4
        %v640 = vor.u32 %v639, %v635
        %v641 = vrot.slane %v640, 4
        %v643 = vshll.u32 %v490, 16
        %v645 = vrot.slane %v643, 5
        %v646 = vsel %vm526, %v641, %v645
        %v648 = vshrl.u32 %v491, 16
        %v650 = vrot.slane %v648, 4
        %v651 = vshll.u32 %v491, 16
        %v653 = vrot.slane %v651, 5
        %v654 = vor.u32 %v650, %v653
        %v655 = vrot.slane %v654, 4
        %v657 = vshll.u32 %v492, 16
        %v659 = vrot.slane %v657, 5
        %v660 = vsel %vm526, %v655, %v659
        %v661 = vshrl.u32 %v492, 16
        %v663 = vrot.slane %v661, 4
        %v664 = vor.u32 %v663, %v659
        %v665 = vrot.slane %v664, 4
        %v667 = vshll.u32 %v493, 16
        %v669 = vrot.slane %v667, 5
        %v670 = vsel %vm526, %v665, %v669
        %v672 = vshrl.u32 %v494, 16
        %v674 = vrot.slane %v672, 4
        %v675 = vshll.u32 %v494, 16
        %v677 = vrot.slane %v675, 5
        %v678 = vor.u32 %v674, %v677
        %v679 = vrot.slane %v678, 4
        %v681 = vshll.u32 %v495, 16
        %v683 = vrot.slane %v681, 5
        %v684 = vsel %vm526, %v679, %v683
        %v685 = vshrl.u32 %v495, 16
        %v687 = vrot.slane %v685, 4
        %v688 = vor.u32 %v687, %v683
        %v689 = vrot.slane %v688, 4
        %v691 = vshll.u32 %v496, 16
        %v693 = vrot.slane %v691, 5
        %v694 = vsel %vm526, %v689, %v693
        %v696 = vshrl.u32 %v497, 16
        %v698 = vrot.slane %v696, 4
        %v699 = vshll.u32 %v497, 16
        %v701 = vrot.slane %v699, 5
        %v702 = vor.u32 %v698, %v701
        %v703 = vrot.slane %v702, 4
        %v705 = vshll.u32 %v498, 16
        %v707 = vrot.slane %v705, 5
        %v708 = vsel %vm526, %v703, %v707
        %v709 = vshrl.u32 %v498, 16
        %v711 = vrot.slane %v709, 4
        %v712 = vor.u32 %v711, %v707
        %v713 = vrot.slane %v712, 4
        %v715 = vshll.u32 %v499, 16
        %v717 = vrot.slane %v715, 5
        %v718 = vsel %vm526, %v713, %v717
        %v720 = vshrl.u32 %v500, 16
        %v722 = vrot.slane %v720, 4
        %v723 = vshll.u32 %v500, 16
        %v725 = vrot.slane %v723, 5
        %v726 = vor.u32 %v722, %v725
        %v727 = vrot.slane %v726, 4
        %v729 = vshll.u32 %v501, 16
        %v731 = vrot.slane %v729, 5
        %v732 = vsel %vm526, %v727, %v731
        %v733 = vshrl.u32 %v501, 16
        %v735 = vrot.slane %v733, 4
        %v736 = vor.u32 %v735, %v731
        %v737 = vrot.slane %v736, 4
        %v739 = vshll.u32 %v502, 16
        %v741 = vrot.slane %v739, 5
        %v742 = vsel %vm526, %v737, %v741
        %v744 = vshrl.u32 %v503, 16
        %v746 = vrot.slane %v744, 4
        %v747 = vshll.u32 %v503, 16
        %v749 = vrot.slane %v747, 5
        %v750 = vor.u32 %v746, %v749
        %v751 = vrot.slane %v750, 4
        %v753 = vshll.u32 %v504, 16
        %v755 = vrot.slane %v753, 5
        %v756 = vsel %vm526, %v751, %v755
        %v757 = vshrl.u32 %v504, 16
        %v759 = vrot.slane %v757, 4
        %v760 = vor.u32 %v759, %v755
        %v761 = vrot.slane %v760, 4
        %v763 = vshll.u32 %v505, 16
        %v765 = vrot.slane %v763, 5
        %v766 = vsel %vm526, %v761, %v765
        %v768 = vshrl.u32 %v506, 16
        %v770 = vrot.slane %v768, 4
        %v771 = vshll.u32 %v506, 16
        %v773 = vrot.slane %v771, 5
        %v774 = vor.u32 %v770, %v773
        %v775 = vrot.slane %v774, 4
        %v777 = vshll.u32 %v507, 16
        %v779 = vrot.slane %v777, 5
        %v780 = vsel %vm526, %v775, %v779
        %v781 = vshrl.u32 %v507, 16
        %v783 = vrot.slane %v781, 4
        %v784 = vor.u32 %v783, %v779
        %v785 = vrot.slane %v784, 4
        %v787 = vshll.u32 %v508, 16
        %v789 = vrot.slane %v787, 5
        %v790 = vsel %vm526, %v785, %v789
        %v792 = vshrl.u32 %v509, 16
        %v794 = vrot.slane %v792, 4
        %v795 = vshll.u32 %v509, 16
        %v797 = vrot.slane %v795, 5
        %v798 = vor.u32 %v794, %v797
        %v799 = vrot.slane %v798, 4
        %v801 = vshll.u32 %v510, 16
        %v803 = vrot.slane %v801, 5
        %v804 = vsel %vm526, %v799, %v803
        %v805 = vshrl.u32 %v510, 16
        %v807 = vrot.slane %v805, 4
        %v808 = vor.u32 %v807, %v803
        %v809 = vrot.slane %v808, 4
        %v811 = vshll.u32 %v511, 16
        %v813 = vrot.slane %v811, 5
        %v814 = vsel %vm526, %v809, %v813
        %v816 = vshrl.u32 %v512, 16
        %v818 = vrot.slane %v816, 4
        %v819 = vshll.u32 %v512, 16
        %v821 = vrot.slane %v819, 5
        %v822 = vor.u32 %v818, %v821
        %v823 = vrot.slane %v822, 4
        %v825 = vshll.u32 %v513, 16
        %v827 = vrot.slane %v825, 5
        %v828 = vsel %vm526, %v823, %v827
        %v829 = vshrl.u32 %v513, 16
        %v831 = vrot.slane %v829, 4
        %v832 = vor.u32 %v831, %v827
        %v833 = vrot.slane %v832, 4
        %v835 = vshll.u32 %v514, 16
        %v837 = vrot.slane %v835, 5
        %v838 = vsel %vm526, %v833, %v837
        %v840 = vshrl.u32 %v515, 16
        %v842 = vrot.slane %v840, 4
        %v843 = vshll.u32 %v515, 16
        %v845 = vrot.slane %v843, 5
        %v846 = vor.u32 %v842, %v845
        %v847 = vrot.slane %v846, 4
        %v849 = vshll.u32 %v516, 16
        %v851 = vrot.slane %v849, 5
        %v852 = vsel %vm526, %v847, %v851
        %v853 = vshrl.u32 %v516, 16
        %v855 = vrot.slane %v853, 4
        %v856 = vor.u32 %v855, %v851
        %v857 = vrot.slane %v856, 4
        %v859 = vshll.u32 %v517, 16
        %v861 = vrot.slane %v859, 5
        %v862 = vsel %vm526, %v857, %v861
        %v864 = vshrl.u32 %v518, 16
        %v866 = vrot.slane %v864, 4
        %v867 = vshll.u32 %v518, 16
        %v869 = vrot.slane %v867, 5
        %v870 = vor.u32 %v866, %v869
        %v871 = vrot.slane %v870, 4
        %v873 = vshll.u32 %v519, 16
        %v875 = vrot.slane %v873, 5
        %v876 = vsel %vm526, %v871, %v875
        %v877 = vshrl.u32 %v519, 16
        %v879 = vrot.slane %v877, 4
        %v880 = vor.u32 %v879, %v875
        %v881 = vrot.slane %v880, 4
        %v883 = vshll.u32 %v520, 16
        %v885 = vrot.slane %v883, 5
        %v886 = vsel %vm526, %v881, %v885
        %v888 = vshrl.u32 %v521, 16
        %v890 = vrot.slane %v888, 4
        %v891 = vshll.u32 %v521, 16
        %v893 = vrot.slane %v891, 5
        %v894 = vor.u32 %v890, %v893
        %v895 = vrot.slane %v894, 4
        %v897 = vshll.u32 %v522, 16
        %v899 = vrot.slane %v897, 5
        %v900 = vsel %vm526, %v895, %v899
        %v901 = vshrl.u32 %v522, 16
        %v903 = vrot.slane %v901, 4
        %v904 = vor.u32 %v903, %v899
        %v905 = vrot.slane %v904, 4
        %v907 = vshll.u32 %v523, 16
        %v909 = vrot.slane %v907, 5
        %v910 = vsel %vm526, %v905, %v909
        %s911 = scalar_lea.vmem %s1, 2
        %v912 = vld [vmem:[%s911] sm:$0x3]
        %v913 = vunpack.c.l.b16 %v540
        %v914 = vunpack.c.l.b16 %v550
        %v915 = vunpack.c.l.b16 %v564
        %v916 = vunpack.c.l.b16 %v574
        %v917 = vunpack.c.l.b16 %v588
        %v918 = vunpack.c.l.b16 %v598
        %v919 = vunpack.c.l.b16 %v612
        %v920 = vunpack.c.l.b16 %v622
        %v921 = vunpack.c.l.b16 %v636
        %v922 = vunpack.c.l.b16 %v646
        %v923 = vunpack.c.l.b16 %v660
        %v924 = vunpack.c.l.b16 %v670
        %v925 = vunpack.c.l.b16 %v684
        %v926 = vunpack.c.l.b16 %v694
        %v927 = vunpack.c.l.b16 %v708
        %v928 = vunpack.c.l.b16 %v718
        %v929 = vunpack.c.l.b16 %v732
        %v930 = vunpack.c.l.b16 %v742
        %v931 = vunpack.c.l.b16 %v756
        %v932 = vunpack.c.l.b16 %v766
        %v933 = vunpack.c.l.b16 %v780
        %v934 = vunpack.c.l.b16 %v790
        %v935 = vunpack.c.l.b16 %v804
        %v936 = vunpack.c.l.b16 %v814
        %v937 = vunpack.c.l.b16 %v828
        %v938 = vunpack.c.l.b16 %v838
        %v939 = vunpack.c.l.b16 %v852
        %v940 = vunpack.c.l.b16 %v862
        %v941 = vunpack.c.l.b16 %v876
        %v942 = vunpack.c.l.b16 %v886
        %v943 = vunpack.c.l.b16 %v900
        %v944 = vunpack.c.l.b16 %v910
        %v945 = vpack.c.b16 %v914, %v913
        %v946 = vpack.c.b16 %v916, %v915
        %v947 = vpack.c.b16 %v918, %v917
        %v948 = vpack.c.b16 %v920, %v919
        %v949 = vpack.c.b16 %v922, %v921
        %v950 = vpack.c.b16 %v924, %v923
        %v951 = vpack.c.b16 %v926, %v925
        %v952 = vpack.c.b16 %v928, %v927
        %v953 = vpack.c.b16 %v930, %v929
        %v954 = vpack.c.b16 %v932, %v931
        %v955 = vpack.c.b16 %v934, %v933
        %v956 = vpack.c.b16 %v936, %v935
        %v957 = vpack.c.b16 %v938, %v937
        %v958 = vpack.c.b16 %v940, %v939
        %v959 = vpack.c.b16 %v942, %v941
        %v960 = vpack.c.b16 %v944, %v943
        %v962 = vsel %vm302, %v945, 0
        %v965 = vsel %vm302, %v946, 0
        %v968 = vsel %vm302, %v947, 0
        %v971 = vsel %vm302, %v948, 0
        %v974 = vsel %vm302, %v949, 0
        %v977 = vsel %vm302, %v950, 0
        %v980 = vsel %vm302, %v951, 0
        %v983 = vsel %vm302, %v952, 0
        %v986 = vsel %vm302, %v953, 0
        %v989 = vsel %vm302, %v954, 0
        %v992 = vsel %vm302, %v955, 0
        %v995 = vsel %vm302, %v956, 0
        %v998 = vsel %vm302, %v957, 0
        %v1001 = vsel %vm302, %v958, 0
        %v1004 = vsel %vm302, %v959, 0
        %v1007 = vsel %vm302, %v960, 0
        %v1010 = vsel %vm351, %v912, 0
        %1012 = vmatpush.bf16.msra.mxu0 0
        %1013 = vmatpush.bf16.msra.mxu0 0
        %1014 = vmatpush.bf16.msra.mxu0 0
        %1015 = vmatpush.bf16.msra.mxu0 0
        %1016 = vmatpush.bf16.msra.mxu0 0
        %1017 = vmatpush.bf16.msra.mxu0 0
        %1018 = vmatpush.bf16.msra.mxu0 0
        %1019 = vmatpush.bf16.msra.mxu0 %v1010
        %1020 = vmatmul.bf16.gmra.mxu0 %v962
        %v1021 = vpop.f32.mrf.mxu0
        %v1022 = vadd.f32 0.0, %v1021
        %v1023 = vpop.f32.mrf.mxu0
        %v1024 = vadd.f32 0.0, %v1023
        %1025 = vmatmul.bf16.gmra.mxu0 %v965
        %v1026 = vpop.f32.mrf.mxu0
        %v1027 = vadd.f32 0.0, %v1026
        %v1028 = vpop.f32.mrf.mxu0
        %v1029 = vadd.f32 0.0, %v1028
        %1030 = vmatmul.bf16.gmra.mxu0 %v968
        %v1031 = vpop.f32.mrf.mxu0
        %v1032 = vadd.f32 0.0, %v1031
        %v1033 = vpop.f32.mrf.mxu0
        %v1034 = vadd.f32 0.0, %v1033
        %1035 = vmatmul.bf16.gmra.mxu0 %v971
        %v1036 = vpop.f32.mrf.mxu0
        %v1037 = vadd.f32 0.0, %v1036
        %v1038 = vpop.f32.mrf.mxu0
        %v1039 = vadd.f32 0.0, %v1038
        %1040 = vmatmul.bf16.gmra.mxu0 %v974
        %v1041 = vpop.f32.mrf.mxu0
        %v1042 = vadd.f32 0.0, %v1041
        %v1043 = vpop.f32.mrf.mxu0
        %v1044 = vadd.f32 0.0, %v1043
        %1045 = vmatmul.bf16.gmra.mxu0 %v977
        %v1046 = vpop.f32.mrf.mxu0
        %v1047 = vadd.f32 0.0, %v1046
        %v1048 = vpop.f32.mrf.mxu0
        %v1049 = vadd.f32 0.0, %v1048
        %1050 = vmatmul.bf16.gmra.mxu0 %v980
        %v1051 = vpop.f32.mrf.mxu0
        %v1052 = vadd.f32 0.0, %v1051
        %v1053 = vpop.f32.mrf.mxu0
        %v1054 = vadd.f32 0.0, %v1053
        %1055 = vmatmul.bf16.gmra.mxu0 %v983
        %v1056 = vpop.f32.mrf.mxu0
        %v1057 = vadd.f32 0.0, %v1056
        %v1058 = vpop.f32.mrf.mxu0
        %v1059 = vadd.f32 0.0, %v1058
        %1060 = vmatmul.bf16.gmra.mxu0 %v986
        %v1061 = vpop.f32.mrf.mxu0
        %v1062 = vadd.f32 0.0, %v1061
        %v1063 = vpop.f32.mrf.mxu0
        %v1064 = vadd.f32 0.0, %v1063
        %1065 = vmatmul.bf16.gmra.mxu0 %v989
        %v1066 = vpop.f32.mrf.mxu0
        %v1067 = vadd.f32 0.0, %v1066
        %v1068 = vpop.f32.mrf.mxu0
        %v1069 = vadd.f32 0.0, %v1068
        %1070 = vmatmul.bf16.gmra.mxu0 %v992
        %v1071 = vpop.f32.mrf.mxu0
        %v1072 = vadd.f32 0.0, %v1071
        %v1073 = vpop.f32.mrf.mxu0
        %v1074 = vadd.f32 0.0, %v1073
        %1075 = vmatmul.bf16.gmra.mxu0 %v995
        %v1076 = vpop.f32.mrf.mxu0
        %v1077 = vadd.f32 0.0, %v1076
        %v1078 = vpop.f32.mrf.mxu0
        %v1079 = vadd.f32 0.0, %v1078
        %1080 = vmatmul.bf16.gmra.mxu0 %v998
        %v1081 = vpop.f32.mrf.mxu0
        %v1082 = vadd.f32 0.0, %v1081
        %v1083 = vpop.f32.mrf.mxu0
        %v1084 = vadd.f32 0.0, %v1083
        %1085 = vmatmul.bf16.gmra.mxu0 %v1001
        %v1086 = vpop.f32.mrf.mxu0
        %v1087 = vadd.f32 0.0, %v1086
        %v1088 = vpop.f32.mrf.mxu0
        %v1089 = vadd.f32 0.0, %v1088
        %1090 = vmatmul.bf16.gmra.mxu0 %v1004
        %v1091 = vpop.f32.mrf.mxu0
        %v1092 = vadd.f32 0.0, %v1091
        %v1093 = vpop.f32.mrf.mxu0
        %v1094 = vadd.f32 0.0, %v1093
        %1095 = vmatmul.bf16.gmra.mxu0 %v1007
        %v1096 = vpop.f32.mrf.mxu0
        %v1097 = vadd.f32 0.0, %v1096
        %v1098 = vpop.f32.mrf.mxu0
        %v1099 = vadd.f32 0.0, %v1098
        %1100 = vdwg.mxu0
        %v1101 = vld [vmem:[#allocation2] sm:$0xff]
        %v1102 = vld [vmem:[#allocation2 + $0x8] sm:$0xff]
        %v1103 = vld [vmem:[#allocation2 + $0x10] sm:$0xff]
        %v1104 = vld [vmem:[#allocation2 + $0x18] sm:$0xff]
        %v1105 = vld [vmem:[#allocation2 + $0x20] sm:$0xff]
        %v1106 = vld [vmem:[#allocation2 + $0x28] sm:$0xff]
        %v1107 = vld [vmem:[#allocation2 + $0x30] sm:$0xff]
        %v1108 = vld [vmem:[#allocation2 + $0x38] sm:$0xff]
        %v1109 = vld [vmem:[#allocation2 + $0x40] sm:$0xff]
        %v1110 = vld [vmem:[#allocation2 + $0x48] sm:$0xff]
        %v1111 = vld [vmem:[#allocation2 + $0x50] sm:$0xff]
        %v1112 = vld [vmem:[#allocation2 + $0x58] sm:$0xff]
        %v1113 = vld [vmem:[#allocation2 + $0x60] sm:$0xff]
        %v1114 = vld [vmem:[#allocation2 + $0x68] sm:$0xff]
        %v1115 = vld [vmem:[#allocation2 + $0x70] sm:$0xff]
        %v1116 = vld [vmem:[#allocation2 + $0x78] sm:$0xff]
        %v1117 = vld [vmem:[#allocation2 + $0x80] sm:$0xff]
        %v1118 = vld [vmem:[#allocation2 + $0x88] sm:$0xff]
        %v1119 = vld [vmem:[#allocation2 + $0x90] sm:$0xff]
        %v1120 = vld [vmem:[#allocation2 + $0x98] sm:$0xff]
        %v1121 = vld [vmem:[#allocation2 + $0xa0] sm:$0xff]
        %v1122 = vld [vmem:[#allocation2 + $0xa8] sm:$0xff]
        %v1123 = vld [vmem:[#allocation2 + $0xb0] sm:$0xff]
        %v1124 = vld [vmem:[#allocation2 + $0xb8] sm:$0xff]
        %v1125 = vld [vmem:[#allocation2 + $0xc0] sm:$0xff]
        %v1126 = vld [vmem:[#allocation2 + $0xc8] sm:$0xff]
        %v1127 = vld [vmem:[#allocation2 + $0xd0] sm:$0xff]
        %v1128 = vld [vmem:[#allocation2 + $0xd8] sm:$0xff]
        %v1129 = vld [vmem:[#allocation2 + $0xe0] sm:$0xff]
        %v1130 = vld [vmem:[#allocation2 + $0xe8] sm:$0xff]
        %v1131 = vld [vmem:[#allocation2 + $0xf0] sm:$0xff]
        %v1132 = vld [vmem:[#allocation2 + $0xf8] sm:$0xff]
        %v1133 = vadd.f32 %v1101, %v1022
        %v1134 = vadd.f32 %v1102, %v1024
        %v1135 = vadd.f32 %v1103, %v1027
        %v1136 = vadd.f32 %v1104, %v1029
        %v1137 = vadd.f32 %v1105, %v1032
        %v1138 = vadd.f32 %v1106, %v1034
        %v1139 = vadd.f32 %v1107, %v1037
        %v1140 = vadd.f32 %v1108, %v1039
        %v1141 = vadd.f32 %v1109, %v1042
        %v1142 = vadd.f32 %v1110, %v1044
        %v1143 = vadd.f32 %v1111, %v1047
        %v1144 = vadd.f32 %v1112, %v1049
        %v1145 = vadd.f32 %v1113, %v1052
        %v1146 = vadd.f32 %v1114, %v1054
        %v1147 = vadd.f32 %v1115, %v1057
        %v1148 = vadd.f32 %v1116, %v1059
        %v1149 = vadd.f32 %v1117, %v1062
        %v1150 = vadd.f32 %v1118, %v1064
        %v1151 = vadd.f32 %v1119, %v1067
        %v1152 = vadd.f32 %v1120, %v1069
        %v1153 = vadd.f32 %v1121, %v1072
        %v1154 = vadd.f32 %v1122, %v1074
        %v1155 = vadd.f32 %v1123, %v1077
        %v1156 = vadd.f32 %v1124, %v1079
        %v1157 = vadd.f32 %v1125, %v1082
        %v1158 = vadd.f32 %v1126, %v1084
        %v1159 = vadd.f32 %v1127, %v1087
        %v1160 = vadd.f32 %v1128, %v1089
        %v1161 = vadd.f32 %v1129, %v1092
        %v1162 = vadd.f32 %v1130, %v1094
        %v1163 = vadd.f32 %v1131, %v1097
        %v1164 = vadd.f32 %v1132, %v1099
        %1165 = vst [vmem:[#allocation2] sm:$0xff] %v1133
        %1166 = vst [vmem:[#allocation2 + $0x8] sm:$0xff] %v1134
        %1167 = vst [vmem:[#allocation2 + $0x10] sm:$0xff] %v1135
        %1168 = vst [vmem:[#allocation2 + $0x18] sm:$0xff] %v1136
        %1169 = vst [vmem:[#allocation2 + $0x20] sm:$0xff] %v1137
        %1170 = vst [vmem:[#allocation2 + $0x28] sm:$0xff] %v1138
        %1171 = vst [vmem:[#allocation2 + $0x30] sm:$0xff] %v1139
        %1172 = vst [vmem:[#allocation2 + $0x38] sm:$0xff] %v1140
        %1173 = vst [vmem:[#allocation2 + $0x40] sm:$0xff] %v1141
        %1174 = vst [vmem:[#allocation2 + $0x48] sm:$0xff] %v1142
        %1175 = vst [vmem:[#allocation2 + $0x50] sm:$0xff] %v1143
        %1176 = vst [vmem:[#allocation2 + $0x58] sm:$0xff] %v1144
        %1177 = vst [vmem:[#allocation2 + $0x60] sm:$0xff] %v1145
        %1178 = vst [vmem:[#allocation2 + $0x68] sm:$0xff] %v1146
        %1179 = vst [vmem:[#allocation2 + $0x70] sm:$0xff] %v1147
        %1180 = vst [vmem:[#allocation2 + $0x78] sm:$0xff] %v1148
        %1181 = vst [vmem:[#allocation2 + $0x80] sm:$0xff] %v1149
        %1182 = vst [vmem:[#allocation2 + $0x88] sm:$0xff] %v1150
        %1183 = vst [vmem:[#allocation2 + $0x90] sm:$0xff] %v1151
        %1184 = vst [vmem:[#allocation2 + $0x98] sm:$0xff] %v1152
        %1185 = vst [vmem:[#allocation2 + $0xa0] sm:$0xff] %v1153
        %1186 = vst [vmem:[#allocation2 + $0xa8] sm:$0xff] %v1154
        %1187 = vst [vmem:[#allocation2 + $0xb0] sm:$0xff] %v1155
        %1188 = vst [vmem:[#allocation2 + $0xb8] sm:$0xff] %v1156
        %1189 = vst [vmem:[#allocation2 + $0xc0] sm:$0xff] %v1157
        %1190 = vst [vmem:[#allocation2 + $0xc8] sm:$0xff] %v1158
        %1191 = vst [vmem:[#allocation2 + $0xd0] sm:$0xff] %v1159
        %1192 = vst [vmem:[#allocation2 + $0xd8] sm:$0xff] %v1160
        %1193 = vst [vmem:[#allocation2 + $0xe0] sm:$0xff] %v1161
        %1194 = vst [vmem:[#allocation2 + $0xe8] sm:$0xff] %v1162
        %1195 = vst [vmem:[#allocation2 + $0xf0] sm:$0xff] %v1163
        %1196 = vst [vmem:[#allocation2 + $0xf8] sm:$0xff] %v1164
        %v1197 = vld [vmem:[%s188] sm:$0xe]
        %v1198 = vld [vmem:[%s188 + $0x4] sm:$0xf]
        %v1199 = vld [vmem:[%s188 + $0x8] sm:$0x1]
        %v1200 = vld [vmem:[%s188 + $0xc] sm:$0xe]
        %v1201 = vld [vmem:[%s188 + $0x10] sm:$0xf]
        %v1202 = vld [vmem:[%s188 + $0x14] sm:$0x1]
        %v1203 = vld [vmem:[%s188 + $0x18] sm:$0xe]
        %v1204 = vld [vmem:[%s188 + $0x1c] sm:$0xf]
        %v1205 = vld [vmem:[%s188 + $0x20] sm:$0x1]
        %v1206 = vld [vmem:[%s188 + $0x24] sm:$0xe]
        %v1207 = vld [vmem:[%s188 + $0x28] sm:$0xf]
        %v1208 = vld [vmem:[%s188 + $0x2c] sm:$0x1]
        %v1209 = vld [vmem:[%s188 + $0x30] sm:$0xe]
        %v1210 = vld [vmem:[%s188 + $0x34] sm:$0xf]
        %v1211 = vld [vmem:[%s188 + $0x38] sm:$0x1]
        %v1212 = vld [vmem:[%s188 + $0x3c] sm:$0xe]
        %v1213 = vld [vmem:[%s188 + $0x40] sm:$0xf]
        %v1214 = vld [vmem:[%s188 + $0x44] sm:$0x1]
        %v1215 = vld [vmem:[%s188 + $0x48] sm:$0xe]
        %v1216 = vld [vmem:[%s188 + $0x4c] sm:$0xf]
        %v1217 = vld [vmem:[%s188 + $0x50] sm:$0x1]
        %v1218 = vld [vmem:[%s188 + $0x54] sm:$0xe]
        %v1219 = vld [vmem:[%s188 + $0x58] sm:$0xf]
        %v1220 = vld [vmem:[%s188 + $0x5c] sm:$0x1]
        %v1221 = vld [vmem:[%s188 + $0x60] sm:$0xe]
        %v1222 = vld [vmem:[%s188 + $0x64] sm:$0xf]
        %v1223 = vld [vmem:[%s188 + $0x68] sm:$0x1]
        %v1224 = vld [vmem:[%s188 + $0x6c] sm:$0xe]
        %v1225 = vld [vmem:[%s188 + $0x70] sm:$0xf]
        %v1226 = vld [vmem:[%s188 + $0x74] sm:$0x1]
        %v1227 = vld [vmem:[%s188 + $0x78] sm:$0xe]
        %v1228 = vld [vmem:[%s188 + $0x7c] sm:$0xf]
        %v1229 = vld [vmem:[%s188 + $0x80] sm:$0x1]
        %v1230 = vld [vmem:[%s188 + $0x84] sm:$0xe]
        %v1231 = vld [vmem:[%s188 + $0x88] sm:$0xf]
        %v1232 = vld [vmem:[%s188 + $0x8c] sm:$0x1]
        %v1233 = vld [vmem:[%s188 + $0x90] sm:$0xe]
        %v1234 = vld [vmem:[%s188 + $0x94] sm:$0xf]
        %v1235 = vld [vmem:[%s188 + $0x98] sm:$0x1]
        %v1236 = vld [vmem:[%s188 + $0x9c] sm:$0xe]
        %v1237 = vld [vmem:[%s188 + $0xa0] sm:$0xf]
        %v1238 = vld [vmem:[%s188 + $0xa4] sm:$0x1]
        %v1239 = vld [vmem:[%s188 + $0xa8] sm:$0xe]
        %v1240 = vld [vmem:[%s188 + $0xac] sm:$0xf]
        %v1241 = vld [vmem:[%s188 + $0xb0] sm:$0x1]
        %v1242 = vld [vmem:[%s188 + $0xb4] sm:$0xe]
        %v1243 = vld [vmem:[%s188 + $0xb8] sm:$0xf]
        %v1244 = vld [vmem:[%s188 + $0xbc] sm:$0x1]
        %vm1293 = vcmask 1042432
        %vm1294 = vcmask 1046532
        %vm1295 = vmor %vm1293, %vm1294
        %v1296 = vrot.slane %v1197, 5
        %v1297 = vrot.slane %v1296, 4
        %v1298 = vrot.slane %v1198, 5
        %v1299 = vsel %vm1295, %v1297, %v1298
        %v1300 = vrot.slane %v1298, 4
        %v1301 = vrot.slane %v1199, 5
        %v1302 = vsel %vm1295, %v1300, %v1301
        %v1303 = vrot.slane %v1200, 5
        %v1304 = vrot.slane %v1303, 4
        %v1305 = vrot.slane %v1201, 5
        %v1306 = vsel %vm1295, %v1304, %v1305
        %v1307 = vrot.slane %v1305, 4
        %v1308 = vrot.slane %v1202, 5
        %v1309 = vsel %vm1295, %v1307, %v1308
        %v1310 = vrot.slane %v1203, 5
        %v1311 = vrot.slane %v1310, 4
        %v1312 = vrot.slane %v1204, 5
        %v1313 = vsel %vm1295, %v1311, %v1312
        %v1314 = vrot.slane %v1312, 4
        %v1315 = vrot.slane %v1205, 5
        %v1316 = vsel %vm1295, %v1314, %v1315
        %v1317 = vrot.slane %v1206, 5
        %v1318 = vrot.slane %v1317, 4
        %v1319 = vrot.slane %v1207, 5
        %v1320 = vsel %vm1295, %v1318, %v1319
        %v1321 = vrot.slane %v1319, 4
        %v1322 = vrot.slane %v1208, 5
        %v1323 = vsel %vm1295, %v1321, %v1322
        %v1324 = vrot.slane %v1209, 5
        %v1325 = vrot.slane %v1324, 4
        %v1326 = vrot.slane %v1210, 5
        %v1327 = vsel %vm1295, %v1325, %v1326
        %v1328 = vrot.slane %v1326, 4
        %v1329 = vrot.slane %v1211, 5
        %v1330 = vsel %vm1295, %v1328, %v1329
        %v1331 = vrot.slane %v1212, 5
        %v1332 = vrot.slane %v1331, 4
        %v1333 = vrot.slane %v1213, 5
        %v1334 = vsel %vm1295, %v1332, %v1333
        %v1335 = vrot.slane %v1333, 4
        %v1336 = vrot.slane %v1214, 5
        %v1337 = vsel %vm1295, %v1335, %v1336
        %v1338 = vrot.slane %v1215, 5
        %v1339 = vrot.slane %v1338, 4
        %v1340 = vrot.slane %v1216, 5
        %v1341 = vsel %vm1295, %v1339, %v1340
        %v1342 = vrot.slane %v1340, 4
        %v1343 = vrot.slane %v1217, 5
        %v1344 = vsel %vm1295, %v1342, %v1343
        %v1345 = vrot.slane %v1218, 5
        %v1346 = vrot.slane %v1345, 4
        %v1347 = vrot.slane %v1219, 5
        %v1348 = vsel %vm1295, %v1346, %v1347
        %v1349 = vrot.slane %v1347, 4
        %v1350 = vrot.slane %v1220, 5
        %v1351 = vsel %vm1295, %v1349, %v1350
        %v1352 = vrot.slane %v1221, 5
        %v1353 = vrot.slane %v1352, 4
        %v1354 = vrot.slane %v1222, 5
        %v1355 = vsel %vm1295, %v1353, %v1354
        %v1356 = vrot.slane %v1354, 4
        %v1357 = vrot.slane %v1223, 5
        %v1358 = vsel %vm1295, %v1356, %v1357
        %v1359 = vrot.slane %v1224, 5
        %v1360 = vrot.slane %v1359, 4
        %v1361 = vrot.slane %v1225, 5
        %v1362 = vsel %vm1295, %v1360, %v1361
        %v1363 = vrot.slane %v1361, 4
        %v1364 = vrot.slane %v1226, 5
        %v1365 = vsel %vm1295, %v1363, %v1364
        %v1366 = vrot.slane %v1227, 5
        %v1367 = vrot.slane %v1366, 4
        %v1368 = vrot.slane %v1228, 5
        %v1369 = vsel %vm1295, %v1367, %v1368
        %v1370 = vrot.slane %v1368, 4
        %v1371 = vrot.slane %v1229, 5
        %v1372 = vsel %vm1295, %v1370, %v1371
        %v1373 = vrot.slane %v1230, 5
        %v1374 = vrot.slane %v1373, 4
        %v1375 = vrot.slane %v1231, 5
        %v1376 = vsel %vm1295, %v1374, %v1375
        %v1377 = vrot.slane %v1375, 4
        %v1378 = vrot.slane %v1232, 5
        %v1379 = vsel %vm1295, %v1377, %v1378
        %v1380 = vrot.slane %v1233, 5
        %v1381 = vrot.slane %v1380, 4
        %v1382 = vrot.slane %v1234, 5
        %v1383 = vsel %vm1295, %v1381, %v1382
        %v1384 = vrot.slane %v1382, 4
        %v1385 = vrot.slane %v1235, 5
        %v1386 = vsel %vm1295, %v1384, %v1385
        %v1387 = vrot.slane %v1236, 5
        %v1388 = vrot.slane %v1387, 4
        %v1389 = vrot.slane %v1237, 5
        %v1390 = vsel %vm1295, %v1388, %v1389
        %v1391 = vrot.slane %v1389, 4
        %v1392 = vrot.slane %v1238, 5
        %v1393 = vsel %vm1295, %v1391, %v1392
        %v1394 = vrot.slane %v1239, 5
        %v1395 = vrot.slane %v1394, 4
        %v1396 = vrot.slane %v1240, 5
        %v1397 = vsel %vm1295, %v1395, %v1396
        %v1398 = vrot.slane %v1396, 4
        %v1399 = vrot.slane %v1241, 5
        %v1400 = vsel %vm1295, %v1398, %v1399
        %v1401 = vrot.slane %v1242, 5
        %v1402 = vrot.slane %v1401, 4
        %v1403 = vrot.slane %v1243, 5
        %v1404 = vsel %vm1295, %v1402, %v1403
        %v1405 = vrot.slane %v1403, 4
        %v1406 = vrot.slane %v1244, 5
        %v1407 = vsel %vm1295, %v1405, %v1406
        %s1408 = scalar_lea.vmem %s1, 4
        %v1409 = vld [vmem:[%s1408] sm:$0x3]
        %v1410 = vunpack.c.l.b16 %v1299
        %v1411 = vunpack.c.l.b16 %v1302
        %v1412 = vunpack.c.l.b16 %v1306
        %v1413 = vunpack.c.l.b16 %v1309
        %v1414 = vunpack.c.l.b16 %v1313
        %v1415 = vunpack.c.l.b16 %v1316
        %v1416 = vunpack.c.l.b16 %v1320
        %v1417 = vunpack.c.l.b16 %v1323
        %v1418 = vunpack.c.l.b16 %v1327
        %v1419 = vunpack.c.l.b16 %v1330
        %v1420 = vunpack.c.l.b16 %v1334
        %v1421 = vunpack.c.l.b16 %v1337
        %v1422 = vunpack.c.l.b16 %v1341
        %v1423 = vunpack.c.l.b16 %v1344
        %v1424 = vunpack.c.l.b16 %v1348
        %v1425 = vunpack.c.l.b16 %v1351
        %v1426 = vunpack.c.l.b16 %v1355
        %v1427 = vunpack.c.l.b16 %v1358
        %v1428 = vunpack.c.l.b16 %v1362
        %v1429 = vunpack.c.l.b16 %v1365
        %v1430 = vunpack.c.l.b16 %v1369
        %v1431 = vunpack.c.l.b16 %v1372
        %v1432 = vunpack.c.l.b16 %v1376
        %v1433 = vunpack.c.l.b16 %v1379
        %v1434 = vunpack.c.l.b16 %v1383
        %v1435 = vunpack.c.l.b16 %v1386
        %v1436 = vunpack.c.l.b16 %v1390
        %v1437 = vunpack.c.l.b16 %v1393
        %v1438 = vunpack.c.l.b16 %v1397
        %v1439 = vunpack.c.l.b16 %v1400
        %v1440 = vunpack.c.l.b16 %v1404
        %v1441 = vunpack.c.l.b16 %v1407
        %v1442 = vpack.c.b16 %v1411, %v1410
        %v1443 = vpack.c.b16 %v1413, %v1412
        %v1444 = vpack.c.b16 %v1415, %v1414
        %v1445 = vpack.c.b16 %v1417, %v1416
        %v1446 = vpack.c.b16 %v1419, %v1418
        %v1447 = vpack.c.b16 %v1421, %v1420
        %v1448 = vpack.c.b16 %v1423, %v1422
        %v1449 = vpack.c.b16 %v1425, %v1424
        %v1450 = vpack.c.b16 %v1427, %v1426
        %v1451 = vpack.c.b16 %v1429, %v1428
        %v1452 = vpack.c.b16 %v1431, %v1430
        %v1453 = vpack.c.b16 %v1433, %v1432
        %v1454 = vpack.c.b16 %v1435, %v1434
        %v1455 = vpack.c.b16 %v1437, %v1436
        %v1456 = vpack.c.b16 %v1439, %v1438
        %v1457 = vpack.c.b16 %v1441, %v1440
        %v1459 = vsel %vm302, %v1442, 0
        %v1462 = vsel %vm302, %v1443, 0
        %v1465 = vsel %vm302, %v1444, 0
        %v1468 = vsel %vm302, %v1445, 0
        %v1471 = vsel %vm302, %v1446, 0
        %v1474 = vsel %vm302, %v1447, 0
        %v1477 = vsel %vm302, %v1448, 0
        %v1480 = vsel %vm302, %v1449, 0
        %v1483 = vsel %vm302, %v1450, 0
        %v1486 = vsel %vm302, %v1451, 0
        %v1489 = vsel %vm302, %v1452, 0
        %v1492 = vsel %vm302, %v1453, 0
        %v1495 = vsel %vm302, %v1454, 0
        %v1498 = vsel %vm302, %v1455, 0
        %v1501 = vsel %vm302, %v1456, 0
        %v1504 = vsel %vm302, %v1457, 0
        %v1507 = vsel %vm351, %v1409, 0
        %1509 = vmatpush.bf16.msra.mxu0 0
        %1510 = vmatpush.bf16.msra.mxu0 0
        %1511 = vmatpush.bf16.msra.mxu0 0
        %1512 = vmatpush.bf16.msra.mxu0 0
        %1513 = vmatpush.bf16.msra.mxu0 0
        %1514 = vmatpush.bf16.msra.mxu0 0
        %1515 = vmatpush.bf16.msra.mxu0 0
        %1516 = vmatpush.bf16.msra.mxu0 %v1507
        %1517 = vmatmul.bf16.gmra.mxu0 %v1459
        %v1518 = vpop.f32.mrf.mxu0
        %v1519 = vadd.f32 0.0, %v1518
        %v1520 = vpop.f32.mrf.mxu0
        %v1521 = vadd.f32 0.0, %v1520
        %1522 = vmatmul.bf16.gmra.mxu0 %v1462
        %v1523 = vpop.f32.mrf.mxu0
        %v1524 = vadd.f32 0.0, %v1523
        %v1525 = vpop.f32.mrf.mxu0
        %v1526 = vadd.f32 0.0, %v1525
        %1527 = vmatmul.bf16.gmra.mxu0 %v1465
        %v1528 = vpop.f32.mrf.mxu0
        %v1529 = vadd.f32 0.0, %v1528
        %v1530 = vpop.f32.mrf.mxu0
        %v1531 = vadd.f32 0.0, %v1530
        %1532 = vmatmul.bf16.gmra.mxu0 %v1468
        %v1533 = vpop.f32.mrf.mxu0
        %v1534 = vadd.f32 0.0, %v1533
        %v1535 = vpop.f32.mrf.mxu0
        %v1536 = vadd.f32 0.0, %v1535
        %1537 = vmatmul.bf16.gmra.mxu0 %v1471
        %v1538 = vpop.f32.mrf.mxu0
        %v1539 = vadd.f32 0.0, %v1538
        %v1540 = vpop.f32.mrf.mxu0
        %v1541 = vadd.f32 0.0, %v1540
        %1542 = vmatmul.bf16.gmra.mxu0 %v1474
        %v1543 = vpop.f32.mrf.mxu0
        %v1544 = vadd.f32 0.0, %v1543
        %v1545 = vpop.f32.mrf.mxu0
        %v1546 = vadd.f32 0.0, %v1545
        %1547 = vmatmul.bf16.gmra.mxu0 %v1477
        %v1548 = vpop.f32.mrf.mxu0
        %v1549 = vadd.f32 0.0, %v1548
        %v1550 = vpop.f32.mrf.mxu0
        %v1551 = vadd.f32 0.0, %v1550
        %1552 = vmatmul.bf16.gmra.mxu0 %v1480
        %v1553 = vpop.f32.mrf.mxu0
        %v1554 = vadd.f32 0.0, %v1553
        %v1555 = vpop.f32.mrf.mxu0
        %v1556 = vadd.f32 0.0, %v1555
        %1557 = vmatmul.bf16.gmra.mxu0 %v1483
        %v1558 = vpop.f32.mrf.mxu0
        %v1559 = vadd.f32 0.0, %v1558
        %v1560 = vpop.f32.mrf.mxu0
        %v1561 = vadd.f32 0.0, %v1560
        %1562 = vmatmul.bf16.gmra.mxu0 %v1486
        %v1563 = vpop.f32.mrf.mxu0
        %v1564 = vadd.f32 0.0, %v1563
        %v1565 = vpop.f32.mrf.mxu0
        %v1566 = vadd.f32 0.0, %v1565
        %1567 = vmatmul.bf16.gmra.mxu0 %v1489
        %v1568 = vpop.f32.mrf.mxu0
        %v1569 = vadd.f32 0.0, %v1568
        %v1570 = vpop.f32.mrf.mxu0
        %v1571 = vadd.f32 0.0, %v1570
        %1572 = vmatmul.bf16.gmra.mxu0 %v1492
        %v1573 = vpop.f32.mrf.mxu0
        %v1574 = vadd.f32 0.0, %v1573
        %v1575 = vpop.f32.mrf.mxu0
        %v1576 = vadd.f32 0.0, %v1575
        %1577 = vmatmul.bf16.gmra.mxu0 %v1495
        %v1578 = vpop.f32.mrf.mxu0
        %v1579 = vadd.f32 0.0, %v1578
        %v1580 = vpop.f32.mrf.mxu0
        %v1581 = vadd.f32 0.0, %v1580
        %1582 = vmatmul.bf16.gmra.mxu0 %v1498
        %v1583 = vpop.f32.mrf.mxu0
        %v1584 = vadd.f32 0.0, %v1583
        %v1585 = vpop.f32.mrf.mxu0
        %v1586 = vadd.f32 0.0, %v1585
        %1587 = vmatmul.bf16.gmra.mxu0 %v1501
        %v1588 = vpop.f32.mrf.mxu0
        %v1589 = vadd.f32 0.0, %v1588
        %v1590 = vpop.f32.mrf.mxu0
        %v1591 = vadd.f32 0.0, %v1590
        %1592 = vmatmul.bf16.gmra.mxu0 %v1504
        %v1593 = vpop.f32.mrf.mxu0
        %v1594 = vadd.f32 0.0, %v1593
        %v1595 = vpop.f32.mrf.mxu0
        %v1596 = vadd.f32 0.0, %v1595
        %1597 = vdwg.mxu0
        %v1598 = vld [vmem:[#allocation2] sm:$0xff]
        %v1599 = vld [vmem:[#allocation2 + $0x8] sm:$0xff]
        %v1600 = vld [vmem:[#allocation2 + $0x10] sm:$0xff]
        %v1601 = vld [vmem:[#allocation2 + $0x18] sm:$0xff]
        %v1602 = vld [vmem:[#allocation2 + $0x20] sm:$0xff]
        %v1603 = vld [vmem:[#allocation2 + $0x28] sm:$0xff]
        %v1604 = vld [vmem:[#allocation2 + $0x30] sm:$0xff]
        %v1605 = vld [vmem:[#allocation2 + $0x38] sm:$0xff]
        %v1606 = vld [vmem:[#allocation2 + $0x40] sm:$0xff]
        %v1607 = vld [vmem:[#allocation2 + $0x48] sm:$0xff]
        %v1608 = vld [vmem:[#allocation2 + $0x50] sm:$0xff]
        %v1609 = vld [vmem:[#allocation2 + $0x58] sm:$0xff]
        %v1610 = vld [vmem:[#allocation2 + $0x60] sm:$0xff]
        %v1611 = vld [vmem:[#allocation2 + $0x68] sm:$0xff]
        %v1612 = vld [vmem:[#allocation2 + $0x70] sm:$0xff]
        %v1613 = vld [vmem:[#allocation2 + $0x78] sm:$0xff]
        %v1614 = vld [vmem:[#allocation2 + $0x80] sm:$0xff]
        %v1615 = vld [vmem:[#allocation2 + $0x88] sm:$0xff]
        %v1616 = vld [vmem:[#allocation2 + $0x90] sm:$0xff]
        %v1617 = vld [vmem:[#allocation2 + $0x98] sm:$0xff]
        %v1618 = vld [vmem:[#allocation2 + $0xa0] sm:$0xff]
        %v1619 = vld [vmem:[#allocation2 + $0xa8] sm:$0xff]
        %v1620 = vld [vmem:[#allocation2 + $0xb0] sm:$0xff]
        %v1621 = vld [vmem:[#allocation2 + $0xb8] sm:$0xff]
        %v1622 = vld [vmem:[#allocation2 + $0xc0] sm:$0xff]
        %v1623 = vld [vmem:[#allocation2 + $0xc8] sm:$0xff]
        %v1624 = vld [vmem:[#allocation2 + $0xd0] sm:$0xff]
        %v1625 = vld [vmem:[#allocation2 + $0xd8] sm:$0xff]
        %v1626 = vld [vmem:[#allocation2 + $0xe0] sm:$0xff]
        %v1627 = vld [vmem:[#allocation2 + $0xe8] sm:$0xff]
        %v1628 = vld [vmem:[#allocation2 + $0xf0] sm:$0xff]
        %v1629 = vld [vmem:[#allocation2 + $0xf8] sm:$0xff]
        %v1630 = vadd.f32 %v1598, %v1519
        %v1631 = vadd.f32 %v1599, %v1521
        %v1632 = vadd.f32 %v1600, %v1524
        %v1633 = vadd.f32 %v1601, %v1526
        %v1634 = vadd.f32 %v1602, %v1529
        %v1635 = vadd.f32 %v1603, %v1531
        %v1636 = vadd.f32 %v1604, %v1534
        %v1637 = vadd.f32 %v1605, %v1536
        %v1638 = vadd.f32 %v1606, %v1539
        %v1639 = vadd.f32 %v1607, %v1541
        %v1640 = vadd.f32 %v1608, %v1544
        %v1641 = vadd.f32 %v1609, %v1546
        %v1642 = vadd.f32 %v1610, %v1549
        %v1643 = vadd.f32 %v1611, %v1551
        %v1644 = vadd.f32 %v1612, %v1554
        %v1645 = vadd.f32 %v1613, %v1556
        %v1646 = vadd.f32 %v1614, %v1559
        %v1647 = vadd.f32 %v1615, %v1561
        %v1648 = vadd.f32 %v1616, %v1564
        %v1649 = vadd.f32 %v1617, %v1566
        %v1650 = vadd.f32 %v1618, %v1569
        %v1651 = vadd.f32 %v1619, %v1571
        %v1652 = vadd.f32 %v1620, %v1574
        %v1653 = vadd.f32 %v1621, %v1576
        %v1654 = vadd.f32 %v1622, %v1579
        %v1655 = vadd.f32 %v1623, %v1581
        %v1656 = vadd.f32 %v1624, %v1584
        %v1657 = vadd.f32 %v1625, %v1586
        %v1658 = vadd.f32 %v1626, %v1589
        %v1659 = vadd.f32 %v1627, %v1591
        %v1660 = vadd.f32 %v1628, %v1594
        %v1661 = vadd.f32 %v1629, %v1596
        %1662 = vst [vmem:[#allocation2] sm:$0xff] %v1630
        %1663 = vst [vmem:[#allocation2 + $0x8] sm:$0xff] %v1631
        %1664 = vst [vmem:[#allocation2 + $0x10] sm:$0xff] %v1632
        %1665 = vst [vmem:[#allocation2 + $0x18] sm:$0xff] %v1633
        %1666 = vst [vmem:[#allocation2 + $0x20] sm:$0xff] %v1634
        %1667 = vst [vmem:[#allocation2 + $0x28] sm:$0xff] %v1635
        %1668 = vst [vmem:[#allocation2 + $0x30] sm:$0xff] %v1636
        %1669 = vst [vmem:[#allocation2 + $0x38] sm:$0xff] %v1637
        %1670 = vst [vmem:[#allocation2 + $0x40] sm:$0xff] %v1638
        %1671 = vst [vmem:[#allocation2 + $0x48] sm:$0xff] %v1639
        %1672 = vst [vmem:[#allocation2 + $0x50] sm:$0xff] %v1640
        %1673 = vst [vmem:[#allocation2 + $0x58] sm:$0xff] %v1641
        %1674 = vst [vmem:[#allocation2 + $0x60] sm:$0xff] %v1642
        %1675 = vst [vmem:[#allocation2 + $0x68] sm:$0xff] %v1643
        %1676 = vst [vmem:[#allocation2 + $0x70] sm:$0xff] %v1644
        %1677 = vst [vmem:[#allocation2 + $0x78] sm:$0xff] %v1645
        %1678 = vst [vmem:[#allocation2 + $0x80] sm:$0xff] %v1646
        %1679 = vst [vmem:[#allocation2 + $0x88] sm:$0xff] %v1647
        %1680 = vst [vmem:[#allocation2 + $0x90] sm:$0xff] %v1648
        %1681 = vst [vmem:[#allocation2 + $0x98] sm:$0xff] %v1649
        %1682 = vst [vmem:[#allocation2 + $0xa0] sm:$0xff] %v1650
        %1683 = vst [vmem:[#allocation2 + $0xa8] sm:$0xff] %v1651
        %1684 = vst [vmem:[#allocation2 + $0xb0] sm:$0xff] %v1652
        %1685 = vst [vmem:[#allocation2 + $0xb8] sm:$0xff] %v1653
        %1686 = vst [vmem:[#allocation2 + $0xc0] sm:$0xff] %v1654
        %1687 = vst [vmem:[#allocation2 + $0xc8] sm:$0xff] %v1655
        %1688 = vst [vmem:[#allocation2 + $0xd0] sm:$0xff] %v1656
        %1689 = vst [vmem:[#allocation2 + $0xd8] sm:$0xff] %v1657
        %1690 = vst [vmem:[#allocation2 + $0xe0] sm:$0xff] %v1658
        %1691 = vst [vmem:[#allocation2 + $0xe8] sm:$0xff] %v1659
        %1692 = vst [vmem:[#allocation2 + $0xf0] sm:$0xff] %v1660
        %1693 = vst [vmem:[#allocation2 + $0xf8] sm:$0xff] %v1661
        %s1694 = sadd.s32 %s185, 1
        %s1695 = smul.u32 %s1694, 3
        %s1696 = smul.addr %s1695, 4
        %s1697 = scalar_lea.vmem %s182, %s1696
        %v1698 = vld [vmem:[%s1697] sm:$0xf]
        %v1699 = vld [vmem:[%s1697 + $0x4] sm:$0xf]
        %v1700 = vld [vmem:[%s1697 + $0xc] sm:$0xf]
        %v1701 = vld [vmem:[%s1697 + $0x10] sm:$0xf]
        %v1702 = vld [vmem:[%s1697 + $0x18] sm:$0xf]
        %v1703 = vld [vmem:[%s1697 + $0x1c] sm:$0xf]
        %v1704 = vld [vmem:[%s1697 + $0x24] sm:$0xf]
        %v1705 = vld [vmem:[%s1697 + $0x28] sm:$0xf]
        %v1706 = vld [vmem:[%s1697 + $0x30] sm:$0xf]
        %v1707 = vld [vmem:[%s1697 + $0x34] sm:$0xf]
        %v1708 = vld [vmem:[%s1697 + $0x3c] sm:$0xf]
        %v1709 = vld [vmem:[%s1697 + $0x40] sm:$0xf]
        %v1710 = vld [vmem:[%s1697 + $0x48] sm:$0xf]
        %v1711 = vld [vmem:[%s1697 + $0x4c] sm:$0xf]
        %v1712 = vld [vmem:[%s1697 + $0x54] sm:$0xf]
        %v1713 = vld [vmem:[%s1697 + $0x58] sm:$0xf]
        %v1714 = vld [vmem:[%s1697 + $0x60] sm:$0xf]
        %v1715 = vld [vmem:[%s1697 + $0x64] sm:$0xf]
        %v1716 = vld [vmem:[%s1697 + $0x6c] sm:$0xf]
        %v1717 = vld [vmem:[%s1697 + $0x70] sm:$0xf]
        %v1718 = vld [vmem:[%s1697 + $0x78] sm:$0xf]
        %v1719 = vld [vmem:[%s1697 + $0x7c] sm:$0xf]
        %v1720 = vld [vmem:[%s1697 + $0x84] sm:$0xf]
        %v1721 = vld [vmem:[%s1697 + $0x88] sm:$0xf]
        %v1722 = vld [vmem:[%s1697 + $0x90] sm:$0xf]
        %v1723 = vld [vmem:[%s1697 + $0x94] sm:$0xf]
        %v1724 = vld [vmem:[%s1697 + $0x9c] sm:$0xf]
        %v1725 = vld [vmem:[%s1697 + $0xa0] sm:$0xf]
        %v1726 = vld [vmem:[%s1697 + $0xa8] sm:$0xf]
        %v1727 = vld [vmem:[%s1697 + $0xac] sm:$0xf]
        %v1728 = vld [vmem:[%s1697 + $0xb4] sm:$0xf]
        %v1729 = vld [vmem:[%s1697 + $0xb8] sm:$0xf]
        %s1730 = scalar_lea.vmem %s1, 6
        %v1731 = vld [vmem:[%s1730] sm:$0x3]
        %v1764 = vunpack.c.l.b16 %v1698
        %v1765 = vunpack.c.l.b16 %v1699
        %v1766 = vunpack.c.l.b16 %v1700
        %v1767 = vunpack.c.l.b16 %v1701
        %v1768 = vunpack.c.l.b16 %v1702
        %v1769 = vunpack.c.l.b16 %v1703
        %v1770 = vunpack.c.l.b16 %v1704
        %v1771 = vunpack.c.l.b16 %v1705
        %v1772 = vunpack.c.l.b16 %v1706
        %v1773 = vunpack.c.l.b16 %v1707
        %v1774 = vunpack.c.l.b16 %v1708
        %v1775 = vunpack.c.l.b16 %v1709
        %v1776 = vunpack.c.l.b16 %v1710
        %v1777 = vunpack.c.l.b16 %v1711
        %v1778 = vunpack.c.l.b16 %v1712
        %v1779 = vunpack.c.l.b16 %v1713
        %v1780 = vunpack.c.l.b16 %v1714
        %v1781 = vunpack.c.l.b16 %v1715
        %v1782 = vunpack.c.l.b16 %v1716
        %v1783 = vunpack.c.l.b16 %v1717
        %v1784 = vunpack.c.l.b16 %v1718
        %v1785 = vunpack.c.l.b16 %v1719
        %v1786 = vunpack.c.l.b16 %v1720
        %v1787 = vunpack.c.l.b16 %v1721
        %v1788 = vunpack.c.l.b16 %v1722
        %v1789 = vunpack.c.l.b16 %v1723
        %v1790 = vunpack.c.l.b16 %v1724
        %v1791 = vunpack.c.l.b16 %v1725
        %v1792 = vunpack.c.l.b16 %v1726
        %v1793 = vunpack.c.l.b16 %v1727
        %v1794 = vunpack.c.l.b16 %v1728
        %v1795 = vunpack.c.l.b16 %v1729
        %v1796 = vpack.c.b16 %v1765, %v1764
        %v1797 = vpack.c.b16 %v1767, %v1766
        %v1798 = vpack.c.b16 %v1769, %v1768
        %v1799 = vpack.c.b16 %v1771, %v1770
        %v1800 = vpack.c.b16 %v1773, %v1772
        %v1801 = vpack.c.b16 %v1775, %v1774
        %v1802 = vpack.c.b16 %v1777, %v1776
        %v1803 = vpack.c.b16 %v1779, %v1778
        %v1804 = vpack.c.b16 %v1781, %v1780
        %v1805 = vpack.c.b16 %v1783, %v1782
        %v1806 = vpack.c.b16 %v1785, %v1784
        %v1807 = vpack.c.b16 %v1787, %v1786
        %v1808 = vpack.c.b16 %v1789, %v1788
        %v1809 = vpack.c.b16 %v1791, %v1790
        %v1810 = vpack.c.b16 %v1793, %v1792
        %v1811 = vpack.c.b16 %v1795, %v1794
        %v1813 = vsel %vm302, %v1796, 0
        %v1816 = vsel %vm302, %v1797, 0
        %v1819 = vsel %vm302, %v1798, 0
        %v1822 = vsel %vm302, %v1799, 0
        %v1825 = vsel %vm302, %v1800, 0
        %v1828 = vsel %vm302, %v1801, 0
        %v1831 = vsel %vm302, %v1802, 0
        %v1834 = vsel %vm302, %v1803, 0
        %v1837 = vsel %vm302, %v1804, 0
        %v1840 = vsel %vm302, %v1805, 0
        %v1843 = vsel %vm302, %v1806, 0
        %v1846 = vsel %vm302, %v1807, 0
        %v1849 = vsel %vm302, %v1808, 0
        %v1852 = vsel %vm302, %v1809, 0
        %v1855 = vsel %vm302, %v1810, 0
        %v1858 = vsel %vm302, %v1811, 0
        %v1861 = vsel %vm351, %v1731, 0
        %1863 = vmatpush.bf16.msra.mxu0 0
        %1864 = vmatpush.bf16.msra.mxu0 0
        %1865 = vmatpush.bf16.msra.mxu0 0
        %1866 = vmatpush.bf16.msra.mxu0 0
        %1867 = vmatpush.bf16.msra.mxu0 0
        %1868 = vmatpush.bf16.msra.mxu0 0
        %1869 = vmatpush.bf16.msra.mxu0 0
        %1870 = vmatpush.bf16.msra.mxu0 %v1861
        %1871 = vmatmul.bf16.gmra.mxu0 %v1813
        %v1872 = vpop.f32.mrf.mxu0
        %v1873 = vadd.f32 0.0, %v1872
        %v1874 = vpop.f32.mrf.mxu0
        %v1875 = vadd.f32 0.0, %v1874
        %1876 = vmatmul.bf16.gmra.mxu0 %v1816
        %v1877 = vpop.f32.mrf.mxu0
        %v1878 = vadd.f32 0.0, %v1877
        %v1879 = vpop.f32.mrf.mxu0
        %v1880 = vadd.f32 0.0, %v1879
        %1881 = vmatmul.bf16.gmra.mxu0 %v1819
        %v1882 = vpop.f32.mrf.mxu0
        %v1883 = vadd.f32 0.0, %v1882
        %v1884 = vpop.f32.mrf.mxu0
        %v1885 = vadd.f32 0.0, %v1884
        %1886 = vmatmul.bf16.gmra.mxu0 %v1822
        %v1887 = vpop.f32.mrf.mxu0
        %v1888 = vadd.f32 0.0, %v1887
        %v1889 = vpop.f32.mrf.mxu0
        %v1890 = vadd.f32 0.0, %v1889
        %1891 = vmatmul.bf16.gmra.mxu0 %v1825
        %v1892 = vpop.f32.mrf.mxu0
        %v1893 = vadd.f32 0.0, %v1892
        %v1894 = vpop.f32.mrf.mxu0
        %v1895 = vadd.f32 0.0, %v1894
        %1896 = vmatmul.bf16.gmra.mxu0 %v1828
        %v1897 = vpop.f32.mrf.mxu0
        %v1898 = vadd.f32 0.0, %v1897
        %v1899 = vpop.f32.mrf.mxu0
        %v1900 = vadd.f32 0.0, %v1899
        %1901 = vmatmul.bf16.gmra.mxu0 %v1831
        %v1902 = vpop.f32.mrf.mxu0
        %v1903 = vadd.f32 0.0, %v1902
        %v1904 = vpop.f32.mrf.mxu0
        %v1905 = vadd.f32 0.0, %v1904
        %1906 = vmatmul.bf16.gmra.mxu0 %v1834
        %v1907 = vpop.f32.mrf.mxu0
        %v1908 = vadd.f32 0.0, %v1907
        %v1909 = vpop.f32.mrf.mxu0
        %v1910 = vadd.f32 0.0, %v1909
        %1911 = vmatmul.bf16.gmra.mxu0 %v1837
        %v1912 = vpop.f32.mrf.mxu0
        %v1913 = vadd.f32 0.0, %v1912
        %v1914 = vpop.f32.mrf.mxu0
        %v1915 = vadd.f32 0.0, %v1914
        %1916 = vmatmul.bf16.gmra.mxu0 %v1840
        %v1917 = vpop.f32.mrf.mxu0
        %v1918 = vadd.f32 0.0, %v1917
        %v1919 = vpop.f32.mrf.mxu0
        %v1920 = vadd.f32 0.0, %v1919
        %1921 = vmatmul.bf16.gmra.mxu0 %v1843
        %v1922 = vpop.f32.mrf.mxu0
        %v1923 = vadd.f32 0.0, %v1922
        %v1924 = vpop.f32.mrf.mxu0
        %v1925 = vadd.f32 0.0, %v1924
        %1926 = vmatmul.bf16.gmra.mxu0 %v1846
        %v1927 = vpop.f32.mrf.mxu0
        %v1928 = vadd.f32 0.0, %v1927
        %v1929 = vpop.f32.mrf.mxu0
        %v1930 = vadd.f32 0.0, %v1929
        %1931 = vmatmul.bf16.gmra.mxu0 %v1849
        %v1932 = vpop.f32.mrf.mxu0
        %v1933 = vadd.f32 0.0, %v1932
        %v1934 = vpop.f32.mrf.mxu0
        %v1935 = vadd.f32 0.0, %v1934
        %1936 = vmatmul.bf16.gmra.mxu0 %v1852
        %v1937 = vpop.f32.mrf.mxu0
        %v1938 = vadd.f32 0.0, %v1937
        %v1939 = vpop.f32.mrf.mxu0
        %v1940 = vadd.f32 0.0, %v1939
        %1941 = vmatmul.bf16.gmra.mxu0 %v1855
        %v1942 = vpop.f32.mrf.mxu0
        %v1943 = vadd.f32 0.0, %v1942
        %v1944 = vpop.f32.mrf.mxu0
        %v1945 = vadd.f32 0.0, %v1944
        %1946 = vmatmul.bf16.gmra.mxu0 %v1858
        %v1947 = vpop.f32.mrf.mxu0
        %v1948 = vadd.f32 0.0, %v1947
        %v1949 = vpop.f32.mrf.mxu0
        %v1950 = vadd.f32 0.0, %v1949
        %1951 = vdwg.mxu0
        %v1952 = vld [vmem:[#allocation2] sm:$0xff]
        %v1953 = vld [vmem:[#allocation2 + $0x8] sm:$0xff]
        %v1954 = vld [vmem:[#allocation2 + $0x10] sm:$0xff]
        %v1955 = vld [vmem:[#allocation2 + $0x18] sm:$0xff]
        %v1956 = vld [vmem:[#allocation2 + $0x20] sm:$0xff]
        %v1957 = vld [vmem:[#allocation2 + $0x28] sm:$0xff]
        %v1958 = vld [vmem:[#allocation2 + $0x30] sm:$0xff]
        %v1959 = vld [vmem:[#allocation2 + $0x38] sm:$0xff]
        %v1960 = vld [vmem:[#allocation2 + $0x40] sm:$0xff]
        %v1961 = vld [vmem:[#allocation2 + $0x48] sm:$0xff]
        %v1962 = vld [vmem:[#allocation2 + $0x50] sm:$0xff]
        %v1963 = vld [vmem:[#allocation2 + $0x58] sm:$0xff]
        %v1964 = vld [vmem:[#allocation2 + $0x60] sm:$0xff]
        %v1965 = vld [vmem:[#allocation2 + $0x68] sm:$0xff]
        %v1966 = vld [vmem:[#allocation2 + $0x70] sm:$0xff]
        %v1967 = vld [vmem:[#allocation2 + $0x78] sm:$0xff]
        %v1968 = vld [vmem:[#allocation2 + $0x80] sm:$0xff]
        %v1969 = vld [vmem:[#allocation2 + $0x88] sm:$0xff]
        %v1970 = vld [vmem:[#allocation2 + $0x90] sm:$0xff]
        %v1971 = vld [vmem:[#allocation2 + $0x98] sm:$0xff]
        %v1972 = vld [vmem:[#allocation2 + $0xa0] sm:$0xff]
        %v1973 = vld [vmem:[#allocation2 + $0xa8] sm:$0xff]
        %v1974 = vld [vmem:[#allocation2 + $0xb0] sm:$0xff]
        %v1975 = vld [vmem:[#allocation2 + $0xb8] sm:$0xff]
        %v1976 = vld [vmem:[#allocation2 + $0xc0] sm:$0xff]
        %v1977 = vld [vmem:[#allocation2 + $0xc8] sm:$0xff]
        %v1978 = vld [vmem:[#allocation2 + $0xd0] sm:$0xff]
        %v1979 = vld [vmem:[#allocation2 + $0xd8] sm:$0xff]
        %v1980 = vld [vmem:[#allocation2 + $0xe0] sm:$0xff]
        %v1981 = vld [vmem:[#allocation2 + $0xe8] sm:$0xff]
        %v1982 = vld [vmem:[#allocation2 + $0xf0] sm:$0xff]
        %v1983 = vld [vmem:[#allocation2 + $0xf8] sm:$0xff]
        %v1984 = vadd.f32 %v1952, %v1873
        %v1985 = vadd.f32 %v1953, %v1875
        %v1986 = vadd.f32 %v1954, %v1878
        %v1987 = vadd.f32 %v1955, %v1880
        %v1988 = vadd.f32 %v1956, %v1883
        %v1989 = vadd.f32 %v1957, %v1885
        %v1990 = vadd.f32 %v1958, %v1888
        %v1991 = vadd.f32 %v1959, %v1890
        %v1992 = vadd.f32 %v1960, %v1893
        %v1993 = vadd.f32 %v1961, %v1895
        %v1994 = vadd.f32 %v1962, %v1898
        %v1995 = vadd.f32 %v1963, %v1900
        %v1996 = vadd.f32 %v1964, %v1903
        %v1997 = vadd.f32 %v1965, %v1905
        %v1998 = vadd.f32 %v1966, %v1908
        %v1999 = vadd.f32 %v1967, %v1910
        %v2000 = vadd.f32 %v1968, %v1913
        %v2001 = vadd.f32 %v1969, %v1915
        %v2002 = vadd.f32 %v1970, %v1918
        %v2003 = vadd.f32 %v1971, %v1920
        %v2004 = vadd.f32 %v1972, %v1923
        %v2005 = vadd.f32 %v1973, %v1925
        %v2006 = vadd.f32 %v1974, %v1928
        %v2007 = vadd.f32 %v1975, %v1930
        %v2008 = vadd.f32 %v1976, %v1933
        %v2009 = vadd.f32 %v1977, %v1935
        %v2010 = vadd.f32 %v1978, %v1938
        %v2011 = vadd.f32 %v1979, %v1940
        %v2012 = vadd.f32 %v1980, %v1943
        %v2013 = vadd.f32 %v1981, %v1945
        %v2014 = vadd.f32 %v1982, %v1948
        %v2015 = vadd.f32 %v1983, %v1950
        %2016 = vst [vmem:[#allocation2] sm:$0xff] %v1984
        %2017 = vst [vmem:[#allocation2 + $0x8] sm:$0xff] %v1985
        %2018 = vst [vmem:[#allocation2 + $0x10] sm:$0xff] %v1986
        %2019 = vst [vmem:[#allocation2 + $0x18] sm:$0xff] %v1987
        %2020 = vst [vmem:[#allocation2 + $0x20] sm:$0xff] %v1988
        %2021 = vst [vmem:[#allocation2 + $0x28] sm:$0xff] %v1989
        %2022 = vst [vmem:[#allocation2 + $0x30] sm:$0xff] %v1990
        %2023 = vst [vmem:[#allocation2 + $0x38] sm:$0xff] %v1991
        %2024 = vst [vmem:[#allocation2 + $0x40] sm:$0xff] %v1992
        %2025 = vst [vmem:[#allocation2 + $0x48] sm:$0xff] %v1993
        %2026 = vst [vmem:[#allocation2 + $0x50] sm:$0xff] %v1994
        %2027 = vst [vmem:[#allocation2 + $0x58] sm:$0xff] %v1995
        %2028 = vst [vmem:[#allocation2 + $0x60] sm:$0xff] %v1996
        %2029 = vst [vmem:[#allocation2 + $0x68] sm:$0xff] %v1997
        %2030 = vst [vmem:[#allocation2 + $0x70] sm:$0xff] %v1998
        %2031 = vst [vmem:[#allocation2 + $0x78] sm:$0xff] %v1999
        %2032 = vst [vmem:[#allocation2 + $0x80] sm:$0xff] %v2000
        %2033 = vst [vmem:[#allocation2 + $0x88] sm:$0xff] %v2001
        %2034 = vst [vmem:[#allocation2 + $0x90] sm:$0xff] %v2002
        %2035 = vst [vmem:[#allocation2 + $0x98] sm:$0xff] %v2003
        %2036 = vst [vmem:[#allocation2 + $0xa0] sm:$0xff] %v2004
        %2037 = vst [vmem:[#allocation2 + $0xa8] sm:$0xff] %v2005
        %2038 = vst [vmem:[#allocation2 + $0xb0] sm:$0xff] %v2006
        %2039 = vst [vmem:[#allocation2 + $0xb8] sm:$0xff] %v2007
        %2040 = vst [vmem:[#allocation2 + $0xc0] sm:$0xff] %v2008
        %2041 = vst [vmem:[#allocation2 + $0xc8] sm:$0xff] %v2009
        %2042 = vst [vmem:[#allocation2 + $0xd0] sm:$0xff] %v2010
        %2043 = vst [vmem:[#allocation2 + $0xd8] sm:$0xff] %v2011
        %2044 = vst [vmem:[#allocation2 + $0xe0] sm:$0xff] %v2012
        %2045 = vst [vmem:[#allocation2 + $0xe8] sm:$0xff] %v2013
        %2046 = vst [vmem:[#allocation2 + $0xf0] sm:$0xff] %v2014
        %2047 = vst [vmem:[#allocation2 + $0xf8] sm:$0xff] %v2015
        %v2048 = vld [vmem:[%s1697] sm:$0xf]
        %v2049 = vld [vmem:[%s1697 + $0x4] sm:$0xf]
        %v2050 = vld [vmem:[%s1697 + $0x8] sm:$0x1]
        %v2051 = vld [vmem:[%s1697 + $0xc] sm:$0xf]
        %v2052 = vld [vmem:[%s1697 + $0x10] sm:$0xf]
        %v2053 = vld [vmem:[%s1697 + $0x14] sm:$0x1]
        %v2054 = vld [vmem:[%s1697 + $0x18] sm:$0xf]
        %v2055 = vld [vmem:[%s1697 + $0x1c] sm:$0xf]
        %v2056 = vld [vmem:[%s1697 + $0x20] sm:$0x1]
        %v2057 = vld [vmem:[%s1697 + $0x24] sm:$0xf]
        %v2058 = vld [vmem:[%s1697 + $0x28] sm:$0xf]
        %v2059 = vld [vmem:[%s1697 + $0x2c] sm:$0x1]
        %v2060 = vld [vmem:[%s1697 + $0x30] sm:$0xf]
        %v2061 = vld [vmem:[%s1697 + $0x34] sm:$0xf]
        %v2062 = vld [vmem:[%s1697 + $0x38] sm:$0x1]
        %v2063 = vld [vmem:[%s1697 + $0x3c] sm:$0xf]
        %v2064 = vld [vmem:[%s1697 + $0x40] sm:$0xf]
        %v2065 = vld [vmem:[%s1697 + $0x44] sm:$0x1]
        %v2066 = vld [vmem:[%s1697 + $0x48] sm:$0xf]
        %v2067 = vld [vmem:[%s1697 + $0x4c] sm:$0xf]
        %v2068 = vld [vmem:[%s1697 + $0x50] sm:$0x1]
        %v2069 = vld [vmem:[%s1697 + $0x54] sm:$0xf]
        %v2070 = vld [vmem:[%s1697 + $0x58] sm:$0xf]
        %v2071 = vld [vmem:[%s1697 + $0x5c] sm:$0x1]
        %v2072 = vld [vmem:[%s1697 + $0x60] sm:$0xf]
        %v2073 = vld [vmem:[%s1697 + $0x64] sm:$0xf]
        %v2074 = vld [vmem:[%s1697 + $0x68] sm:$0x1]
        %v2075 = vld [vmem:[%s1697 + $0x6c] sm:$0xf]
        %v2076 = vld [vmem:[%s1697 + $0x70] sm:$0xf]
        %v2077 = vld [vmem:[%s1697 + $0x74] sm:$0x1]
        %v2078 = vld [vmem:[%s1697 + $0x78] sm:$0xf]
        %v2079 = vld [vmem:[%s1697 + $0x7c] sm:$0xf]
        %v2080 = vld [vmem:[%s1697 + $0x80] sm:$0x1]
        %v2081 = vld [vmem:[%s1697 + $0x84] sm:$0xf]
        %v2082 = vld [vmem:[%s1697 + $0x88] sm:$0xf]
        %v2083 = vld [vmem:[%s1697 + $0x8c] sm:$0x1]
        %v2084 = vld [vmem:[%s1697 + $0x90] sm:$0xf]
        %v2085 = vld [vmem:[%s1697 + $0x94] sm:$0xf]
        %v2086 = vld [vmem:[%s1697 + $0x98] sm:$0x1]
        %v2087 = vld [vmem:[%s1697 + $0x9c] sm:$0xf]
        %v2088 = vld [vmem:[%s1697 + $0xa0] sm:$0xf]
        %v2089 = vld [vmem:[%s1697 + $0xa4] sm:$0x1]
        %v2090 = vld [vmem:[%s1697 + $0xa8] sm:$0xf]
        %v2091 = vld [vmem:[%s1697 + $0xac] sm:$0xf]
        %v2092 = vld [vmem:[%s1697 + $0xb0] sm:$0x1]
        %v2093 = vld [vmem:[%s1697 + $0xb4] sm:$0xf]
        %v2094 = vld [vmem:[%s1697 + $0xb8] sm:$0xf]
        %v2095 = vld [vmem:[%s1697 + $0xbc] sm:$0x1]
        %v2097 = vshrl.u32 %v2048, 16
        %v2099 = vrot.slane %v2097, 4
        %v2100 = vshll.u32 %v2048, 16
        %v2102 = vrot.slane %v2100, 5
        %v2103 = vor.u32 %v2099, %v2102
        %v2104 = vrot.slane %v2103, 4
        %v2106 = vshll.u32 %v2049, 16
        %v2108 = vrot.slane %v2106, 5
        %v2109 = vsel %vm526, %v2104, %v2108
        %v2110 = vshrl.u32 %v2049, 16
        %v2112 = vrot.slane %v2110, 4
        %v2113 = vor.u32 %v2112, %v2108
        %v2114 = vrot.slane %v2113, 4
        %v2116 = vshll.u32 %v2050, 16
        %v2118 = vrot.slane %v2116, 5
        %v2119 = vsel %vm526, %v2114, %v2118
        %v2121 = vshrl.u32 %v2051, 16
        %v2123 = vrot.slane %v2121, 4
        %v2124 = vshll.u32 %v2051, 16
        %v2126 = vrot.slane %v2124, 5
        %v2127 = vor.u32 %v2123, %v2126
        %v2128 = vrot.slane %v2127, 4
        %v2130 = vshll.u32 %v2052, 16
        %v2132 = vrot.slane %v2130, 5
        %v2133 = vsel %vm526, %v2128, %v2132
        %v2134 = vshrl.u32 %v2052, 16
        %v2136 = vrot.slane %v2134, 4
        %v2137 = vor.u32 %v2136, %v2132
        %v2138 = vrot.slane %v2137, 4
        %v2140 = vshll.u32 %v2053, 16
        %v2142 = vrot.slane %v2140, 5
        %v2143 = vsel %vm526, %v2138, %v2142
        %v2145 = vshrl.u32 %v2054, 16
        %v2147 = vrot.slane %v2145, 4
        %v2148 = vshll.u32 %v2054, 16
        %v2150 = vrot.slane %v2148, 5
        %v2151 = vor.u32 %v2147, %v2150
        %v2152 = vrot.slane %v2151, 4
        %v2154 = vshll.u32 %v2055, 16
        %v2156 = vrot.slane %v2154, 5
        %v2157 = vsel %vm526, %v2152, %v2156
        %v2158 = vshrl.u32 %v2055, 16
        %v2160 = vrot.slane %v2158, 4
        %v2161 = vor.u32 %v2160, %v2156
        %v2162 = vrot.slane %v2161, 4
        %v2164 = vshll.u32 %v2056, 16
        %v2166 = vrot.slane %v2164, 5
        %v2167 = vsel %vm526, %v2162, %v2166
        %v2169 = vshrl.u32 %v2057, 16
        %v2171 = vrot.slane %v2169, 4
        %v2172 = vshll.u32 %v2057, 16
        %v2174 = vrot.slane %v2172, 5
        %v2175 = vor.u32 %v2171, %v2174
        %v2176 = vrot.slane %v2175, 4
        %v2178 = vshll.u32 %v2058, 16
        %v2180 = vrot.slane %v2178, 5
        %v2181 = vsel %vm526, %v2176, %v2180
        %v2182 = vshrl.u32 %v2058, 16
        %v2184 = vrot.slane %v2182, 4
        %v2185 = vor.u32 %v2184, %v2180
        %v2186 = vrot.slane %v2185, 4
        %v2188 = vshll.u32 %v2059, 16
        %v2190 = vrot.slane %v2188, 5
        %v2191 = vsel %vm526, %v2186, %v2190
        %v2193 = vshrl.u32 %v2060, 16
        %v2195 = vrot.slane %v2193, 4
        %v2196 = vshll.u32 %v2060, 16
        %v2198 = vrot.slane %v2196, 5
        %v2199 = vor.u32 %v2195, %v2198
        %v2200 = vrot.slane %v2199, 4
        %v2202 = vshll.u32 %v2061, 16
        %v2204 = vrot.slane %v2202, 5
        %v2205 = vsel %vm526, %v2200, %v2204
        %v2206 = vshrl.u32 %v2061, 16
        %v2208 = vrot.slane %v2206, 4
        %v2209 = vor.u32 %v2208, %v2204
        %v2210 = vrot.slane %v2209, 4
        %v2212 = vshll.u32 %v2062, 16
        %v2214 = vrot.slane %v2212, 5
        %v2215 = vsel %vm526, %v2210, %v2214
        %v2217 = vshrl.u32 %v2063, 16
        %v2219 = vrot.slane %v2217, 4
        %v2220 = vshll.u32 %v2063, 16
        %v2222 = vrot.slane %v2220, 5
        %v2223 = vor.u32 %v2219, %v2222
        %v2224 = vrot.slane %v2223, 4
        %v2226 = vshll.u32 %v2064, 16
        %v2228 = vrot.slane %v2226, 5
        %v2229 = vsel %vm526, %v2224, %v2228
        %v2230 = vshrl.u32 %v2064, 16
        %v2232 = vrot.slane %v2230, 4
        %v2233 = vor.u32 %v2232, %v2228
        %v2234 = vrot.slane %v2233, 4
        %v2236 = vshll.u32 %v2065, 16
        %v2238 = vrot.slane %v2236, 5
        %v2239 = vsel %vm526, %v2234, %v2238
        %v2241 = vshrl.u32 %v2066, 16
        %v2243 = vrot.slane %v2241, 4
        %v2244 = vshll.u32 %v2066, 16
        %v2246 = vrot.slane %v2244, 5
        %v2247 = vor.u32 %v2243, %v2246
        %v2248 = vrot.slane %v2247, 4
        %v2250 = vshll.u32 %v2067, 16
        %v2252 = vrot.slane %v2250, 5
        %v2253 = vsel %vm526, %v2248, %v2252
        %v2254 = vshrl.u32 %v2067, 16
        %v2256 = vrot.slane %v2254, 4
        %v2257 = vor.u32 %v2256, %v2252
        %v2258 = vrot.slane %v2257, 4
        %v2260 = vshll.u32 %v2068, 16
        %v2262 = vrot.slane %v2260, 5
        %v2263 = vsel %vm526, %v2258, %v2262
        %v2265 = vshrl.u32 %v2069, 16
        %v2267 = vrot.slane %v2265, 4
        %v2268 = vshll.u32 %v2069, 16
        %v2270 = vrot.slane %v2268, 5
        %v2271 = vor.u32 %v2267, %v2270
        %v2272 = vrot.slane %v2271, 4
        %v2274 = vshll.u32 %v2070, 16
        %v2276 = vrot.slane %v2274, 5
        %v2277 = vsel %vm526, %v2272, %v2276
        %v2278 = vshrl.u32 %v2070, 16
        %v2280 = vrot.slane %v2278, 4
        %v2281 = vor.u32 %v2280, %v2276
        %v2282 = vrot.slane %v2281, 4
        %v2284 = vshll.u32 %v2071, 16
        %v2286 = vrot.slane %v2284, 5
        %v2287 = vsel %vm526, %v2282, %v2286
        %v2289 = vshrl.u32 %v2072, 16
        %v2291 = vrot.slane %v2289, 4
        %v2292 = vshll.u32 %v2072, 16
        %v2294 = vrot.slane %v2292, 5
        %v2295 = vor.u32 %v2291, %v2294
        %v2296 = vrot.slane %v2295, 4
        %v2298 = vshll.u32 %v2073, 16
        %v2300 = vrot.slane %v2298, 5
        %v2301 = vsel %vm526, %v2296, %v2300
        %v2302 = vshrl.u32 %v2073, 16
        %v2304 = vrot.slane %v2302, 4
        %v2305 = vor.u32 %v2304, %v2300
        %v2306 = vrot.slane %v2305, 4
        %v2308 = vshll.u32 %v2074, 16
        %v2310 = vrot.slane %v2308, 5
        %v2311 = vsel %vm526, %v2306, %v2310
        %v2313 = vshrl.u32 %v2075, 16
        %v2315 = vrot.slane %v2313, 4
        %v2316 = vshll.u32 %v2075, 16
        %v2318 = vrot.slane %v2316, 5
        %v2319 = vor.u32 %v2315, %v2318
        %v2320 = vrot.slane %v2319, 4
        %v2322 = vshll.u32 %v2076, 16
        %v2324 = vrot.slane %v2322, 5
        %v2325 = vsel %vm526, %v2320, %v2324
        %v2326 = vshrl.u32 %v2076, 16
        %v2328 = vrot.slane %v2326, 4
        %v2329 = vor.u32 %v2328, %v2324
        %v2330 = vrot.slane %v2329, 4
        %v2332 = vshll.u32 %v2077, 16
        %v2334 = vrot.slane %v2332, 5
        %v2335 = vsel %vm526, %v2330, %v2334
        %v2337 = vshrl.u32 %v2078, 16
        %v2339 = vrot.slane %v2337, 4
        %v2340 = vshll.u32 %v2078, 16
        %v2342 = vrot.slane %v2340, 5
        %v2343 = vor.u32 %v2339, %v2342
        %v2344 = vrot.slane %v2343, 4
        %v2346 = vshll.u32 %v2079, 16
        %v2348 = vrot.slane %v2346, 5
        %v2349 = vsel %vm526, %v2344, %v2348
        %v2350 = vshrl.u32 %v2079, 16
        %v2352 = vrot.slane %v2350, 4
        %v2353 = vor.u32 %v2352, %v2348
        %v2354 = vrot.slane %v2353, 4
        %v2356 = vshll.u32 %v2080, 16
        %v2358 = vrot.slane %v2356, 5
        %v2359 = vsel %vm526, %v2354, %v2358
        %v2361 = vshrl.u32 %v2081, 16
        %v2363 = vrot.slane %v2361, 4
        %v2364 = vshll.u32 %v2081, 16
        %v2366 = vrot.slane %v2364, 5
        %v2367 = vor.u32 %v2363, %v2366
        %v2368 = vrot.slane %v2367, 4
        %v2370 = vshll.u32 %v2082, 16
        %v2372 = vrot.slane %v2370, 5
        %v2373 = vsel %vm526, %v2368, %v2372
        %v2374 = vshrl.u32 %v2082, 16
        %v2376 = vrot.slane %v2374, 4
        %v2377 = vor.u32 %v2376, %v2372
        %v2378 = vrot.slane %v2377, 4
        %v2380 = vshll.u32 %v2083, 16
        %v2382 = vrot.slane %v2380, 5
        %v2383 = vsel %vm526, %v2378, %v2382
        %v2385 = vshrl.u32 %v2084, 16
        %v2387 = vrot.slane %v2385, 4
        %v2388 = vshll.u32 %v2084, 16
        %v2390 = vrot.slane %v2388, 5
        %v2391 = vor.u32 %v2387, %v2390
        %v2392 = vrot.slane %v2391, 4
        %v2394 = vshll.u32 %v2085, 16
        %v2396 = vrot.slane %v2394, 5
        %v2397 = vsel %vm526, %v2392, %v2396
        %v2398 = vshrl.u32 %v2085, 16
        %v2400 = vrot.slane %v2398, 4
        %v2401 = vor.u32 %v2400, %v2396
        %v2402 = vrot.slane %v2401, 4
        %v2404 = vshll.u32 %v2086, 16
        %v2406 = vrot.slane %v2404, 5
        %v2407 = vsel %vm526, %v2402, %v2406
        %v2409 = vshrl.u32 %v2087, 16
        %v2411 = vrot.slane %v2409, 4
        %v2412 = vshll.u32 %v2087, 16
        %v2414 = vrot.slane %v2412, 5
        %v2415 = vor.u32 %v2411, %v2414
        %v2416 = vrot.slane %v2415, 4
        %v2418 = vshll.u32 %v2088, 16
        %v2420 = vrot.slane %v2418, 5
        %v2421 = vsel %vm526, %v2416, %v2420
        %v2422 = vshrl.u32 %v2088, 16
        %v2424 = vrot.slane %v2422, 4
        %v2425 = vor.u32 %v2424, %v2420
        %v2426 = vrot.slane %v2425, 4
        %v2428 = vshll.u32 %v2089, 16
        %v2430 = vrot.slane %v2428, 5
        %v2431 = vsel %vm526, %v2426, %v2430
        %v2433 = vshrl.u32 %v2090, 16
        %v2435 = vrot.slane %v2433, 4
        %v2436 = vshll.u32 %v2090, 16
        %v2438 = vrot.slane %v2436, 5
        %v2439 = vor.u32 %v2435, %v2438
        %v2440 = vrot.slane %v2439, 4
        %v2442 = vshll.u32 %v2091, 16
        %v2444 = vrot.slane %v2442, 5
        %v2445 = vsel %vm526, %v2440, %v2444
        %v2446 = vshrl.u32 %v2091, 16
        %v2448 = vrot.slane %v2446, 4
        %v2449 = vor.u32 %v2448, %v2444
        %v2450 = vrot.slane %v2449, 4
        %v2452 = vshll.u32 %v2092, 16
        %v2454 = vrot.slane %v2452, 5
        %v2455 = vsel %vm526, %v2450, %v2454
        %v2457 = vshrl.u32 %v2093, 16
        %v2459 = vrot.slane %v2457, 4
        %v2460 = vshll.u32 %v2093, 16
        %v2462 = vrot.slane %v2460, 5
        %v2463 = vor.u32 %v2459, %v2462
        %v2464 = vrot.slane %v2463, 4
        %v2466 = vshll.u32 %v2094, 16
        %v2468 = vrot.slane %v2466, 5
        %v2469 = vsel %vm526, %v2464, %v2468
        %v2470 = vshrl.u32 %v2094, 16
        %v2472 = vrot.slane %v2470, 4
        %v2473 = vor.u32 %v2472, %v2468
        %v2474 = vrot.slane %v2473, 4
        %v2476 = vshll.u32 %v2095, 16
        %v2478 = vrot.slane %v2476, 5
        %v2479 = vsel %vm526, %v2474, %v2478
        %s2480 = scalar_lea.vmem %s1, 8
        %v2481 = vld [vmem:[%s2480] sm:$0x3]
        %v2482 = vunpack.c.l.b16 %v2109
        %v2483 = vunpack.c.l.b16 %v2119
        %v2484 = vunpack.c.l.b16 %v2133
        %v2485 = vunpack.c.l.b16 %v2143
        %v2486 = vunpack.c.l.b16 %v2157
        %v2487 = vunpack.c.l.b16 %v2167
        %v2488 = vunpack.c.l.b16 %v2181
        %v2489 = vunpack.c.l.b16 %v2191
        %v2490 = vunpack.c.l.b16 %v2205
        %v2491 = vunpack.c.l.b16 %v2215
        %v2492 = vunpack.c.l.b16 %v2229
        %v2493 = vunpack.c.l.b16 %v2239
        %v2494 = vunpack.c.l.b16 %v2253
        %v2495 = vunpack.c.l.b16 %v2263
        %v2496 = vunpack.c.l.b16 %v2277
        %v2497 = vunpack.c.l.b16 %v2287
        %v2498 = vunpack.c.l.b16 %v2301
        %v2499 = vunpack.c.l.b16 %v2311
        %v2500 = vunpack.c.l.b16 %v2325
        %v2501 = vunpack.c.l.b16 %v2335
        %v2502 = vunpack.c.l.b16 %v2349
        %v2503 = vunpack.c.l.b16 %v2359
        %v2504 = vunpack.c.l.b16 %v2373
        %v2505 = vunpack.c.l.b16 %v2383
        %v2506 = vunpack.c.l.b16 %v2397
        %v2507 = vunpack.c.l.b16 %v2407
        %v2508 = vunpack.c.l.b16 %v2421
        %v2509 = vunpack.c.l.b16 %v2431
        %v2510 = vunpack.c.l.b16 %v2445
        %v2511 = vunpack.c.l.b16 %v2455
        %v2512 = vunpack.c.l.b16 %v2469
        %v2513 = vunpack.c.l.b16 %v2479
        %v2514 = vpack.c.b16 %v2483, %v2482
        %v2515 = vpack.c.b16 %v2485, %v2484
        %v2516 = vpack.c.b16 %v2487, %v2486
        %v2517 = vpack.c.b16 %v2489, %v2488
        %v2518 = vpack.c.b16 %v2491, %v2490
        %v2519 = vpack.c.b16 %v2493, %v2492
        %v2520 = vpack.c.b16 %v2495, %v2494
        %v2521 = vpack.c.b16 %v2497, %v2496
        %v2522 = vpack.c.b16 %v2499, %v2498
        %v2523 = vpack.c.b16 %v2501, %v2500
        %v2524 = vpack.c.b16 %v2503, %v2502
        %v2525 = vpack.c.b16 %v2505, %v2504
        %v2526 = vpack.c.b16 %v2507, %v2506
        %v2527 = vpack.c.b16 %v2509, %v2508
        %v2528 = vpack.c.b16 %v2511, %v2510
        %v2529 = vpack.c.b16 %v2513, %v2512
        %v2531 = vsel %vm302, %v2514, 0
        %v2534 = vsel %vm302, %v2515, 0
        %v2537 = vsel %vm302, %v2516, 0
        %v2540 = vsel %vm302, %v2517, 0
        %v2543 = vsel %vm302, %v2518, 0
        %v2546 = vsel %vm302, %v2519, 0
        %v2549 = vsel %vm302, %v2520, 0
        %v2552 = vsel %vm302, %v2521, 0
        %v2555 = vsel %vm302, %v2522, 0
        %v2558 = vsel %vm302, %v2523, 0
        %v2561 = vsel %vm302, %v2524, 0
        %v2564 = vsel %vm302, %v2525, 0
        %v2567 = vsel %vm302, %v2526, 0
        %v2570 = vsel %vm302, %v2527, 0
        %v2573 = vsel %vm302, %v2528, 0
        %v2576 = vsel %vm302, %v2529, 0
        %v2579 = vsel %vm351, %v2481, 0
        %2581 = vmatpush.bf16.msra.mxu0 0
        %2582 = vmatpush.bf16.msra.mxu0 0
        %2583 = vmatpush.bf16.msra.mxu0 0
        %2584 = vmatpush.bf16.msra.mxu0 0
        %2585 = vmatpush.bf16.msra.mxu0 0
        %2586 = vmatpush.bf16.msra.mxu0 0
        %2587 = vmatpush.bf16.msra.mxu0 0
        %2588 = vmatpush.bf16.msra.mxu0 %v2579
        %2589 = vmatmul.bf16.gmra.mxu0 %v2531
        %v2590 = vpop.f32.mrf.mxu0
        %v2591 = vadd.f32 0.0, %v2590
        %v2592 = vpop.f32.mrf.mxu0
        %v2593 = vadd.f32 0.0, %v2592
        %2594 = vmatmul.bf16.gmra.mxu0 %v2534
        %v2595 = vpop.f32.mrf.mxu0
        %v2596 = vadd.f32 0.0, %v2595
        %v2597 = vpop.f32.mrf.mxu0
        %v2598 = vadd.f32 0.0, %v2597
        %2599 = vmatmul.bf16.gmra.mxu0 %v2537
        %v2600 = vpop.f32.mrf.mxu0
        %v2601 = vadd.f32 0.0, %v2600
        %v2602 = vpop.f32.mrf.mxu0
        %v2603 = vadd.f32 0.0, %v2602
        %2604 = vmatmul.bf16.gmra.mxu0 %v2540
        %v2605 = vpop.f32.mrf.mxu0
        %v2606 = vadd.f32 0.0, %v2605
        %v2607 = vpop.f32.mrf.mxu0
        %v2608 = vadd.f32 0.0, %v2607
        %2609 = vmatmul.bf16.gmra.mxu0 %v2543
        %v2610 = vpop.f32.mrf.mxu0
        %v2611 = vadd.f32 0.0, %v2610
        %v2612 = vpop.f32.mrf.mxu0
        %v2613 = vadd.f32 0.0, %v2612
        %2614 = vmatmul.bf16.gmra.mxu0 %v2546
        %v2615 = vpop.f32.mrf.mxu0
        %v2616 = vadd.f32 0.0, %v2615
        %v2617 = vpop.f32.mrf.mxu0
        %v2618 = vadd.f32 0.0, %v2617
        %2619 = vmatmul.bf16.gmra.mxu0 %v2549
        %v2620 = vpop.f32.mrf.mxu0
        %v2621 = vadd.f32 0.0, %v2620
        %v2622 = vpop.f32.mrf.mxu0
        %v2623 = vadd.f32 0.0, %v2622
        %2624 = vmatmul.bf16.gmra.mxu0 %v2552
        %v2625 = vpop.f32.mrf.mxu0
        %v2626 = vadd.f32 0.0, %v2625
        %v2627 = vpop.f32.mrf.mxu0
        %v2628 = vadd.f32 0.0, %v2627
        %2629 = vmatmul.bf16.gmra.mxu0 %v2555
        %v2630 = vpop.f32.mrf.mxu0
        %v2631 = vadd.f32 0.0, %v2630
        %v2632 = vpop.f32.mrf.mxu0
        %v2633 = vadd.f32 0.0, %v2632
        %2634 = vmatmul.bf16.gmra.mxu0 %v2558
        %v2635 = vpop.f32.mrf.mxu0
        %v2636 = vadd.f32 0.0, %v2635
        %v2637 = vpop.f32.mrf.mxu0
        %v2638 = vadd.f32 0.0, %v2637
        %2639 = vmatmul.bf16.gmra.mxu0 %v2561
        %v2640 = vpop.f32.mrf.mxu0
        %v2641 = vadd.f32 0.0, %v2640
        %v2642 = vpop.f32.mrf.mxu0
        %v2643 = vadd.f32 0.0, %v2642
        %2644 = vmatmul.bf16.gmra.mxu0 %v2564
        %v2645 = vpop.f32.mrf.mxu0
        %v2646 = vadd.f32 0.0, %v2645
        %v2647 = vpop.f32.mrf.mxu0
        %v2648 = vadd.f32 0.0, %v2647
        %2649 = vmatmul.bf16.gmra.mxu0 %v2567
        %v2650 = vpop.f32.mrf.mxu0
        %v2651 = vadd.f32 0.0, %v2650
        %v2652 = vpop.f32.mrf.mxu0
        %v2653 = vadd.f32 0.0, %v2652
        %2654 = vmatmul.bf16.gmra.mxu0 %v2570
        %v2655 = vpop.f32.mrf.mxu0
        %v2656 = vadd.f32 0.0, %v2655
        %v2657 = vpop.f32.mrf.mxu0
        %v2658 = vadd.f32 0.0, %v2657
        %2659 = vmatmul.bf16.gmra.mxu0 %v2573
        %v2660 = vpop.f32.mrf.mxu0
        %v2661 = vadd.f32 0.0, %v2660
        %v2662 = vpop.f32.mrf.mxu0
        %v2663 = vadd.f32 0.0, %v2662
        %2664 = vmatmul.bf16.gmra.mxu0 %v2576
        %v2665 = vpop.f32.mrf.mxu0
        %v2666 = vadd.f32 0.0, %v2665
        %v2667 = vpop.f32.mrf.mxu0
        %v2668 = vadd.f32 0.0, %v2667
        %2669 = vdwg.mxu0
        %v2670 = vld [vmem:[#allocation2] sm:$0xff]
        %v2671 = vld [vmem:[#allocation2 + $0x8] sm:$0xff]
        %v2672 = vld [vmem:[#allocation2 + $0x10] sm:$0xff]
        %v2673 = vld [vmem:[#allocation2 + $0x18] sm:$0xff]
        %v2674 = vld [vmem:[#allocation2 + $0x20] sm:$0xff]
        %v2675 = vld [vmem:[#allocation2 + $0x28] sm:$0xff]
        %v2676 = vld [vmem:[#allocation2 + $0x30] sm:$0xff]
        %v2677 = vld [vmem:[#allocation2 + $0x38] sm:$0xff]
        %v2678 = vld [vmem:[#allocation2 + $0x40] sm:$0xff]
        %v2679 = vld [vmem:[#allocation2 + $0x48] sm:$0xff]
        %v2680 = vld [vmem:[#allocation2 + $0x50] sm:$0xff]
        %v2681 = vld [vmem:[#allocation2 + $0x58] sm:$0xff]
        %v2682 = vld [vmem:[#allocation2 + $0x60] sm:$0xff]
        %v2683 = vld [vmem:[#allocation2 + $0x68] sm:$0xff]
        %v2684 = vld [vmem:[#allocation2 + $0x70] sm:$0xff]
        %v2685 = vld [vmem:[#allocation2 + $0x78] sm:$0xff]
        %v2686 = vld [vmem:[#allocation2 + $0x80] sm:$0xff]
        %v2687 = vld [vmem:[#allocation2 + $0x88] sm:$0xff]
        %v2688 = vld [vmem:[#allocation2 + $0x90] sm:$0xff]
        %v2689 = vld [vmem:[#allocation2 + $0x98] sm:$0xff]
        %v2690 = vld [vmem:[#allocation2 + $0xa0] sm:$0xff]
        %v2691 = vld [vmem:[#allocation2 + $0xa8] sm:$0xff]
        %v2692 = vld [vmem:[#allocation2 + $0xb0] sm:$0xff]
        %v2693 = vld [vmem:[#allocation2 + $0xb8] sm:$0xff]
        %v2694 = vld [vmem:[#allocation2 + $0xc0] sm:$0xff]
        %v2695 = vld [vmem:[#allocation2 + $0xc8] sm:$0xff]
        %v2696 = vld [vmem:[#allocation2 + $0xd0] sm:$0xff]
        %v2697 = vld [vmem:[#allocation2 + $0xd8] sm:$0xff]
        %v2698 = vld [vmem:[#allocation2 + $0xe0] sm:$0xff]
        %v2699 = vld [vmem:[#allocation2 + $0xe8] sm:$0xff]
        %v2700 = vld [vmem:[#allocation2 + $0xf0] sm:$0xff]
        %v2701 = vld [vmem:[#allocation2 + $0xf8] sm:$0xff]
        %v2702 = vadd.f32 %v2670, %v2591
        %v2703 = vadd.f32 %v2671, %v2593
        %v2704 = vadd.f32 %v2672, %v2596
        %v2705 = vadd.f32 %v2673, %v2598
        %v2706 = vadd.f32 %v2674, %v2601
        %v2707 = vadd.f32 %v2675, %v2603
        %v2708 = vadd.f32 %v2676, %v2606
        %v2709 = vadd.f32 %v2677, %v2608
        %v2710 = vadd.f32 %v2678, %v2611
        %v2711 = vadd.f32 %v2679, %v2613
        %v2712 = vadd.f32 %v2680, %v2616
        %v2713 = vadd.f32 %v2681, %v2618
        %v2714 = vadd.f32 %v2682, %v2621
        %v2715 = vadd.f32 %v2683, %v2623
        %v2716 = vadd.f32 %v2684, %v2626
        %v2717 = vadd.f32 %v2685, %v2628
        %v2718 = vadd.f32 %v2686, %v2631
        %v2719 = vadd.f32 %v2687, %v2633
        %v2720 = vadd.f32 %v2688, %v2636
        %v2721 = vadd.f32 %v2689, %v2638
        %v2722 = vadd.f32 %v2690, %v2641
        %v2723 = vadd.f32 %v2691, %v2643
        %v2724 = vadd.f32 %v2692, %v2646
        %v2725 = vadd.f32 %v2693, %v2648
        %v2726 = vadd.f32 %v2694, %v2651
        %v2727 = vadd.f32 %v2695, %v2653
        %v2728 = vadd.f32 %v2696, %v2656
        %v2729 = vadd.f32 %v2697, %v2658
        %v2730 = vadd.f32 %v2698, %v2661
        %v2731 = vadd.f32 %v2699, %v2663
        %v2732 = vadd.f32 %v2700, %v2666
        %v2733 = vadd.f32 %v2701, %v2668
        %2734 = vst [vmem:[#allocation2] sm:$0xff] %v2702
        %2735 = vst [vmem:[#allocation2 + $0x8] sm:$0xff] %v2703
        %2736 = vst [vmem:[#allocation2 + $0x10] sm:$0xff] %v2704
        %2737 = vst [vmem:[#allocation2 + $0x18] sm:$0xff] %v2705
        %2738 = vst [vmem:[#allocation2 + $0x20] sm:$0xff] %v2706
        %2739 = vst [vmem:[#allocation2 + $0x28] sm:$0xff] %v2707
        %2740 = vst [vmem:[#allocation2 + $0x30] sm:$0xff] %v2708
        %2741 = vst [vmem:[#allocation2 + $0x38] sm:$0xff] %v2709
        %2742 = vst [vmem:[#allocation2 + $0x40] sm:$0xff] %v2710
        %2743 = vst [vmem:[#allocation2 + $0x48] sm:$0xff] %v2711
        %2744 = vst [vmem:[#allocation2 + $0x50] sm:$0xff] %v2712
        %2745 = vst [vmem:[#allocation2 + $0x58] sm:$0xff] %v2713
        %2746 = vst [vmem:[#allocation2 + $0x60] sm:$0xff] %v2714
        %2747 = vst [vmem:[#allocation2 + $0x68] sm:$0xff] %v2715
        %2748 = vst [vmem:[#allocation2 + $0x70] sm:$0xff] %v2716
        %2749 = vst [vmem:[#allocation2 + $0x78] sm:$0xff] %v2717
        %2750 = vst [vmem:[#allocation2 + $0x80] sm:$0xff] %v2718
        %2751 = vst [vmem:[#allocation2 + $0x88] sm:$0xff] %v2719
        %2752 = vst [vmem:[#allocation2 + $0x90] sm:$0xff] %v2720
        %2753 = vst [vmem:[#allocation2 + $0x98] sm:$0xff] %v2721
        %2754 = vst [vmem:[#allocation2 + $0xa0] sm:$0xff] %v2722
        %2755 = vst [vmem:[#allocation2 + $0xa8] sm:$0xff] %v2723
        %2756 = vst [vmem:[#allocation2 + $0xb0] sm:$0xff] %v2724
        %2757 = vst [vmem:[#allocation2 + $0xb8] sm:$0xff] %v2725
        %2758 = vst [vmem:[#allocation2 + $0xc0] sm:$0xff] %v2726
        %2759 = vst [vmem:[#allocation2 + $0xc8] sm:$0xff] %v2727
        %2760 = vst [vmem:[#allocation2 + $0xd0] sm:$0xff] %v2728
        %2761 = vst [vmem:[#allocation2 + $0xd8] sm:$0xff] %v2729
        %2762 = vst [vmem:[#allocation2 + $0xe0] sm:$0xff] %v2730
        %2763 = vst [vmem:[#allocation2 + $0xe8] sm:$0xff] %v2731
        %2764 = vst [vmem:[#allocation2 + $0xf0] sm:$0xff] %v2732
        %2765 = vst [vmem:[#allocation2 + $0xf8] sm:$0xff] %v2733
        %v2766 = vld [vmem:[%s1697] sm:$0xe]
        %v2767 = vld [vmem:[%s1697 + $0x4] sm:$0xf]
        %v2768 = vld [vmem:[%s1697 + $0x8] sm:$0x1]
        %v2769 = vld [vmem:[%s1697 + $0xc] sm:$0xe]
        %v2770 = vld [vmem:[%s1697 + $0x10] sm:$0xf]
        %v2771 = vld [vmem:[%s1697 + $0x14] sm:$0x1]
        %v2772 = vld [vmem:[%s1697 + $0x18] sm:$0xe]
        %v2773 = vld [vmem:[%s1697 + $0x1c] sm:$0xf]
        %v2774 = vld [vmem:[%s1697 + $0x20] sm:$0x1]
        %v2775 = vld [vmem:[%s1697 + $0x24] sm:$0xe]
        %v2776 = vld [vmem:[%s1697 + $0x28] sm:$0xf]
        %v2777 = vld [vmem:[%s1697 + $0x2c] sm:$0x1]
        %v2778 = vld [vmem:[%s1697 + $0x30] sm:$0xe]
        %v2779 = vld [vmem:[%s1697 + $0x34] sm:$0xf]
        %v2780 = vld [vmem:[%s1697 + $0x38] sm:$0x1]
        %v2781 = vld [vmem:[%s1697 + $0x3c] sm:$0xe]
        %v2782 = vld [vmem:[%s1697 + $0x40] sm:$0xf]
        %v2783 = vld [vmem:[%s1697 + $0x44] sm:$0x1]
        %v2784 = vld [vmem:[%s1697 + $0x48] sm:$0xe]
        %v2785 = vld [vmem:[%s1697 + $0x4c] sm:$0xf]
        %v2786 = vld [vmem:[%s1697 + $0x50] sm:$0x1]
        %v2787 = vld [vmem:[%s1697 + $0x54] sm:$0xe]
        %v2788 = vld [vmem:[%s1697 + $0x58] sm:$0xf]
        %v2789 = vld [vmem:[%s1697 + $0x5c] sm:$0x1]
        %v2790 = vld [vmem:[%s1697 + $0x60] sm:$0xe]
        %v2791 = vld [vmem:[%s1697 + $0x64] sm:$0xf]
        %v2792 = vld [vmem:[%s1697 + $0x68] sm:$0x1]
        %v2793 = vld [vmem:[%s1697 + $0x6c] sm:$0xe]
        %v2794 = vld [vmem:[%s1697 + $0x70] sm:$0xf]
        %v2795 = vld [vmem:[%s1697 + $0x74] sm:$0x1]
        %v2796 = vld [vmem:[%s1697 + $0x78] sm:$0xe]
        %v2797 = vld [vmem:[%s1697 + $0x7c] sm:$0xf]
        %v2798 = vld [vmem:[%s1697 + $0x80] sm:$0x1]
        %v2799 = vld [vmem:[%s1697 + $0x84] sm:$0xe]
        %v2800 = vld [vmem:[%s1697 + $0x88] sm:$0xf]
        %v2801 = vld [vmem:[%s1697 + $0x8c] sm:$0x1]
        %v2802 = vld [vmem:[%s1697 + $0x90] sm:$0xe]
        %v2803 = vld [vmem:[%s1697 + $0x94] sm:$0xf]
        %v2804 = vld [vmem:[%s1697 + $0x98] sm:$0x1]
        %v2805 = vld [vmem:[%s1697 + $0x9c] sm:$0xe]
        %v2806 = vld [vmem:[%s1697 + $0xa0] sm:$0xf]
        %v2807 = vld [vmem:[%s1697 + $0xa4] sm:$0x1]
        %v2808 = vld [vmem:[%s1697 + $0xa8] sm:$0xe]
        %v2809 = vld [vmem:[%s1697 + $0xac] sm:$0xf]
        %v2810 = vld [vmem:[%s1697 + $0xb0] sm:$0x1]
        %v2811 = vld [vmem:[%s1697 + $0xb4] sm:$0xe]
        %v2812 = vld [vmem:[%s1697 + $0xb8] sm:$0xf]
        %v2813 = vld [vmem:[%s1697 + $0xbc] sm:$0x1]
        %v2862 = vrot.slane %v2766, 5
        %v2863 = vrot.slane %v2862, 4
        %v2864 = vrot.slane %v2767, 5
        %v2865 = vsel %vm1295, %v2863, %v2864
        %v2866 = vrot.slane %v2864, 4
        %v2867 = vrot.slane %v2768, 5
        %v2868 = vsel %vm1295, %v2866, %v2867
        %v2869 = vrot.slane %v2769, 5
        %v2870 = vrot.slane %v2869, 4
        %v2871 = vrot.slane %v2770, 5
        %v2872 = vsel %vm1295, %v2870, %v2871
        %v2873 = vrot.slane %v2871, 4
        %v2874 = vrot.slane %v2771, 5
        %v2875 = vsel %vm1295, %v2873, %v2874
        %v2876 = vrot.slane %v2772, 5
        %v2877 = vrot.slane %v2876, 4
        %v2878 = vrot.slane %v2773, 5
        %v2879 = vsel %vm1295, %v2877, %v2878
        %v2880 = vrot.slane %v2878, 4
        %v2881 = vrot.slane %v2774, 5
        %v2882 = vsel %vm1295, %v2880, %v2881
        %v2883 = vrot.slane %v2775, 5
        %v2884 = vrot.slane %v2883, 4
        %v2885 = vrot.slane %v2776, 5
        %v2886 = vsel %vm1295, %v2884, %v2885
        %v2887 = vrot.slane %v2885, 4
        %v2888 = vrot.slane %v2777, 5
        %v2889 = vsel %vm1295, %v2887, %v2888
        %v2890 = vrot.slane %v2778, 5
        %v2891 = vrot.slane %v2890, 4
        %v2892 = vrot.slane %v2779, 5
        %v2893 = vsel %vm1295, %v2891, %v2892
        %v2894 = vrot.slane %v2892, 4
        %v2895 = vrot.slane %v2780, 5
        %v2896 = vsel %vm1295, %v2894, %v2895
        %v2897 = vrot.slane %v2781, 5
        %v2898 = vrot.slane %v2897, 4
        %v2899 = vrot.slane %v2782, 5
        %v2900 = vsel %vm1295, %v2898, %v2899
        %v2901 = vrot.slane %v2899, 4
        %v2902 = vrot.slane %v2783, 5
        %v2903 = vsel %vm1295, %v2901, %v2902
        %v2904 = vrot.slane %v2784, 5
        %v2905 = vrot.slane %v2904, 4
        %v2906 = vrot.slane %v2785, 5
        %v2907 = vsel %vm1295, %v2905, %v2906
        %v2908 = vrot.slane %v2906, 4
        %v2909 = vrot.slane %v2786, 5
        %v2910 = vsel %vm1295, %v2908, %v2909
        %v2911 = vrot.slane %v2787, 5
        %v2912 = vrot.slane %v2911, 4
        %v2913 = vrot.slane %v2788, 5
        %v2914 = vsel %vm1295, %v2912, %v2913
        %v2915 = vrot.slane %v2913, 4
        %v2916 = vrot.slane %v2789, 5
        %v2917 = vsel %vm1295, %v2915, %v2916
        %v2918 = vrot.slane %v2790, 5
        %v2919 = vrot.slane %v2918, 4
        %v2920 = vrot.slane %v2791, 5
        %v2921 = vsel %vm1295, %v2919, %v2920
        %v2922 = vrot.slane %v2920, 4
        %v2923 = vrot.slane %v2792, 5
        %v2924 = vsel %vm1295, %v2922, %v2923
        %v2925 = vrot.slane %v2793, 5
        %v2926 = vrot.slane %v2925, 4
        %v2927 = vrot.slane %v2794, 5
        %v2928 = vsel %vm1295, %v2926, %v2927
        %v2929 = vrot.slane %v2927, 4
        %v2930 = vrot.slane %v2795, 5
        %v2931 = vsel %vm1295, %v2929, %v2930
        %v2932 = vrot.slane %v2796, 5
        %v2933 = vrot.slane %v2932, 4
        %v2934 = vrot.slane %v2797, 5
        %v2935 = vsel %vm1295, %v2933, %v2934
        %v2936 = vrot.slane %v2934, 4
        %v2937 = vrot.slane %v2798, 5
        %v2938 = vsel %vm1295, %v2936, %v2937
        %v2939 = vrot.slane %v2799, 5
        %v2940 = vrot.slane %v2939, 4
        %v2941 = vrot.slane %v2800, 5
        %v2942 = vsel %vm1295, %v2940, %v2941
        %v2943 = vrot.slane %v2941, 4
        %v2944 = vrot.slane %v2801, 5
        %v2945 = vsel %vm1295, %v2943, %v2944
        %v2946 = vrot.slane %v2802, 5
        %v2947 = vrot.slane %v2946, 4
        %v2948 = vrot.slane %v2803, 5
        %v2949 = vsel %vm1295, %v2947, %v2948
        %v2950 = vrot.slane %v2948, 4
        %v2951 = vrot.slane %v2804, 5
        %v2952 = vsel %vm1295, %v2950, %v2951
        %v2953 = vrot.slane %v2805, 5
        %v2954 = vrot.slane %v2953, 4
        %v2955 = vrot.slane %v2806, 5
        %v2956 = vsel %vm1295, %v2954, %v2955
        %v2957 = vrot.slane %v2955, 4
        %v2958 = vrot.slane %v2807, 5
        %v2959 = vsel %vm1295, %v2957, %v2958
        %v2960 = vrot.slane %v2808, 5
        %v2961 = vrot.slane %v2960, 4
        %v2962 = vrot.slane %v2809, 5
        %v2963 = vsel %vm1295, %v2961, %v2962
        %v2964 = vrot.slane %v2962, 4
        %v2965 = vrot.slane %v2810, 5
        %v2966 = vsel %vm1295, %v2964, %v2965
        %v2967 = vrot.slane %v2811, 5
        %v2968 = vrot.slane %v2967, 4
        %v2969 = vrot.slane %v2812, 5
        %v2970 = vsel %vm1295, %v2968, %v2969
        %v2971 = vrot.slane %v2969, 4
        %v2972 = vrot.slane %v2813, 5
        %v2973 = vsel %vm1295, %v2971, %v2972
        %s2974 = scalar_lea.vmem %s1, 10
        %v2975 = vld [vmem:[%s2974] sm:$0x3]
        %v2976 = vunpack.c.l.b16 %v2865
        %v2977 = vunpack.c.l.b16 %v2868
        %v2978 = vunpack.c.l.b16 %v2872
        %v2979 = vunpack.c.l.b16 %v2875
        %v2980 = vunpack.c.l.b16 %v2879
        %v2981 = vunpack.c.l.b16 %v2882
        %v2982 = vunpack.c.l.b16 %v2886
        %v2983 = vunpack.c.l.b16 %v2889
        %v2984 = vunpack.c.l.b16 %v2893
        %v2985 = vunpack.c.l.b16 %v2896
        %v2986 = vunpack.c.l.b16 %v2900
        %v2987 = vunpack.c.l.b16 %v2903
        %v2988 = vunpack.c.l.b16 %v2907
        %v2989 = vunpack.c.l.b16 %v2910
        %v2990 = vunpack.c.l.b16 %v2914
        %v2991 = vunpack.c.l.b16 %v2917
        %v2992 = vunpack.c.l.b16 %v2921
        %v2993 = vunpack.c.l.b16 %v2924
        %v2994 = vunpack.c.l.b16 %v2928
        %v2995 = vunpack.c.l.b16 %v2931
        %v2996 = vunpack.c.l.b16 %v2935
        %v2997 = vunpack.c.l.b16 %v2938
        %v2998 = vunpack.c.l.b16 %v2942
        %v2999 = vunpack.c.l.b16 %v2945
        %v3000 = vunpack.c.l.b16 %v2949
        %v3001 = vunpack.c.l.b16 %v2952
        %v3002 = vunpack.c.l.b16 %v2956
        %v3003 = vunpack.c.l.b16 %v2959
        %v3004 = vunpack.c.l.b16 %v2963
        %v3005 = vunpack.c.l.b16 %v2966
        %v3006 = vunpack.c.l.b16 %v2970
        %v3007 = vunpack.c.l.b16 %v2973
        %v3008 = vpack.c.b16 %v2977, %v2976
        %v3009 = vpack.c.b16 %v2979, %v2978
        %v3010 = vpack.c.b16 %v2981, %v2980
        %v3011 = vpack.c.b16 %v2983, %v2982
        %v3012 = vpack.c.b16 %v2985, %v2984
        %v3013 = vpack.c.b16 %v2987, %v2986
        %v3014 = vpack.c.b16 %v2989, %v2988
        %v3015 = vpack.c.b16 %v2991, %v2990
        %v3016 = vpack.c.b16 %v2993, %v2992
        %v3017 = vpack.c.b16 %v2995, %v2994
        %v3018 = vpack.c.b16 %v2997, %v2996
        %v3019 = vpack.c.b16 %v2999, %v2998
        %v3020 = vpack.c.b16 %v3001, %v3000
        %v3021 = vpack.c.b16 %v3003, %v3002
        %v3022 = vpack.c.b16 %v3005, %v3004
        %v3023 = vpack.c.b16 %v3007, %v3006
        %v3025 = vsel %vm302, %v3008, 0
        %v3028 = vsel %vm302, %v3009, 0
        %v3031 = vsel %vm302, %v3010, 0
        %v3034 = vsel %vm302, %v3011, 0
        %v3037 = vsel %vm302, %v3012, 0
        %v3040 = vsel %vm302, %v3013, 0
        %v3043 = vsel %vm302, %v3014, 0
        %v3046 = vsel %vm302, %v3015, 0
        %v3049 = vsel %vm302, %v3016, 0
        %v3052 = vsel %vm302, %v3017, 0
        %v3055 = vsel %vm302, %v3018, 0
        %v3058 = vsel %vm302, %v3019, 0
        %v3061 = vsel %vm302, %v3020, 0
        %v3064 = vsel %vm302, %v3021, 0
        %v3067 = vsel %vm302, %v3022, 0
        %v3070 = vsel %vm302, %v3023, 0
        %v3073 = vsel %vm351, %v2975, 0
        %3075 = vmatpush.bf16.msra.mxu0 0
        %3076 = vmatpush.bf16.msra.mxu0 0
        %3077 = vmatpush.bf16.msra.mxu0 0
        %3078 = vmatpush.bf16.msra.mxu0 0
        %3079 = vmatpush.bf16.msra.mxu0 0
        %3080 = vmatpush.bf16.msra.mxu0 0
        %3081 = vmatpush.bf16.msra.mxu0 0
        %3082 = vmatpush.bf16.msra.mxu0 %v3073
        %3083 = vmatmul.bf16.gmra.mxu0 %v3025
        %v3084 = vpop.f32.mrf.mxu0
        %v3085 = vadd.f32 0.0, %v3084
        %v3086 = vpop.f32.mrf.mxu0
        %v3087 = vadd.f32 0.0, %v3086
        %3088 = vmatmul.bf16.gmra.mxu0 %v3028
        %v3089 = vpop.f32.mrf.mxu0
        %v3090 = vadd.f32 0.0, %v3089
        %v3091 = vpop.f32.mrf.mxu0
        %v3092 = vadd.f32 0.0, %v3091
        %3093 = vmatmul.bf16.gmra.mxu0 %v3031
        %v3094 = vpop.f32.mrf.mxu0
        %v3095 = vadd.f32 0.0, %v3094
        %v3096 = vpop.f32.mrf.mxu0
        %v3097 = vadd.f32 0.0, %v3096
        %3098 = vmatmul.bf16.gmra.mxu0 %v3034
        %v3099 = vpop.f32.mrf.mxu0
        %v3100 = vadd.f32 0.0, %v3099
        %v3101 = vpop.f32.mrf.mxu0
        %v3102 = vadd.f32 0.0, %v3101
        %3103 = vmatmul.bf16.gmra.mxu0 %v3037
        %v3104 = vpop.f32.mrf.mxu0
        %v3105 = vadd.f32 0.0, %v3104
        %v3106 = vpop.f32.mrf.mxu0
        %v3107 = vadd.f32 0.0, %v3106
        %3108 = vmatmul.bf16.gmra.mxu0 %v3040
        %v3109 = vpop.f32.mrf.mxu0
        %v3110 = vadd.f32 0.0, %v3109
        %v3111 = vpop.f32.mrf.mxu0
        %v3112 = vadd.f32 0.0, %v3111
        %3113 = vmatmul.bf16.gmra.mxu0 %v3043
        %v3114 = vpop.f32.mrf.mxu0
        %v3115 = vadd.f32 0.0, %v3114
        %v3116 = vpop.f32.mrf.mxu0
        %v3117 = vadd.f32 0.0, %v3116
        %3118 = vmatmul.bf16.gmra.mxu0 %v3046
        %v3119 = vpop.f32.mrf.mxu0
        %v3120 = vadd.f32 0.0, %v3119
        %v3121 = vpop.f32.mrf.mxu0
        %v3122 = vadd.f32 0.0, %v3121
        %3123 = vmatmul.bf16.gmra.mxu0 %v3049
        %v3124 = vpop.f32.mrf.mxu0
        %v3125 = vadd.f32 0.0, %v3124
        %v3126 = vpop.f32.mrf.mxu0
        %v3127 = vadd.f32 0.0, %v3126
        %3128 = vmatmul.bf16.gmra.mxu0 %v3052
        %v3129 = vpop.f32.mrf.mxu0
        %v3130 = vadd.f32 0.0, %v3129
        %v3131 = vpop.f32.mrf.mxu0
        %v3132 = vadd.f32 0.0, %v3131
        %3133 = vmatmul.bf16.gmra.mxu0 %v3055
        %v3134 = vpop.f32.mrf.mxu0
        %v3135 = vadd.f32 0.0, %v3134
        %v3136 = vpop.f32.mrf.mxu0
        %v3137 = vadd.f32 0.0, %v3136
        %3138 = vmatmul.bf16.gmra.mxu0 %v3058
        %v3139 = vpop.f32.mrf.mxu0
        %v3140 = vadd.f32 0.0, %v3139
        %v3141 = vpop.f32.mrf.mxu0
        %v3142 = vadd.f32 0.0, %v3141
        %3143 = vmatmul.bf16.gmra.mxu0 %v3061
        %v3144 = vpop.f32.mrf.mxu0
        %v3145 = vadd.f32 0.0, %v3144
        %v3146 = vpop.f32.mrf.mxu0
        %v3147 = vadd.f32 0.0, %v3146
        %3148 = vmatmul.bf16.gmra.mxu0 %v3064
        %v3149 = vpop.f32.mrf.mxu0
        %v3150 = vadd.f32 0.0, %v3149
        %v3151 = vpop.f32.mrf.mxu0
        %v3152 = vadd.f32 0.0, %v3151
        %3153 = vmatmul.bf16.gmra.mxu0 %v3067
        %v3154 = vpop.f32.mrf.mxu0
        %v3155 = vadd.f32 0.0, %v3154
        %v3156 = vpop.f32.mrf.mxu0
        %v3157 = vadd.f32 0.0, %v3156
        %3158 = vmatmul.bf16.gmra.mxu0 %v3070
        %v3159 = vpop.f32.mrf.mxu0
        %v3160 = vadd.f32 0.0, %v3159
        %v3161 = vpop.f32.mrf.mxu0
        %v3162 = vadd.f32 0.0, %v3161
        %3163 = vdwg.mxu0
        %v3164 = vld [vmem:[#allocation2] sm:$0xff]
        %v3165 = vld [vmem:[#allocation2 + $0x8] sm:$0xff]
        %v3166 = vld [vmem:[#allocation2 + $0x10] sm:$0xff]
        %v3167 = vld [vmem:[#allocation2 + $0x18] sm:$0xff]
        %v3168 = vld [vmem:[#allocation2 + $0x20] sm:$0xff]
        %v3169 = vld [vmem:[#allocation2 + $0x28] sm:$0xff]
        %v3170 = vld [vmem:[#allocation2 + $0x30] sm:$0xff]
        %v3171 = vld [vmem:[#allocation2 + $0x38] sm:$0xff]
        %v3172 = vld [vmem:[#allocation2 + $0x40] sm:$0xff]
        %v3173 = vld [vmem:[#allocation2 + $0x48] sm:$0xff]
        %v3174 = vld [vmem:[#allocation2 + $0x50] sm:$0xff]
        %v3175 = vld [vmem:[#allocation2 + $0x58] sm:$0xff]
        %v3176 = vld [vmem:[#allocation2 + $0x60] sm:$0xff]
        %v3177 = vld [vmem:[#allocation2 + $0x68] sm:$0xff]
        %v3178 = vld [vmem:[#allocation2 + $0x70] sm:$0xff]
        %v3179 = vld [vmem:[#allocation2 + $0x78] sm:$0xff]
        %v3180 = vld [vmem:[#allocation2 + $0x80] sm:$0xff]
        %v3181 = vld [vmem:[#allocation2 + $0x88] sm:$0xff]
        %v3182 = vld [vmem:[#allocation2 + $0x90] sm:$0xff]
        %v3183 = vld [vmem:[#allocation2 + $0x98] sm:$0xff]
        %v3184 = vld [vmem:[#allocation2 + $0xa0] sm:$0xff]
        %v3185 = vld [vmem:[#allocation2 + $0xa8] sm:$0xff]
        %v3186 = vld [vmem:[#allocation2 + $0xb0] sm:$0xff]
        %v3187 = vld [vmem:[#allocation2 + $0xb8] sm:$0xff]
        %v3188 = vld [vmem:[#allocation2 + $0xc0] sm:$0xff]
        %v3189 = vld [vmem:[#allocation2 + $0xc8] sm:$0xff]
        %v3190 = vld [vmem:[#allocation2 + $0xd0] sm:$0xff]
        %v3191 = vld [vmem:[#allocation2 + $0xd8] sm:$0xff]
        %v3192 = vld [vmem:[#allocation2 + $0xe0] sm:$0xff]
        %v3193 = vld [vmem:[#allocation2 + $0xe8] sm:$0xff]
        %v3194 = vld [vmem:[#allocation2 + $0xf0] sm:$0xff]
        %v3195 = vld [vmem:[#allocation2 + $0xf8] sm:$0xff]
        %v3196 = vadd.f32 %v3164, %v3085
        %v3197 = vadd.f32 %v3165, %v3087
        %v3198 = vadd.f32 %v3166, %v3090
        %v3199 = vadd.f32 %v3167, %v3092
        %v3200 = vadd.f32 %v3168, %v3095
        %v3201 = vadd.f32 %v3169, %v3097
        %v3202 = vadd.f32 %v3170, %v3100
        %v3203 = vadd.f32 %v3171, %v3102
        %v3204 = vadd.f32 %v3172, %v3105
        %v3205 = vadd.f32 %v3173, %v3107
        %v3206 = vadd.f32 %v3174, %v3110
        %v3207 = vadd.f32 %v3175, %v3112
        %v3208 = vadd.f32 %v3176, %v3115
        %v3209 = vadd.f32 %v3177, %v3117
        %v3210 = vadd.f32 %v3178, %v3120
        %v3211 = vadd.f32 %v3179, %v3122
        %v3212 = vadd.f32 %v3180, %v3125
        %v3213 = vadd.f32 %v3181, %v3127
        %v3214 = vadd.f32 %v3182, %v3130
        %v3215 = vadd.f32 %v3183, %v3132
        %v3216 = vadd.f32 %v3184, %v3135
        %v3217 = vadd.f32 %v3185, %v3137
        %v3218 = vadd.f32 %v3186, %v3140
        %v3219 = vadd.f32 %v3187, %v3142
        %v3220 = vadd.f32 %v3188, %v3145
        %v3221 = vadd.f32 %v3189, %v3147
        %v3222 = vadd.f32 %v3190, %v3150
        %v3223 = vadd.f32 %v3191, %v3152
        %v3224 = vadd.f32 %v3192, %v3155
        %v3225 = vadd.f32 %v3193, %v3157
        %v3226 = vadd.f32 %v3194, %v3160
        %v3227 = vadd.f32 %v3195, %v3162
        %3228 = vst [vmem:[#allocation2] sm:$0xff] %v3196
        %3229 = vst [vmem:[#allocation2 + $0x8] sm:$0xff] %v3197
        %3230 = vst [vmem:[#allocation2 + $0x10] sm:$0xff] %v3198
        %3231 = vst [vmem:[#allocation2 + $0x18] sm:$0xff] %v3199
        %3232 = vst [vmem:[#allocation2 + $0x20] sm:$0xff] %v3200
        %3233 = vst [vmem:[#allocation2 + $0x28] sm:$0xff] %v3201
        %3234 = vst [vmem:[#allocation2 + $0x30] sm:$0xff] %v3202
        %3235 = vst [vmem:[#allocation2 + $0x38] sm:$0xff] %v3203
        %3236 = vst [vmem:[#allocation2 + $0x40] sm:$0xff] %v3204
        %3237 = vst [vmem:[#allocation2 + $0x48] sm:$0xff] %v3205
        %3238 = vst [vmem:[#allocation2 + $0x50] sm:$0xff] %v3206
        %3239 = vst [vmem:[#allocation2 + $0x58] sm:$0xff] %v3207
        %3240 = vst [vmem:[#allocation2 + $0x60] sm:$0xff] %v3208
        %3241 = vst [vmem:[#allocation2 + $0x68] sm:$0xff] %v3209
        %3242 = vst [vmem:[#allocation2 + $0x70] sm:$0xff] %v3210
        %3243 = vst [vmem:[#allocation2 + $0x78] sm:$0xff] %v3211
        %3244 = vst [vmem:[#allocation2 + $0x80] sm:$0xff] %v3212
        %3245 = vst [vmem:[#allocation2 + $0x88] sm:$0xff] %v3213
        %3246 = vst [vmem:[#allocation2 + $0x90] sm:$0xff] %v3214
        %3247 = vst [vmem:[#allocation2 + $0x98] sm:$0xff] %v3215
        %3248 = vst [vmem:[#allocation2 + $0xa0] sm:$0xff] %v3216
        %3249 = vst [vmem:[#allocation2 + $0xa8] sm:$0xff] %v3217
        %3250 = vst [vmem:[#allocation2 + $0xb0] sm:$0xff] %v3218
        %3251 = vst [vmem:[#allocation2 + $0xb8] sm:$0xff] %v3219
        %3252 = vst [vmem:[#allocation2 + $0xc0] sm:$0xff] %v3220
        %3253 = vst [vmem:[#allocation2 + $0xc8] sm:$0xff] %v3221
        %3254 = vst [vmem:[#allocation2 + $0xd0] sm:$0xff] %v3222
        %3255 = vst [vmem:[#allocation2 + $0xd8] sm:$0xff] %v3223
        %3256 = vst [vmem:[#allocation2 + $0xe0] sm:$0xff] %v3224
        %3257 = vst [vmem:[#allocation2 + $0xe8] sm:$0xff] %v3225
        %3258 = vst [vmem:[#allocation2 + $0xf0] sm:$0xff] %v3226
        %3259 = vst [vmem:[#allocation2 + $0xf8] sm:$0xff] %v3227
        %s3260 = sadd.s32 %s185, 2
        %s3261 = smul.u32 %s3260, 3
        %s3262 = smul.addr %s3261, 4
        %s3263 = scalar_lea.vmem %s182, %s3262
        %v3264 = vld [vmem:[%s3263] sm:$0xf]
        %v3265 = vld [vmem:[%s3263 + $0x4] sm:$0xf]
        %v3266 = vld [vmem:[%s3263 + $0xc] sm:$0xf]
        %v3267 = vld [vmem:[%s3263 + $0x10] sm:$0xf]
        %v3268 = vld [vmem:[%s3263 + $0x18] sm:$0xf]
        %v3269 = vld [vmem:[%s3263 + $0x1c] sm:$0xf]
        %v3270 = vld [vmem:[%s3263 + $0x24] sm:$0xf]
        %v3271 = vld [vmem:[%s3263 + $0x28] sm:$0xf]
        %v3272 = vld [vmem:[%s3263 + $0x30] sm:$0xf]
        %v3273 = vld [vmem:[%s3263 + $0x34] sm:$0xf]
        %v3274 = vld [vmem:[%s3263 + $0x3c] sm:$0xf]
        %v3275 = vld [vmem:[%s3263 + $0x40] sm:$0xf]
        %v3276 = vld [vmem:[%s3263 + $0x48] sm:$0xf]
        %v3277 = vld [vmem:[%s3263 + $0x4c] sm:$0xf]
        %v3278 = vld [vmem:[%s3263 + $0x54] sm:$0xf]
        %v3279 = vld [vmem:[%s3263 + $0x58] sm:$0xf]
        %v3280 = vld [vmem:[%s3263 + $0x60] sm:$0xf]
        %v3281 = vld [vmem:[%s3263 + $0x64] sm:$0xf]
        %v3282 = vld [vmem:[%s3263 + $0x6c] sm:$0xf]
        %v3283 = vld [vmem:[%s3263 + $0x70] sm:$0xf]
        %v3284 = vld [vmem:[%s3263 + $0x78] sm:$0xf]
        %v3285 = vld [vmem:[%s3263 + $0x7c] sm:$0xf]
        %v3286 = vld [vmem:[%s3263 + $0x84] sm:$0xf]
        %v3287 = vld [vmem:[%s3263 + $0x88] sm:$0xf]
        %v3288 = vld [vmem:[%s3263 + $0x90] sm:$0xf]
        %v3289 = vld [vmem:[%s3263 + $0x94] sm:$0xf]
        %v3290 = vld [vmem:[%s3263 + $0x9c] sm:$0xf]
        %v3291 = vld [vmem:[%s3263 + $0xa0] sm:$0xf]
        %v3292 = vld [vmem:[%s3263 + $0xa8] sm:$0xf]
        %v3293 = vld [vmem:[%s3263 + $0xac] sm:$0xf]
        %v3294 = vld [vmem:[%s3263 + $0xb4] sm:$0xf]
        %v3295 = vld [vmem:[%s3263 + $0xb8] sm:$0xf]
        %s3296 = scalar_lea.vmem %s1, 12
        %v3297 = vld [vmem:[%s3296] sm:$0x3]
        %v3330 = vunpack.c.l.b16 %v3264
        %v3331 = vunpack.c.l.b16 %v3265
        %v3332 = vunpack.c.l.b16 %v3266
        %v3333 = vunpack.c.l.b16 %v3267
        %v3334 = vunpack.c.l.b16 %v3268
        %v3335 = vunpack.c.l.b16 %v3269
        %v3336 = vunpack.c.l.b16 %v3270
        %v3337 = vunpack.c.l.b16 %v3271
        %v3338 = vunpack.c.l.b16 %v3272
        %v3339 = vunpack.c.l.b16 %v3273
        %v3340 = vunpack.c.l.b16 %v3274
        %v3341 = vunpack.c.l.b16 %v3275
        %v3342 = vunpack.c.l.b16 %v3276
        %v3343 = vunpack.c.l.b16 %v3277
        %v3344 = vunpack.c.l.b16 %v3278
        %v3345 = vunpack.c.l.b16 %v3279
        %v3346 = vunpack.c.l.b16 %v3280
        %v3347 = vunpack.c.l.b16 %v3281
        %v3348 = vunpack.c.l.b16 %v3282
        %v3349 = vunpack.c.l.b16 %v3283
        %v3350 = vunpack.c.l.b16 %v3284
        %v3351 = vunpack.c.l.b16 %v3285
        %v3352 = vunpack.c.l.b16 %v3286
        %v3353 = vunpack.c.l.b16 %v3287
        %v3354 = vunpack.c.l.b16 %v3288
        %v3355 = vunpack.c.l.b16 %v3289
        %v3356 = vunpack.c.l.b16 %v3290
        %v3357 = vunpack.c.l.b16 %v3291
        %v3358 = vunpack.c.l.b16 %v3292
        %v3359 = vunpack.c.l.b16 %v3293
        %v3360 = vunpack.c.l.b16 %v3294
        %v3361 = vunpack.c.l.b16 %v3295
        %v3362 = vpack.c.b16 %v3331, %v3330
        %v3363 = vpack.c.b16 %v3333, %v3332
        %v3364 = vpack.c.b16 %v3335, %v3334
        %v3365 = vpack.c.b16 %v3337, %v3336
        %v3366 = vpack.c.b16 %v3339, %v3338
        %v3367 = vpack.c.b16 %v3341, %v3340
        %v3368 = vpack.c.b16 %v3343, %v3342
        %v3369 = vpack.c.b16 %v3345, %v3344
        %v3370 = vpack.c.b16 %v3347, %v3346
        %v3371 = vpack.c.b16 %v3349, %v3348
        %v3372 = vpack.c.b16 %v3351, %v3350
        %v3373 = vpack.c.b16 %v3353, %v3352
        %v3374 = vpack.c.b16 %v3355, %v3354
        %v3375 = vpack.c.b16 %v3357, %v3356
        %v3376 = vpack.c.b16 %v3359, %v3358
        %v3377 = vpack.c.b16 %v3361, %v3360
        %v3379 = vsel %vm302, %v3362, 0
        %v3382 = vsel %vm302, %v3363, 0
        %v3385 = vsel %vm302, %v3364, 0
        %v3388 = vsel %vm302, %v3365, 0
        %v3391 = vsel %vm302, %v3366, 0
        %v3394 = vsel %vm302, %v3367, 0
        %v3397 = vsel %vm302, %v3368, 0
        %v3400 = vsel %vm302, %v3369, 0
        %v3403 = vsel %vm302, %v3370, 0
        %v3406 = vsel %vm302, %v3371, 0
        %v3409 = vsel %vm302, %v3372, 0
        %v3412 = vsel %vm302, %v3373, 0
        %v3415 = vsel %vm302, %v3374, 0
        %v3418 = vsel %vm302, %v3375, 0
        %v3421 = vsel %vm302, %v3376, 0
        %v3424 = vsel %vm302, %v3377, 0
        %v3427 = vsel %vm351, %v3297, 0
        %3429 = vmatpush.bf16.msra.mxu0 0
        %3430 = vmatpush.bf16.msra.mxu0 0
        %3431 = vmatpush.bf16.msra.mxu0 0
        %3432 = vmatpush.bf16.msra.mxu0 0
        %3433 = vmatpush.bf16.msra.mxu0 0
        %3434 = vmatpush.bf16.msra.mxu0 0
        %3435 = vmatpush.bf16.msra.mxu0 0
        %3436 = vmatpush.bf16.msra.mxu0 %v3427
        %3437 = vmatmul.bf16.gmra.mxu0 %v3379
        %v3438 = vpop.f32.mrf.mxu0
        %v3439 = vadd.f32 0.0, %v3438
        %v3440 = vpop.f32.mrf.mxu0
        %v3441 = vadd.f32 0.0, %v3440
        %3442 = vmatmul.bf16.gmra.mxu0 %v3382
        %v3443 = vpop.f32.mrf.mxu0
        %v3444 = vadd.f32 0.0, %v3443
        %v3445 = vpop.f32.mrf.mxu0
        %v3446 = vadd.f32 0.0, %v3445
        %3447 = vmatmul.bf16.gmra.mxu0 %v3385
        %v3448 = vpop.f32.mrf.mxu0
        %v3449 = vadd.f32 0.0, %v3448
        %v3450 = vpop.f32.mrf.mxu0
        %v3451 = vadd.f32 0.0, %v3450
        %3452 = vmatmul.bf16.gmra.mxu0 %v3388
        %v3453 = vpop.f32.mrf.mxu0
        %v3454 = vadd.f32 0.0, %v3453
        %v3455 = vpop.f32.mrf.mxu0
        %v3456 = vadd.f32 0.0, %v3455
        %3457 = vmatmul.bf16.gmra.mxu0 %v3391
        %v3458 = vpop.f32.mrf.mxu0
        %v3459 = vadd.f32 0.0, %v3458
        %v3460 = vpop.f32.mrf.mxu0
        %v3461 = vadd.f32 0.0, %v3460
        %3462 = vmatmul.bf16.gmra.mxu0 %v3394
        %v3463 = vpop.f32.mrf.mxu0
        %v3464 = vadd.f32 0.0, %v3463
        %v3465 = vpop.f32.mrf.mxu0
        %v3466 = vadd.f32 0.0, %v3465
        %3467 = vmatmul.bf16.gmra.mxu0 %v3397
        %v3468 = vpop.f32.mrf.mxu0
        %v3469 = vadd.f32 0.0, %v3468
        %v3470 = vpop.f32.mrf.mxu0
        %v3471 = vadd.f32 0.0, %v3470
        %3472 = vmatmul.bf16.gmra.mxu0 %v3400
        %v3473 = vpop.f32.mrf.mxu0
        %v3474 = vadd.f32 0.0, %v3473
        %v3475 = vpop.f32.mrf.mxu0
        %v3476 = vadd.f32 0.0, %v3475
        %3477 = vmatmul.bf16.gmra.mxu0 %v3403
        %v3478 = vpop.f32.mrf.mxu0
        %v3479 = vadd.f32 0.0, %v3478
        %v3480 = vpop.f32.mrf.mxu0
        %v3481 = vadd.f32 0.0, %v3480
        %3482 = vmatmul.bf16.gmra.mxu0 %v3406
        %v3483 = vpop.f32.mrf.mxu0
        %v3484 = vadd.f32 0.0, %v3483
        %v3485 = vpop.f32.mrf.mxu0
        %v3486 = vadd.f32 0.0, %v3485
        %3487 = vmatmul.bf16.gmra.mxu0 %v3409
        %v3488 = vpop.f32.mrf.mxu0
        %v3489 = vadd.f32 0.0, %v3488
        %v3490 = vpop.f32.mrf.mxu0
        %v3491 = vadd.f32 0.0, %v3490
        %3492 = vmatmul.bf16.gmra.mxu0 %v3412
        %v3493 = vpop.f32.mrf.mxu0
        %v3494 = vadd.f32 0.0, %v3493
        %v3495 = vpop.f32.mrf.mxu0
        %v3496 = vadd.f32 0.0, %v3495
        %3497 = vmatmul.bf16.gmra.mxu0 %v3415
        %v3498 = vpop.f32.mrf.mxu0
        %v3499 = vadd.f32 0.0, %v3498
        %v3500 = vpop.f32.mrf.mxu0
        %v3501 = vadd.f32 0.0, %v3500
        %3502 = vmatmul.bf16.gmra.mxu0 %v3418
        %v3503 = vpop.f32.mrf.mxu0
        %v3504 = vadd.f32 0.0, %v3503
        %v3505 = vpop.f32.mrf.mxu0
        %v3506 = vadd.f32 0.0, %v3505
        %3507 = vmatmul.bf16.gmra.mxu0 %v3421
        %v3508 = vpop.f32.mrf.mxu0
        %v3509 = vadd.f32 0.0, %v3508
        %v3510 = vpop.f32.mrf.mxu0
        %v3511 = vadd.f32 0.0, %v3510
        %3512 = vmatmul.bf16.gmra.mxu0 %v3424
        %v3513 = vpop.f32.mrf.mxu0
        %v3514 = vadd.f32 0.0, %v3513
        %v3515 = vpop.f32.mrf.mxu0
        %v3516 = vadd.f32 0.0, %v3515
        %3517 = vdwg.mxu0
        %v3518 = vld [vmem:[#allocation2] sm:$0xff]
        %v3519 = vld [vmem:[#allocation2 + $0x8] sm:$0xff]
        %v3520 = vld [vmem:[#allocation2 + $0x10] sm:$0xff]
        %v3521 = vld [vmem:[#allocation2 + $0x18] sm:$0xff]
        %v3522 = vld [vmem:[#allocation2 + $0x20] sm:$0xff]
        %v3523 = vld [vmem:[#allocation2 + $0x28] sm:$0xff]
        %v3524 = vld [vmem:[#allocation2 + $0x30] sm:$0xff]
        %v3525 = vld [vmem:[#allocation2 + $0x38] sm:$0xff]
        %v3526 = vld [vmem:[#allocation2 + $0x40] sm:$0xff]
        %v3527 = vld [vmem:[#allocation2 + $0x48] sm:$0xff]
        %v3528 = vld [vmem:[#allocation2 + $0x50] sm:$0xff]
        %v3529 = vld [vmem:[#allocation2 + $0x58] sm:$0xff]
        %v3530 = vld [vmem:[#allocation2 + $0x60] sm:$0xff]
        %v3531 = vld [vmem:[#allocation2 + $0x68] sm:$0xff]
        %v3532 = vld [vmem:[#allocation2 + $0x70] sm:$0xff]
        %v3533 = vld [vmem:[#allocation2 + $0x78] sm:$0xff]
        %v3534 = vld [vmem:[#allocation2 + $0x80] sm:$0xff]
        %v3535 = vld [vmem:[#allocation2 + $0x88] sm:$0xff]
        %v3536 = vld [vmem:[#allocation2 + $0x90] sm:$0xff]
        %v3537 = vld [vmem:[#allocation2 + $0x98] sm:$0xff]
        %v3538 = vld [vmem:[#allocation2 + $0xa0] sm:$0xff]
        %v3539 = vld [vmem:[#allocation2 + $0xa8] sm:$0xff]
        %v3540 = vld [vmem:[#allocation2 + $0xb0] sm:$0xff]
        %v3541 = vld [vmem:[#allocation2 + $0xb8] sm:$0xff]
        %v3542 = vld [vmem:[#allocation2 + $0xc0] sm:$0xff]
        %v3543 = vld [vmem:[#allocation2 + $0xc8] sm:$0xff]
        %v3544 = vld [vmem:[#allocation2 + $0xd0] sm:$0xff]
        %v3545 = vld [vmem:[#allocation2 + $0xd8] sm:$0xff]
        %v3546 = vld [vmem:[#allocation2 + $0xe0] sm:$0xff]
        %v3547 = vld [vmem:[#allocation2 + $0xe8] sm:$0xff]
        %v3548 = vld [vmem:[#allocation2 + $0xf0] sm:$0xff]
        %v3549 = vld [vmem:[#allocation2 + $0xf8] sm:$0xff]
        %v3550 = vadd.f32 %v3518, %v3439
        %v3551 = vadd.f32 %v3519, %v3441
        %v3552 = vadd.f32 %v3520, %v3444
        %v3553 = vadd.f32 %v3521, %v3446
        %v3554 = vadd.f32 %v3522, %v3449
        %v3555 = vadd.f32 %v3523, %v3451
        %v3556 = vadd.f32 %v3524, %v3454
        %v3557 = vadd.f32 %v3525, %v3456
        %v3558 = vadd.f32 %v3526, %v3459
        %v3559 = vadd.f32 %v3527, %v3461
        %v3560 = vadd.f32 %v3528, %v3464
        %v3561 = vadd.f32 %v3529, %v3466
        %v3562 = vadd.f32 %v3530, %v3469
        %v3563 = vadd.f32 %v3531, %v3471
        %v3564 = vadd.f32 %v3532, %v3474
        %v3565 = vadd.f32 %v3533, %v3476
        %v3566 = vadd.f32 %v3534, %v3479
        %v3567 = vadd.f32 %v3535, %v3481
        %v3568 = vadd.f32 %v3536, %v3484
        %v3569 = vadd.f32 %v3537, %v3486
        %v3570 = vadd.f32 %v3538, %v3489
        %v3571 = vadd.f32 %v3539, %v3491
        %v3572 = vadd.f32 %v3540, %v3494
        %v3573 = vadd.f32 %v3541, %v3496
        %v3574 = vadd.f32 %v3542, %v3499
        %v3575 = vadd.f32 %v3543, %v3501
        %v3576 = vadd.f32 %v3544, %v3504
        %v3577 = vadd.f32 %v3545, %v3506
        %v3578 = vadd.f32 %v3546, %v3509
        %v3579 = vadd.f32 %v3547, %v3511
        %v3580 = vadd.f32 %v3548, %v3514
        %v3581 = vadd.f32 %v3549, %v3516
        %3582 = vst [vmem:[#allocation2] sm:$0xff] %v3550
        %3583 = vst [vmem:[#allocation2 + $0x8] sm:$0xff] %v3551
        %3584 = vst [vmem:[#allocation2 + $0x10] sm:$0xff] %v3552
        %3585 = vst [vmem:[#allocation2 + $0x18] sm:$0xff] %v3553
        %3586 = vst [vmem:[#allocation2 + $0x20] sm:$0xff] %v3554
        %3587 = vst [vmem:[#allocation2 + $0x28] sm:$0xff] %v3555
        %3588 = vst [vmem:[#allocation2 + $0x30] sm:$0xff] %v3556
        %3589 = vst [vmem:[#allocation2 + $0x38] sm:$0xff] %v3557
        %3590 = vst [vmem:[#allocation2 + $0x40] sm:$0xff] %v3558
        %3591 = vst [vmem:[#allocation2 + $0x48] sm:$0xff] %v3559
        %3592 = vst [vmem:[#allocation2 + $0x50] sm:$0xff] %v3560
        %3593 = vst [vmem:[#allocation2 + $0x58] sm:$0xff] %v3561
        %3594 = vst [vmem:[#allocation2 + $0x60] sm:$0xff] %v3562
        %3595 = vst [vmem:[#allocation2 + $0x68] sm:$0xff] %v3563
        %3596 = vst [vmem:[#allocation2 + $0x70] sm:$0xff] %v3564
        %3597 = vst [vmem:[#allocation2 + $0x78] sm:$0xff] %v3565
        %3598 = vst [vmem:[#allocation2 + $0x80] sm:$0xff] %v3566
        %3599 = vst [vmem:[#allocation2 + $0x88] sm:$0xff] %v3567
        %3600 = vst [vmem:[#allocation2 + $0x90] sm:$0xff] %v3568
        %3601 = vst [vmem:[#allocation2 + $0x98] sm:$0xff] %v3569
        %3602 = vst [vmem:[#allocation2 + $0xa0] sm:$0xff] %v3570
        %3603 = vst [vmem:[#allocation2 + $0xa8] sm:$0xff] %v3571
        %3604 = vst [vmem:[#allocation2 + $0xb0] sm:$0xff] %v3572
        %3605 = vst [vmem:[#allocation2 + $0xb8] sm:$0xff] %v3573
        %3606 = vst [vmem:[#allocation2 + $0xc0] sm:$0xff] %v3574
        %3607 = vst [vmem:[#allocation2 + $0xc8] sm:$0xff] %v3575
        %3608 = vst [vmem:[#allocation2 + $0xd0] sm:$0xff] %v3576
        %3609 = vst [vmem:[#allocation2 + $0xd8] sm:$0xff] %v3577
        %3610 = vst [vmem:[#allocation2 + $0xe0] sm:$0xff] %v3578
        %3611 = vst [vmem:[#allocation2 + $0xe8] sm:$0xff] %v3579
        %3612 = vst [vmem:[#allocation2 + $0xf0] sm:$0xff] %v3580
        %3613 = vst [vmem:[#allocation2 + $0xf8] sm:$0xff] %v3581
        %v3614 = vld [vmem:[%s3263] sm:$0xf]
        %v3615 = vld [vmem:[%s3263 + $0x4] sm:$0xf]
        %v3616 = vld [vmem:[%s3263 + $0x8] sm:$0x1]
        %v3617 = vld [vmem:[%s3263 + $0xc] sm:$0xf]
        %v3618 = vld [vmem:[%s3263 + $0x10] sm:$0xf]
        %v3619 = vld [vmem:[%s3263 + $0x14] sm:$0x1]
        %v3620 = vld [vmem:[%s3263 + $0x18] sm:$0xf]
        %v3621 = vld [vmem:[%s3263 + $0x1c] sm:$0xf]
        %v3622 = vld [vmem:[%s3263 + $0x20] sm:$0x1]
        %v3623 = vld [vmem:[%s3263 + $0x24] sm:$0xf]
        %v3624 = vld [vmem:[%s3263 + $0x28] sm:$0xf]
        %v3625 = vld [vmem:[%s3263 + $0x2c] sm:$0x1]
        %v3626 = vld [vmem:[%s3263 + $0x30] sm:$0xf]
        %v3627 = vld [vmem:[%s3263 + $0x34] sm:$0xf]
        %v3628 = vld [vmem:[%s3263 + $0x38] sm:$0x1]
        %v3629 = vld [vmem:[%s3263 + $0x3c] sm:$0xf]
        %v3630 = vld [vmem:[%s3263 + $0x40] sm:$0xf]
        %v3631 = vld [vmem:[%s3263 + $0x44] sm:$0x1]
        %v3632 = vld [vmem:[%s3263 + $0x48] sm:$0xf]
        %v3633 = vld [vmem:[%s3263 + $0x4c] sm:$0xf]
        %v3634 = vld [vmem:[%s3263 + $0x50] sm:$0x1]
        %v3635 = vld [vmem:[%s3263 + $0x54] sm:$0xf]
        %v3636 = vld [vmem:[%s3263 + $0x58] sm:$0xf]
        %v3637 = vld [vmem:[%s3263 + $0x5c] sm:$0x1]
        %v3638 = vld [vmem:[%s3263 + $0x60] sm:$0xf]
        %v3639 = vld [vmem:[%s3263 + $0x64] sm:$0xf]
        %v3640 = vld [vmem:[%s3263 + $0x68] sm:$0x1]
        %v3641 = vld [vmem:[%s3263 + $0x6c] sm:$0xf]
        %v3642 = vld [vmem:[%s3263 + $0x70] sm:$0xf]
        %v3643 = vld [vmem:[%s3263 + $0x74] sm:$0x1]
        %v3644 = vld [vmem:[%s3263 + $0x78] sm:$0xf]
        %v3645 = vld [vmem:[%s3263 + $0x7c] sm:$0xf]
        %v3646 = vld [vmem:[%s3263 + $0x80] sm:$0x1]
        %v3647 = vld [vmem:[%s3263 + $0x84] sm:$0xf]
        %v3648 = vld [vmem:[%s3263 + $0x88] sm:$0xf]
        %v3649 = vld [vmem:[%s3263 + $0x8c] sm:$0x1]
        %v3650 = vld [vmem:[%s3263 + $0x90] sm:$0xf]
        %v3651 = vld [vmem:[%s3263 + $0x94] sm:$0xf]
        %v3652 = vld [vmem:[%s3263 + $0x98] sm:$0x1]
        %v3653 = vld [vmem:[%s3263 + $0x9c] sm:$0xf]
        %v3654 = vld [vmem:[%s3263 + $0xa0] sm:$0xf]
        %v3655 = vld [vmem:[%s3263 + $0xa4] sm:$0x1]
        %v3656 = vld [vmem:[%s3263 + $0xa8] sm:$0xf]
        %v3657 = vld [vmem:[%s3263 + $0xac] sm:$0xf]
        %v3658 = vld [vmem:[%s3263 + $0xb0] sm:$0x1]
        %v3659 = vld [vmem:[%s3263 + $0xb4] sm:$0xf]
        %v3660 = vld [vmem:[%s3263 + $0xb8] sm:$0xf]
        %v3661 = vld [vmem:[%s3263 + $0xbc] sm:$0x1]
        %v3663 = vshrl.u32 %v3614, 16
        %v3665 = vrot.slane %v3663, 4
        %v3666 = vshll.u32 %v3614, 16
        %v3668 = vrot.slane %v3666, 5
        %v3669 = vor.u32 %v3665, %v3668
        %v3670 = vrot.slane %v3669, 4
        %v3672 = vshll.u32 %v3615, 16
        %v3674 = vrot.slane %v3672, 5
        %v3675 = vsel %vm526, %v3670, %v3674
        %v3676 = vshrl.u32 %v3615, 16
        %v3678 = vrot.slane %v3676, 4
        %v3679 = vor.u32 %v3678, %v3674
        %v3680 = vrot.slane %v3679, 4
        %v3682 = vshll.u32 %v3616, 16
        %v3684 = vrot.slane %v3682, 5
        %v3685 = vsel %vm526, %v3680, %v3684
        %v3687 = vshrl.u32 %v3617, 16
        %v3689 = vrot.slane %v3687, 4
        %v3690 = vshll.u32 %v3617, 16
        %v3692 = vrot.slane %v3690, 5
        %v3693 = vor.u32 %v3689, %v3692
        %v3694 = vrot.slane %v3693, 4
        %v3696 = vshll.u32 %v3618, 16
        %v3698 = vrot.slane %v3696, 5
        %v3699 = vsel %vm526, %v3694, %v3698
        %v3700 = vshrl.u32 %v3618, 16
        %v3702 = vrot.slane %v3700, 4
        %v3703 = vor.u32 %v3702, %v3698
        %v3704 = vrot.slane %v3703, 4
        %v3706 = vshll.u32 %v3619, 16
        %v3708 = vrot.slane %v3706, 5
        %v3709 = vsel %vm526, %v3704, %v3708
        %v3711 = vshrl.u32 %v3620, 16
        %v3713 = vrot.slane %v3711, 4
        %v3714 = vshll.u32 %v3620, 16
        %v3716 = vrot.slane %v3714, 5
        %v3717 = vor.u32 %v3713, %v3716
        %v3718 = vrot.slane %v3717, 4
        %v3720 = vshll.u32 %v3621, 16
        %v3722 = vrot.slane %v3720, 5
        %v3723 = vsel %vm526, %v3718, %v3722
        %v3724 = vshrl.u32 %v3621, 16
        %v3726 = vrot.slane %v3724, 4
        %v3727 = vor.u32 %v3726, %v3722
        %v3728 = vrot.slane %v3727, 4
        %v3730 = vshll.u32 %v3622, 16
        %v3732 = vrot.slane %v3730, 5
        %v3733 = vsel %vm526, %v3728, %v3732
        %v3735 = vshrl.u32 %v3623, 16
        %v3737 = vrot.slane %v3735, 4
        %v3738 = vshll.u32 %v3623, 16
        %v3740 = vrot.slane %v3738, 5
        %v3741 = vor.u32 %v3737, %v3740
        %v3742 = vrot.slane %v3741, 4
        %v3744 = vshll.u32 %v3624, 16
        %v3746 = vrot.slane %v3744, 5
        %v3747 = vsel %vm526, %v3742, %v3746
        %v3748 = vshrl.u32 %v3624, 16
        %v3750 = vrot.slane %v3748, 4
        %v3751 = vor.u32 %v3750, %v3746
        %v3752 = vrot.slane %v3751, 4
        %v3754 = vshll.u32 %v3625, 16
        %v3756 = vrot.slane %v3754, 5
        %v3757 = vsel %vm526, %v3752, %v3756
        %v3759 = vshrl.u32 %v3626, 16
        %v3761 = vrot.slane %v3759, 4
        %v3762 = vshll.u32 %v3626, 16
        %v3764 = vrot.slane %v3762, 5
        %v3765 = vor.u32 %v3761, %v3764
        %v3766 = vrot.slane %v3765, 4
        %v3768 = vshll.u32 %v3627, 16
        %v3770 = vrot.slane %v3768, 5
        %v3771 = vsel %vm526, %v3766, %v3770
        %v3772 = vshrl.u32 %v3627, 16
        %v3774 = vrot.slane %v3772, 4
        %v3775 = vor.u32 %v3774, %v3770
        %v3776 = vrot.slane %v3775, 4
        %v3778 = vshll.u32 %v3628, 16
        %v3780 = vrot.slane %v3778, 5
        %v3781 = vsel %vm526, %v3776, %v3780
        %v3783 = vshrl.u32 %v3629, 16
        %v3785 = vrot.slane %v3783, 4
        %v3786 = vshll.u32 %v3629, 16
        %v3788 = vrot.slane %v3786, 5
        %v3789 = vor.u32 %v3785, %v3788
        %v3790 = vrot.slane %v3789, 4
        %v3792 = vshll.u32 %v3630, 16
        %v3794 = vrot.slane %v3792, 5
        %v3795 = vsel %vm526, %v3790, %v3794
        %v3796 = vshrl.u32 %v3630, 16
        %v3798 = vrot.slane %v3796, 4
        %v3799 = vor.u32 %v3798, %v3794
        %v3800 = vrot.slane %v3799, 4
        %v3802 = vshll.u32 %v3631, 16
        %v3804 = vrot.slane %v3802, 5
        %v3805 = vsel %vm526, %v3800, %v3804
        %v3807 = vshrl.u32 %v3632, 16
        %v3809 = vrot.slane %v3807, 4
        %v3810 = vshll.u32 %v3632, 16
        %v3812 = vrot.slane %v3810, 5
        %v3813 = vor.u32 %v3809, %v3812
        %v3814 = vrot.slane %v3813, 4
        %v3816 = vshll.u32 %v3633, 16
        %v3818 = vrot.slane %v3816, 5
        %v3819 = vsel %vm526, %v3814, %v3818
        %v3820 = vshrl.u32 %v3633, 16
        %v3822 = vrot.slane %v3820, 4
        %v3823 = vor.u32 %v3822, %v3818
        %v3824 = vrot.slane %v3823, 4
        %v3826 = vshll.u32 %v3634, 16
        %v3828 = vrot.slane %v3826, 5
        %v3829 = vsel %vm526, %v3824, %v3828
        %v3831 = vshrl.u32 %v3635, 16
        %v3833 = vrot.slane %v3831, 4
        %v3834 = vshll.u32 %v3635, 16
        %v3836 = vrot.slane %v3834, 5
        %v3837 = vor.u32 %v3833, %v3836
        %v3838 = vrot.slane %v3837, 4
        %v3840 = vshll.u32 %v3636, 16
        %v3842 = vrot.slane %v3840, 5
        %v3843 = vsel %vm526, %v3838, %v3842
        %v3844 = vshrl.u32 %v3636, 16
        %v3846 = vrot.slane %v3844, 4
        %v3847 = vor.u32 %v3846, %v3842
        %v3848 = vrot.slane %v3847, 4
        %v3850 = vshll.u32 %v3637, 16
        %v3852 = vrot.slane %v3850, 5
        %v3853 = vsel %vm526, %v3848, %v3852
        %v3855 = vshrl.u32 %v3638, 16
        %v3857 = vrot.slane %v3855, 4
        %v3858 = vshll.u32 %v3638, 16
        %v3860 = vrot.slane %v3858, 5
        %v3861 = vor.u32 %v3857, %v3860
        %v3862 = vrot.slane %v3861, 4
        %v3864 = vshll.u32 %v3639, 16
        %v3866 = vrot.slane %v3864, 5
        %v3867 = vsel %vm526, %v3862, %v3866
        %v3868 = vshrl.u32 %v3639, 16
        %v3870 = vrot.slane %v3868, 4
        %v3871 = vor.u32 %v3870, %v3866
        %v3872 = vrot.slane %v3871, 4
        %v3874 = vshll.u32 %v3640, 16
        %v3876 = vrot.slane %v3874, 5
        %v3877 = vsel %vm526, %v3872, %v3876
        %v3879 = vshrl.u32 %v3641, 16
        %v3881 = vrot.slane %v3879, 4
        %v3882 = vshll.u32 %v3641, 16
        %v3884 = vrot.slane %v3882, 5
        %v3885 = vor.u32 %v3881, %v3884
        %v3886 = vrot.slane %v3885, 4
        %v3888 = vshll.u32 %v3642, 16
        %v3890 = vrot.slane %v3888, 5
        %v3891 = vsel %vm526, %v3886, %v3890
        %v3892 = vshrl.u32 %v3642, 16
        %v3894 = vrot.slane %v3892, 4
        %v3895 = vor.u32 %v3894, %v3890
        %v3896 = vrot.slane %v3895, 4
        %v3898 = vshll.u32 %v3643, 16
        %v3900 = vrot.slane %v3898, 5
        %v3901 = vsel %vm526, %v3896, %v3900
        %v3903 = vshrl.u32 %v3644, 16
        %v3905 = vrot.slane %v3903, 4
        %v3906 = vshll.u32 %v3644, 16
        %v3908 = vrot.slane %v3906, 5
        %v3909 = vor.u32 %v3905, %v3908
        %v3910 = vrot.slane %v3909, 4
        %v3912 = vshll.u32 %v3645, 16
        %v3914 = vrot.slane %v3912, 5
        %v3915 = vsel %vm526, %v3910, %v3914
        %v3916 = vshrl.u32 %v3645, 16
        %v3918 = vrot.slane %v3916, 4
        %v3919 = vor.u32 %v3918, %v3914
        %v3920 = vrot.slane %v3919, 4
        %v3922 = vshll.u32 %v3646, 16
        %v3924 = vrot.slane %v3922, 5
        %v3925 = vsel %vm526, %v3920, %v3924
        %v3927 = vshrl.u32 %v3647, 16
        %v3929 = vrot.slane %v3927, 4
        %v3930 = vshll.u32 %v3647, 16
        %v3932 = vrot.slane %v3930, 5
        %v3933 = vor.u32 %v3929, %v3932
        %v3934 = vrot.slane %v3933, 4
        %v3936 = vshll.u32 %v3648, 16
        %v3938 = vrot.slane %v3936, 5
        %v3939 = vsel %vm526, %v3934, %v3938
        %v3940 = vshrl.u32 %v3648, 16
        %v3942 = vrot.slane %v3940, 4
        %v3943 = vor.u32 %v3942, %v3938
        %v3944 = vrot.slane %v3943, 4
        %v3946 = vshll.u32 %v3649, 16
        %v3948 = vrot.slane %v3946, 5
        %v3949 = vsel %vm526, %v3944, %v3948
        %v3951 = vshrl.u32 %v3650, 16
        %v3953 = vrot.slane %v3951, 4
        %v3954 = vshll.u32 %v3650, 16
        %v3956 = vrot.slane %v3954, 5
        %v3957 = vor.u32 %v3953, %v3956
        %v3958 = vrot.slane %v3957, 4
        %v3960 = vshll.u32 %v3651, 16
        %v3962 = vrot.slane %v3960, 5
        %v3963 = vsel %vm526, %v3958, %v3962
        %v3964 = vshrl.u32 %v3651, 16
        %v3966 = vrot.slane %v3964, 4
        %v3967 = vor.u32 %v3966, %v3962
        %v3968 = vrot.slane %v3967, 4
        %v3970 = vshll.u32 %v3652, 16
        %v3972 = vrot.slane %v3970, 5
        %v3973 = vsel %vm526, %v3968, %v3972
        %v3975 = vshrl.u32 %v3653, 16
        %v3977 = vrot.slane %v3975, 4
        %v3978 = vshll.u32 %v3653, 16
        %v3980 = vrot.slane %v3978, 5
        %v3981 = vor.u32 %v3977, %v3980
        %v3982 = vrot.slane %v3981, 4
        %v3984 = vshll.u32 %v3654, 16
        %v3986 = vrot.slane %v3984, 5
        %v3987 = vsel %vm526, %v3982, %v3986
        %v3988 = vshrl.u32 %v3654, 16
        %v3990 = vrot.slane %v3988, 4
        %v3991 = vor.u32 %v3990, %v3986
        %v3992 = vrot.slane %v3991, 4
        %v3994 = vshll.u32 %v3655, 16
        %v3996 = vrot.slane %v3994, 5
        %v3997 = vsel %vm526, %v3992, %v3996
        %v3999 = vshrl.u32 %v3656, 16
        %v4001 = vrot.slane %v3999, 4
        %v4002 = vshll.u32 %v3656, 16
        %v4004 = vrot.slane %v4002, 5
        %v4005 = vor.u32 %v4001, %v4004
        %v4006 = vrot.slane %v4005, 4
        %v4008 = vshll.u32 %v3657, 16
        %v4010 = vrot.slane %v4008, 5
        %v4011 = vsel %vm526, %v4006, %v4010
        %v4012 = vshrl.u32 %v3657, 16
        %v4014 = vrot.slane %v4012, 4
        %v4015 = vor.u32 %v4014, %v4010
        %v4016 = vrot.slane %v4015, 4
        %v4018 = vshll.u32 %v3658, 16
        %v4020 = vrot.slane %v4018, 5
        %v4021 = vsel %vm526, %v4016, %v4020
        %v4023 = vshrl.u32 %v3659, 16
        %v4025 = vrot.slane %v4023, 4
        %v4026 = vshll.u32 %v3659, 16
        %v4028 = vrot.slane %v4026, 5
        %v4029 = vor.u32 %v4025, %v4028
        %v4030 = vrot.slane %v4029, 4
        %v4032 = vshll.u32 %v3660, 16
        %v4034 = vrot.slane %v4032, 5
        %v4035 = vsel %vm526, %v4030, %v4034
        %v4036 = vshrl.u32 %v3660, 16
        %v4038 = vrot.slane %v4036, 4
        %v4039 = vor.u32 %v4038, %v4034
        %v4040 = vrot.slane %v4039, 4
        %v4042 = vshll.u32 %v3661, 16
        %v4044 = vrot.slane %v4042, 5
        %v4045 = vsel %vm526, %v4040, %v4044
        %s4046 = scalar_lea.vmem %s1, 14
        %v4047 = vld [vmem:[%s4046] sm:$0x3]
        %v4048 = vunpack.c.l.b16 %v3675
        %v4049 = vunpack.c.l.b16 %v3685
        %v4050 = vunpack.c.l.b16 %v3699
        %v4051 = vunpack.c.l.b16 %v3709
        %v4052 = vunpack.c.l.b16 %v3723
        %v4053 = vunpack.c.l.b16 %v3733
        %v4054 = vunpack.c.l.b16 %v3747
        %v4055 = vunpack.c.l.b16 %v3757
        %v4056 = vunpack.c.l.b16 %v3771
        %v4057 = vunpack.c.l.b16 %v3781
        %v4058 = vunpack.c.l.b16 %v3795
        %v4059 = vunpack.c.l.b16 %v3805
        %v4060 = vunpack.c.l.b16 %v3819
        %v4061 = vunpack.c.l.b16 %v3829
        %v4062 = vunpack.c.l.b16 %v3843
        %v4063 = vunpack.c.l.b16 %v3853
        %v4064 = vunpack.c.l.b16 %v3867
        %v4065 = vunpack.c.l.b16 %v3877
        %v4066 = vunpack.c.l.b16 %v3891
        %v4067 = vunpack.c.l.b16 %v3901
        %v4068 = vunpack.c.l.b16 %v3915
        %v4069 = vunpack.c.l.b16 %v3925
        %v4070 = vunpack.c.l.b16 %v3939
        %v4071 = vunpack.c.l.b16 %v3949
        %v4072 = vunpack.c.l.b16 %v3963
        %v4073 = vunpack.c.l.b16 %v3973
        %v4074 = vunpack.c.l.b16 %v3987
        %v4075 = vunpack.c.l.b16 %v3997
        %v4076 = vunpack.c.l.b16 %v4011
        %v4077 = vunpack.c.l.b16 %v4021
        %v4078 = vunpack.c.l.b16 %v4035
        %v4079 = vunpack.c.l.b16 %v4045
        %v4080 = vpack.c.b16 %v4049, %v4048
        %v4081 = vpack.c.b16 %v4051, %v4050
        %v4082 = vpack.c.b16 %v4053, %v4052
        %v4083 = vpack.c.b16 %v4055, %v4054
        %v4084 = vpack.c.b16 %v4057, %v4056
        %v4085 = vpack.c.b16 %v4059, %v4058
        %v4086 = vpack.c.b16 %v4061, %v4060
        %v4087 = vpack.c.b16 %v4063, %v4062
        %v4088 = vpack.c.b16 %v4065, %v4064
        %v4089 = vpack.c.b16 %v4067, %v4066
        %v4090 = vpack.c.b16 %v4069, %v4068
        %v4091 = vpack.c.b16 %v4071, %v4070
        %v4092 = vpack.c.b16 %v4073, %v4072
        %v4093 = vpack.c.b16 %v4075, %v4074
        %v4094 = vpack.c.b16 %v4077, %v4076
        %v4095 = vpack.c.b16 %v4079, %v4078
        %v4097 = vsel %vm302, %v4080, 0
        %v4100 = vsel %vm302, %v4081, 0
        %v4103 = vsel %vm302, %v4082, 0
        %v4106 = vsel %vm302, %v4083, 0
        %v4109 = vsel %vm302, %v4084, 0
        %v4112 = vsel %vm302, %v4085, 0
        %v4115 = vsel %vm302, %v4086, 0
        %v4118 = vsel %vm302, %v4087, 0
        %v4121 = vsel %vm302, %v4088, 0
        %v4124 = vsel %vm302, %v4089, 0
        %v4127 = vsel %vm302, %v4090, 0
        %v4130 = vsel %vm302, %v4091, 0
        %v4133 = vsel %vm302, %v4092, 0
        %v4136 = vsel %vm302, %v4093, 0
        %v4139 = vsel %vm302, %v4094, 0
        %v4142 = vsel %vm302, %v4095, 0
        %v4145 = vsel %vm351, %v4047, 0
        %4147 = vmatpush.bf16.msra.mxu0 0
        %4148 = vmatpush.bf16.msra.mxu0 0
        %4149 = vmatpush.bf16.msra.mxu0 0
        %4150 = vmatpush.bf16.msra.mxu0 0
        %4151 = vmatpush.bf16.msra.mxu0 0
        %4152 = vmatpush.bf16.msra.mxu0 0
        %4153 = vmatpush.bf16.msra.mxu0 0
        %4154 = vmatpush.bf16.msra.mxu0 %v4145
        %4155 = vmatmul.bf16.gmra.mxu0 %v4097
        %v4156 = vpop.f32.mrf.mxu0
        %v4157 = vadd.f32 0.0, %v4156
        %v4158 = vpop.f32.mrf.mxu0
        %v4159 = vadd.f32 0.0, %v4158
        %4160 = vmatmul.bf16.gmra.mxu0 %v4100
        %v4161 = vpop.f32.mrf.mxu0
        %v4162 = vadd.f32 0.0, %v4161
        %v4163 = vpop.f32.mrf.mxu0
        %v4164 = vadd.f32 0.0, %v4163
        %4165 = vmatmul.bf16.gmra.mxu0 %v4103
        %v4166 = vpop.f32.mrf.mxu0
        %v4167 = vadd.f32 0.0, %v4166
        %v4168 = vpop.f32.mrf.mxu0
        %v4169 = vadd.f32 0.0, %v4168
        %4170 = vmatmul.bf16.gmra.mxu0 %v4106
        %v4171 = vpop.f32.mrf.mxu0
        %v4172 = vadd.f32 0.0, %v4171
        %v4173 = vpop.f32.mrf.mxu0
        %v4174 = vadd.f32 0.0, %v4173
        %4175 = vmatmul.bf16.gmra.mxu0 %v4109
        %v4176 = vpop.f32.mrf.mxu0
        %v4177 = vadd.f32 0.0, %v4176
        %v4178 = vpop.f32.mrf.mxu0
        %v4179 = vadd.f32 0.0, %v4178
        %4180 = vmatmul.bf16.gmra.mxu0 %v4112
        %v4181 = vpop.f32.mrf.mxu0
        %v4182 = vadd.f32 0.0, %v4181
        %v4183 = vpop.f32.mrf.mxu0
        %v4184 = vadd.f32 0.0, %v4183
        %4185 = vmatmul.bf16.gmra.mxu0 %v4115
        %v4186 = vpop.f32.mrf.mxu0
        %v4187 = vadd.f32 0.0, %v4186
        %v4188 = vpop.f32.mrf.mxu0
        %v4189 = vadd.f32 0.0, %v4188
        %4190 = vmatmul.bf16.gmra.mxu0 %v4118
        %v4191 = vpop.f32.mrf.mxu0
        %v4192 = vadd.f32 0.0, %v4191
        %v4193 = vpop.f32.mrf.mxu0
        %v4194 = vadd.f32 0.0, %v4193
        %4195 = vmatmul.bf16.gmra.mxu0 %v4121
        %v4196 = vpop.f32.mrf.mxu0
        %v4197 = vadd.f32 0.0, %v4196
        %v4198 = vpop.f32.mrf.mxu0
        %v4199 = vadd.f32 0.0, %v4198
        %4200 = vmatmul.bf16.gmra.mxu0 %v4124
        %v4201 = vpop.f32.mrf.mxu0
        %v4202 = vadd.f32 0.0, %v4201
        %v4203 = vpop.f32.mrf.mxu0
        %v4204 = vadd.f32 0.0, %v4203
        %4205 = vmatmul.bf16.gmra.mxu0 %v4127
        %v4206 = vpop.f32.mrf.mxu0
        %v4207 = vadd.f32 0.0, %v4206
        %v4208 = vpop.f32.mrf.mxu0
        %v4209 = vadd.f32 0.0, %v4208
        %4210 = vmatmul.bf16.gmra.mxu0 %v4130
        %v4211 = vpop.f32.mrf.mxu0
        %v4212 = vadd.f32 0.0, %v4211
        %v4213 = vpop.f32.mrf.mxu0
        %v4214 = vadd.f32 0.0, %v4213
        %4215 = vmatmul.bf16.gmra.mxu0 %v4133
        %v4216 = vpop.f32.mrf.mxu0
        %v4217 = vadd.f32 0.0, %v4216
        %v4218 = vpop.f32.mrf.mxu0
        %v4219 = vadd.f32 0.0, %v4218
        %4220 = vmatmul.bf16.gmra.mxu0 %v4136
        %v4221 = vpop.f32.mrf.mxu0
        %v4222 = vadd.f32 0.0, %v4221
        %v4223 = vpop.f32.mrf.mxu0
        %v4224 = vadd.f32 0.0, %v4223
        %4225 = vmatmul.bf16.gmra.mxu0 %v4139
        %v4226 = vpop.f32.mrf.mxu0
        %v4227 = vadd.f32 0.0, %v4226
        %v4228 = vpop.f32.mrf.mxu0
        %v4229 = vadd.f32 0.0, %v4228
        %4230 = vmatmul.bf16.gmra.mxu0 %v4142
        %v4231 = vpop.f32.mrf.mxu0
        %v4232 = vadd.f32 0.0, %v4231
        %v4233 = vpop.f32.mrf.mxu0
        %v4234 = vadd.f32 0.0, %v4233
        %4235 = vdwg.mxu0
        %v4236 = vld [vmem:[#allocation2] sm:$0xff]
        %v4237 = vld [vmem:[#allocation2 + $0x8] sm:$0xff]
        %v4238 = vld [vmem:[#allocation2 + $0x10] sm:$0xff]
        %v4239 = vld [vmem:[#allocation2 + $0x18] sm:$0xff]
        %v4240 = vld [vmem:[#allocation2 + $0x20] sm:$0xff]
        %v4241 = vld [vmem:[#allocation2 + $0x28] sm:$0xff]
        %v4242 = vld [vmem:[#allocation2 + $0x30] sm:$0xff]
        %v4243 = vld [vmem:[#allocation2 + $0x38] sm:$0xff]
        %v4244 = vld [vmem:[#allocation2 + $0x40] sm:$0xff]
        %v4245 = vld [vmem:[#allocation2 + $0x48] sm:$0xff]
        %v4246 = vld [vmem:[#allocation2 + $0x50] sm:$0xff]
        %v4247 = vld [vmem:[#allocation2 + $0x58] sm:$0xff]
        %v4248 = vld [vmem:[#allocation2 + $0x60] sm:$0xff]
        %v4249 = vld [vmem:[#allocation2 + $0x68] sm:$0xff]
        %v4250 = vld [vmem:[#allocation2 + $0x70] sm:$0xff]
        %v4251 = vld [vmem:[#allocation2 + $0x78] sm:$0xff]
        %v4252 = vld [vmem:[#allocation2 + $0x80] sm:$0xff]
        %v4253 = vld [vmem:[#allocation2 + $0x88] sm:$0xff]
        %v4254 = vld [vmem:[#allocation2 + $0x90] sm:$0xff]
        %v4255 = vld [vmem:[#allocation2 + $0x98] sm:$0xff]
        %v4256 = vld [vmem:[#allocation2 + $0xa0] sm:$0xff]
        %v4257 = vld [vmem:[#allocation2 + $0xa8] sm:$0xff]
        %v4258 = vld [vmem:[#allocation2 + $0xb0] sm:$0xff]
        %v4259 = vld [vmem:[#allocation2 + $0xb8] sm:$0xff]
        %v4260 = vld [vmem:[#allocation2 + $0xc0] sm:$0xff]
        %v4261 = vld [vmem:[#allocation2 + $0xc8] sm:$0xff]
        %v4262 = vld [vmem:[#allocation2 + $0xd0] sm:$0xff]
        %v4263 = vld [vmem:[#allocation2 + $0xd8] sm:$0xff]
        %v4264 = vld [vmem:[#allocation2 + $0xe0] sm:$0xff]
        %v4265 = vld [vmem:[#allocation2 + $0xe8] sm:$0xff]
        %v4266 = vld [vmem:[#allocation2 + $0xf0] sm:$0xff]
        %v4267 = vld [vmem:[#allocation2 + $0xf8] sm:$0xff]
        %v4268 = vadd.f32 %v4236, %v4157
        %v4269 = vadd.f32 %v4237, %v4159
        %v4270 = vadd.f32 %v4238, %v4162
        %v4271 = vadd.f32 %v4239, %v4164
        %v4272 = vadd.f32 %v4240, %v4167
        %v4273 = vadd.f32 %v4241, %v4169
        %v4274 = vadd.f32 %v4242, %v4172
        %v4275 = vadd.f32 %v4243, %v4174
        %v4276 = vadd.f32 %v4244, %v4177
        %v4277 = vadd.f32 %v4245, %v4179
        %v4278 = vadd.f32 %v4246, %v4182
        %v4279 = vadd.f32 %v4247, %v4184
        %v4280 = vadd.f32 %v4248, %v4187
        %v4281 = vadd.f32 %v4249, %v4189
        %v4282 = vadd.f32 %v4250, %v4192
        %v4283 = vadd.f32 %v4251, %v4194
        %v4284 = vadd.f32 %v4252, %v4197
        %v4285 = vadd.f32 %v4253, %v4199
        %v4286 = vadd.f32 %v4254, %v4202
        %v4287 = vadd.f32 %v4255, %v4204
        %v4288 = vadd.f32 %v4256, %v4207
        %v4289 = vadd.f32 %v4257, %v4209
        %v4290 = vadd.f32 %v4258, %v4212
        %v4291 = vadd.f32 %v4259, %v4214
        %v4292 = vadd.f32 %v4260, %v4217
        %v4293 = vadd.f32 %v4261, %v4219
        %v4294 = vadd.f32 %v4262, %v4222
        %v4295 = vadd.f32 %v4263, %v4224
        %v4296 = vadd.f32 %v4264, %v4227
        %v4297 = vadd.f32 %v4265, %v4229
        %v4298 = vadd.f32 %v4266, %v4232
        %v4299 = vadd.f32 %v4267, %v4234
        %4300 = vst [vmem:[#allocation2] sm:$0xff] %v4268
        %4301 = vst [vmem:[#allocation2 + $0x8] sm:$0xff] %v4269
        %4302 = vst [vmem:[#allocation2 + $0x10] sm:$0xff] %v4270
        %4303 = vst [vmem:[#allocation2 + $0x18] sm:$0xff] %v4271
        %4304 = vst [vmem:[#allocation2 + $0x20] sm:$0xff] %v4272
        %4305 = vst [vmem:[#allocation2 + $0x28] sm:$0xff] %v4273
        %4306 = vst [vmem:[#allocation2 + $0x30] sm:$0xff] %v4274
        %4307 = vst [vmem:[#allocation2 + $0x38] sm:$0xff] %v4275
        %4308 = vst [vmem:[#allocation2 + $0x40] sm:$0xff] %v4276
        %4309 = vst [vmem:[#allocation2 + $0x48] sm:$0xff] %v4277
        %4310 = vst [vmem:[#allocation2 + $0x50] sm:$0xff] %v4278
        %4311 = vst [vmem:[#allocation2 + $0x58] sm:$0xff] %v4279
        %4312 = vst [vmem:[#allocation2 + $0x60] sm:$0xff] %v4280
        %4313 = vst [vmem:[#allocation2 + $0x68] sm:$0xff] %v4281
        %4314 = vst [vmem:[#allocation2 + $0x70] sm:$0xff] %v4282
        %4315 = vst [vmem:[#allocation2 + $0x78] sm:$0xff] %v4283
        %4316 = vst [vmem:[#allocation2 + $0x80] sm:$0xff] %v4284
        %4317 = vst [vmem:[#allocation2 + $0x88] sm:$0xff] %v4285
        %4318 = vst [vmem:[#allocation2 + $0x90] sm:$0xff] %v4286
        %4319 = vst [vmem:[#allocation2 + $0x98] sm:$0xff] %v4287
        %4320 = vst [vmem:[#allocation2 + $0xa0] sm:$0xff] %v4288
        %4321 = vst [vmem:[#allocation2 + $0xa8] sm:$0xff] %v4289
        %4322 = vst [vmem:[#allocation2 + $0xb0] sm:$0xff] %v4290
        %4323 = vst [vmem:[#allocation2 + $0xb8] sm:$0xff] %v4291
        %4324 = vst [vmem:[#allocation2 + $0xc0] sm:$0xff] %v4292
        %4325 = vst [vmem:[#allocation2 + $0xc8] sm:$0xff] %v4293
        %4326 = vst [vmem:[#allocation2 + $0xd0] sm:$0xff] %v4294
        %4327 = vst [vmem:[#allocation2 + $0xd8] sm:$0xff] %v4295
        %4328 = vst [vmem:[#allocation2 + $0xe0] sm:$0xff] %v4296
        %4329 = vst [vmem:[#allocation2 + $0xe8] sm:$0xff] %v4297
        %4330 = vst [vmem:[#allocation2 + $0xf0] sm:$0xff] %v4298
        %4331 = vst [vmem:[#allocation2 + $0xf8] sm:$0xff] %v4299
        %v4332 = vld [vmem:[%s3263] sm:$0xe]
        %v4333 = vld [vmem:[%s3263 + $0x4] sm:$0xf]
        %v4334 = vld [vmem:[%s3263 + $0x8] sm:$0x1]
        %v4335 = vld [vmem:[%s3263 + $0xc] sm:$0xe]
        %v4336 = vld [vmem:[%s3263 + $0x10] sm:$0xf]
        %v4337 = vld [vmem:[%s3263 + $0x14] sm:$0x1]
        %v4338 = vld [vmem:[%s3263 + $0x18] sm:$0xe]
        %v4339 = vld [vmem:[%s3263 + $0x1c] sm:$0xf]
        %v4340 = vld [vmem:[%s3263 + $0x20] sm:$0x1]
        %v4341 = vld [vmem:[%s3263 + $0x24] sm:$0xe]
        %v4342 = vld [vmem:[%s3263 + $0x28] sm:$0xf]
        %v4343 = vld [vmem:[%s3263 + $0x2c] sm:$0x1]
        %v4344 = vld [vmem:[%s3263 + $0x30] sm:$0xe]
        %v4345 = vld [vmem:[%s3263 + $0x34] sm:$0xf]
        %v4346 = vld [vmem:[%s3263 + $0x38] sm:$0x1]
        %v4347 = vld [vmem:[%s3263 + $0x3c] sm:$0xe]
        %v4348 = vld [vmem:[%s3263 + $0x40] sm:$0xf]
        %v4349 = vld [vmem:[%s3263 + $0x44] sm:$0x1]
        %v4350 = vld [vmem:[%s3263 + $0x48] sm:$0xe]
        %v4351 = vld [vmem:[%s3263 + $0x4c] sm:$0xf]
        %v4352 = vld [vmem:[%s3263 + $0x50] sm:$0x1]
        %v4353 = vld [vmem:[%s3263 + $0x54] sm:$0xe]
        %v4354 = vld [vmem:[%s3263 + $0x58] sm:$0xf]
        %v4355 = vld [vmem:[%s3263 + $0x5c] sm:$0x1]
        %v4356 = vld [vmem:[%s3263 + $0x60] sm:$0xe]
        %v4357 = vld [vmem:[%s3263 + $0x64] sm:$0xf]
        %v4358 = vld [vmem:[%s3263 + $0x68] sm:$0x1]
        %v4359 = vld [vmem:[%s3263 + $0x6c] sm:$0xe]
        %v4360 = vld [vmem:[%s3263 + $0x70] sm:$0xf]
        %v4361 = vld [vmem:[%s3263 + $0x74] sm:$0x1]
        %v4362 = vld [vmem:[%s3263 + $0x78] sm:$0xe]
        %v4363 = vld [vmem:[%s3263 + $0x7c] sm:$0xf]
        %v4364 = vld [vmem:[%s3263 + $0x80] sm:$0x1]
        %v4365 = vld [vmem:[%s3263 + $0x84] sm:$0xe]
        %v4366 = vld [vmem:[%s3263 + $0x88] sm:$0xf]
        %v4367 = vld [vmem:[%s3263 + $0x8c] sm:$0x1]
        %v4368 = vld [vmem:[%s3263 + $0x90] sm:$0xe]
        %v4369 = vld [vmem:[%s3263 + $0x94] sm:$0xf]
        %v4370 = vld [vmem:[%s3263 + $0x98] sm:$0x1]
        %v4371 = vld [vmem:[%s3263 + $0x9c] sm:$0xe]
        %v4372 = vld [vmem:[%s3263 + $0xa0] sm:$0xf]
        %v4373 = vld [vmem:[%s3263 + $0xa4] sm:$0x1]
        %v4374 = vld [vmem:[%s3263 + $0xa8] sm:$0xe]
        %v4375 = vld [vmem:[%s3263 + $0xac] sm:$0xf]
        %v4376 = vld [vmem:[%s3263 + $0xb0] sm:$0x1]
        %v4377 = vld [vmem:[%s3263 + $0xb4] sm:$0xe]
        %v4378 = vld [vmem:[%s3263 + $0xb8] sm:$0xf]
        %v4379 = vld [vmem:[%s3263 + $0xbc] sm:$0x1]
        %v4428 = vrot.slane %v4332, 5
        %v4429 = vrot.slane %v4428, 4
        %v4430 = vrot.slane %v4333, 5
        %v4431 = vsel %vm1295, %v4429, %v4430
        %v4432 = vrot.slane %v4430, 4
        %v4433 = vrot.slane %v4334, 5
        %v4434 = vsel %vm1295, %v4432, %v4433
        %v4435 = vrot.slane %v4335, 5
        %v4436 = vrot.slane %v4435, 4
        %v4437 = vrot.slane %v4336, 5
        %v4438 = vsel %vm1295, %v4436, %v4437
        %v4439 = vrot.slane %v4437, 4
        %v4440 = vrot.slane %v4337, 5
        %v4441 = vsel %vm1295, %v4439, %v4440
        %v4442 = vrot.slane %v4338, 5
        %v4443 = vrot.slane %v4442, 4
        %v4444 = vrot.slane %v4339, 5
        %v4445 = vsel %vm1295, %v4443, %v4444
        %v4446 = vrot.slane %v4444, 4
        %v4447 = vrot.slane %v4340, 5
        %v4448 = vsel %vm1295, %v4446, %v4447
        %v4449 = vrot.slane %v4341, 5
        %v4450 = vrot.slane %v4449, 4
        %v4451 = vrot.slane %v4342, 5
        %v4452 = vsel %vm1295, %v4450, %v4451
        %v4453 = vrot.slane %v4451, 4
        %v4454 = vrot.slane %v4343, 5
        %v4455 = vsel %vm1295, %v4453, %v4454
        %v4456 = vrot.slane %v4344, 5
        %v4457 = vrot.slane %v4456, 4
        %v4458 = vrot.slane %v4345, 5
        %v4459 = vsel %vm1295, %v4457, %v4458
        %v4460 = vrot.slane %v4458, 4
        %v4461 = vrot.slane %v4346, 5
        %v4462 = vsel %vm1295, %v4460, %v4461
        %v4463 = vrot.slane %v4347, 5
        %v4464 = vrot.slane %v4463, 4
        %v4465 = vrot.slane %v4348, 5
        %v4466 = vsel %vm1295, %v4464, %v4465
        %v4467 = vrot.slane %v4465, 4
        %v4468 = vrot.slane %v4349, 5
        %v4469 = vsel %vm1295, %v4467, %v4468
        %v4470 = vrot.slane %v4350, 5
        %v4471 = vrot.slane %v4470, 4
        %v4472 = vrot.slane %v4351, 5
        %v4473 = vsel %vm1295, %v4471, %v4472
        %v4474 = vrot.slane %v4472, 4
        %v4475 = vrot.slane %v4352, 5
        %v4476 = vsel %vm1295, %v4474, %v4475
        %v4477 = vrot.slane %v4353, 5
        %v4478 = vrot.slane %v4477, 4
        %v4479 = vrot.slane %v4354, 5
        %v4480 = vsel %vm1295, %v4478, %v4479
        %v4481 = vrot.slane %v4479, 4
        %v4482 = vrot.slane %v4355, 5
        %v4483 = vsel %vm1295, %v4481, %v4482
        %v4484 = vrot.slane %v4356, 5
        %v4485 = vrot.slane %v4484, 4
        %v4486 = vrot.slane %v4357, 5
        %v4487 = vsel %vm1295, %v4485, %v4486
        %v4488 = vrot.slane %v4486, 4
        %v4489 = vrot.slane %v4358, 5
        %v4490 = vsel %vm1295, %v4488, %v4489
        %v4491 = vrot.slane %v4359, 5
        %v4492 = vrot.slane %v4491, 4
        %v4493 = vrot.slane %v4360, 5
        %v4494 = vsel %vm1295, %v4492, %v4493
        %v4495 = vrot.slane %v4493, 4
        %v4496 = vrot.slane %v4361, 5
        %v4497 = vsel %vm1295, %v4495, %v4496
        %v4498 = vrot.slane %v4362, 5
        %v4499 = vrot.slane %v4498, 4
        %v4500 = vrot.slane %v4363, 5
        %v4501 = vsel %vm1295, %v4499, %v4500
        %v4502 = vrot.slane %v4500, 4
        %v4503 = vrot.slane %v4364, 5
        %v4504 = vsel %vm1295, %v4502, %v4503
        %v4505 = vrot.slane %v4365, 5
        %v4506 = vrot.slane %v4505, 4
        %v4507 = vrot.slane %v4366, 5
        %v4508 = vsel %vm1295, %v4506, %v4507
        %v4509 = vrot.slane %v4507, 4
        %v4510 = vrot.slane %v4367, 5
        %v4511 = vsel %vm1295, %v4509, %v4510
        %v4512 = vrot.slane %v4368, 5
        %v4513 = vrot.slane %v4512, 4
        %v4514 = vrot.slane %v4369, 5
        %v4515 = vsel %vm1295, %v4513, %v4514
        %v4516 = vrot.slane %v4514, 4
        %v4517 = vrot.slane %v4370, 5
        %v4518 = vsel %vm1295, %v4516, %v4517
        %v4519 = vrot.slane %v4371, 5
        %v4520 = vrot.slane %v4519, 4
        %v4521 = vrot.slane %v4372, 5
        %v4522 = vsel %vm1295, %v4520, %v4521
        %v4523 = vrot.slane %v4521, 4
        %v4524 = vrot.slane %v4373, 5
        %v4525 = vsel %vm1295, %v4523, %v4524
        %v4526 = vrot.slane %v4374, 5
        %v4527 = vrot.slane %v4526, 4
        %v4528 = vrot.slane %v4375, 5
        %v4529 = vsel %vm1295, %v4527, %v4528
        %v4530 = vrot.slane %v4528, 4
        %v4531 = vrot.slane %v4376, 5
        %v4532 = vsel %vm1295, %v4530, %v4531
        %v4533 = vrot.slane %v4377, 5
        %v4534 = vrot.slane %v4533, 4
        %v4535 = vrot.slane %v4378, 5
        %v4536 = vsel %vm1295, %v4534, %v4535
        %v4537 = vrot.slane %v4535, 4
        %v4538 = vrot.slane %v4379, 5
        %v4539 = vsel %vm1295, %v4537, %v4538
        %s4540 = scalar_lea.vmem %s1, 16
        %v4541 = vld [vmem:[%s4540] sm:$0x3]
        %v4542 = vunpack.c.l.b16 %v4431
        %v4543 = vunpack.c.l.b16 %v4434
        %v4544 = vunpack.c.l.b16 %v4438
        %v4545 = vunpack.c.l.b16 %v4441
        %v4546 = vunpack.c.l.b16 %v4445
        %v4547 = vunpack.c.l.b16 %v4448
        %v4548 = vunpack.c.l.b16 %v4452
        %v4549 = vunpack.c.l.b16 %v4455
        %v4550 = vunpack.c.l.b16 %v4459
        %v4551 = vunpack.c.l.b16 %v4462
        %v4552 = vunpack.c.l.b16 %v4466
        %v4553 = vunpack.c.l.b16 %v4469
        %v4554 = vunpack.c.l.b16 %v4473
        %v4555 = vunpack.c.l.b16 %v4476
        %v4556 = vunpack.c.l.b16 %v4480
        %v4557 = vunpack.c.l.b16 %v4483
        %v4558 = vunpack.c.l.b16 %v4487
        %v4559 = vunpack.c.l.b16 %v4490
        %v4560 = vunpack.c.l.b16 %v4494
        %v4561 = vunpack.c.l.b16 %v4497
        %v4562 = vunpack.c.l.b16 %v4501
        %v4563 = vunpack.c.l.b16 %v4504
        %v4564 = vunpack.c.l.b16 %v4508
        %v4565 = vunpack.c.l.b16 %v4511
        %v4566 = vunpack.c.l.b16 %v4515
        %v4567 = vunpack.c.l.b16 %v4518
        %v4568 = vunpack.c.l.b16 %v4522
        %v4569 = vunpack.c.l.b16 %v4525
        %v4570 = vunpack.c.l.b16 %v4529
        %v4571 = vunpack.c.l.b16 %v4532
        %v4572 = vunpack.c.l.b16 %v4536
        %v4573 = vunpack.c.l.b16 %v4539
        %v4574 = vpack.c.b16 %v4543, %v4542
        %v4575 = vpack.c.b16 %v4545, %v4544
        %v4576 = vpack.c.b16 %v4547, %v4546
        %v4577 = vpack.c.b16 %v4549, %v4548
        %v4578 = vpack.c.b16 %v4551, %v4550
        %v4579 = vpack.c.b16 %v4553, %v4552
        %v4580 = vpack.c.b16 %v4555, %v4554
        %v4581 = vpack.c.b16 %v4557, %v4556
        %v4582 = vpack.c.b16 %v4559, %v4558
        %v4583 = vpack.c.b16 %v4561, %v4560
        %v4584 = vpack.c.b16 %v4563, %v4562
        %v4585 = vpack.c.b16 %v4565, %v4564
        %v4586 = vpack.c.b16 %v4567, %v4566
        %v4587 = vpack.c.b16 %v4569, %v4568
        %v4588 = vpack.c.b16 %v4571, %v4570
        %v4589 = vpack.c.b16 %v4573, %v4572
        %v4591 = vsel %vm302, %v4574, 0
        %v4594 = vsel %vm302, %v4575, 0
        %v4597 = vsel %vm302, %v4576, 0
        %v4600 = vsel %vm302, %v4577, 0
        %v4603 = vsel %vm302, %v4578, 0
        %v4606 = vsel %vm302, %v4579, 0
        %v4609 = vsel %vm302, %v4580, 0
        %v4612 = vsel %vm302, %v4581, 0
        %v4615 = vsel %vm302, %v4582, 0
        %v4618 = vsel %vm302, %v4583, 0
        %v4621 = vsel %vm302, %v4584, 0
        %v4624 = vsel %vm302, %v4585, 0
        %v4627 = vsel %vm302, %v4586, 0
        %v4630 = vsel %vm302, %v4587, 0
        %v4633 = vsel %vm302, %v4588, 0
        %v4636 = vsel %vm302, %v4589, 0
        %v4639 = vsel %vm351, %v4541, 0
        %4641 = vmatpush.bf16.msra.mxu0 0
        %4642 = vmatpush.bf16.msra.mxu0 0
        %4643 = vmatpush.bf16.msra.mxu0 0
        %4644 = vmatpush.bf16.msra.mxu0 0
        %4645 = vmatpush.bf16.msra.mxu0 0
        %4646 = vmatpush.bf16.msra.mxu0 0
        %4647 = vmatpush.bf16.msra.mxu0 0
        %4648 = vmatpush.bf16.msra.mxu0 %v4639
        %4649 = vmatmul.bf16.gmra.mxu0 %v4591
        %v4650 = vpop.f32.mrf.mxu0
        %v4651 = vadd.f32 0.0, %v4650
        %v4652 = vpop.f32.mrf.mxu0
        %v4653 = vadd.f32 0.0, %v4652
        %4654 = vmatmul.bf16.gmra.mxu0 %v4594
        %v4655 = vpop.f32.mrf.mxu0
        %v4656 = vadd.f32 0.0, %v4655
        %v4657 = vpop.f32.mrf.mxu0
        %v4658 = vadd.f32 0.0, %v4657
        %4659 = vmatmul.bf16.gmra.mxu0 %v4597
        %v4660 = vpop.f32.mrf.mxu0
        %v4661 = vadd.f32 0.0, %v4660
        %v4662 = vpop.f32.mrf.mxu0
        %v4663 = vadd.f32 0.0, %v4662
        %4664 = vmatmul.bf16.gmra.mxu0 %v4600
        %v4665 = vpop.f32.mrf.mxu0
        %v4666 = vadd.f32 0.0, %v4665
        %v4667 = vpop.f32.mrf.mxu0
        %v4668 = vadd.f32 0.0, %v4667
        %4669 = vmatmul.bf16.gmra.mxu0 %v4603
        %v4670 = vpop.f32.mrf.mxu0
        %v4671 = vadd.f32 0.0, %v4670
        %v4672 = vpop.f32.mrf.mxu0
        %v4673 = vadd.f32 0.0, %v4672
        %4674 = vmatmul.bf16.gmra.mxu0 %v4606
        %v4675 = vpop.f32.mrf.mxu0
        %v4676 = vadd.f32 0.0, %v4675
        %v4677 = vpop.f32.mrf.mxu0
        %v4678 = vadd.f32 0.0, %v4677
        %4679 = vmatmul.bf16.gmra.mxu0 %v4609
        %v4680 = vpop.f32.mrf.mxu0
        %v4681 = vadd.f32 0.0, %v4680
        %v4682 = vpop.f32.mrf.mxu0
        %v4683 = vadd.f32 0.0, %v4682
        %4684 = vmatmul.bf16.gmra.mxu0 %v4612
        %v4685 = vpop.f32.mrf.mxu0
        %v4686 = vadd.f32 0.0, %v4685
        %v4687 = vpop.f32.mrf.mxu0
        %v4688 = vadd.f32 0.0, %v4687
        %4689 = vmatmul.bf16.gmra.mxu0 %v4615
        %v4690 = vpop.f32.mrf.mxu0
        %v4691 = vadd.f32 0.0, %v4690
        %v4692 = vpop.f32.mrf.mxu0
        %v4693 = vadd.f32 0.0, %v4692
        %4694 = vmatmul.bf16.gmra.mxu0 %v4618
        %v4695 = vpop.f32.mrf.mxu0
        %v4696 = vadd.f32 0.0, %v4695
        %v4697 = vpop.f32.mrf.mxu0
        %v4698 = vadd.f32 0.0, %v4697
        %4699 = vmatmul.bf16.gmra.mxu0 %v4621
        %v4700 = vpop.f32.mrf.mxu0
        %v4701 = vadd.f32 0.0, %v4700
        %v4702 = vpop.f32.mrf.mxu0
        %v4703 = vadd.f32 0.0, %v4702
        %4704 = vmatmul.bf16.gmra.mxu0 %v4624
        %v4705 = vpop.f32.mrf.mxu0
        %v4706 = vadd.f32 0.0, %v4705
        %v4707 = vpop.f32.mrf.mxu0
        %v4708 = vadd.f32 0.0, %v4707
        %4709 = vmatmul.bf16.gmra.mxu0 %v4627
        %v4710 = vpop.f32.mrf.mxu0
        %v4711 = vadd.f32 0.0, %v4710
        %v4712 = vpop.f32.mrf.mxu0
        %v4713 = vadd.f32 0.0, %v4712
        %4714 = vmatmul.bf16.gmra.mxu0 %v4630
        %v4715 = vpop.f32.mrf.mxu0
        %v4716 = vadd.f32 0.0, %v4715
        %v4717 = vpop.f32.mrf.mxu0
        %v4718 = vadd.f32 0.0, %v4717
        %4719 = vmatmul.bf16.gmra.mxu0 %v4633
        %v4720 = vpop.f32.mrf.mxu0
        %v4721 = vadd.f32 0.0, %v4720
        %v4722 = vpop.f32.mrf.mxu0
        %v4723 = vadd.f32 0.0, %v4722
        %4724 = vmatmul.bf16.gmra.mxu0 %v4636
        %v4725 = vpop.f32.mrf.mxu0
        %v4726 = vadd.f32 0.0, %v4725
        %v4727 = vpop.f32.mrf.mxu0
        %v4728 = vadd.f32 0.0, %v4727
        %4729 = vdwg.mxu0
        %v4730 = vld [vmem:[#allocation2] sm:$0xff]
        %v4731 = vld [vmem:[#allocation2 + $0x8] sm:$0xff]
        %v4732 = vld [vmem:[#allocation2 + $0x10] sm:$0xff]
        %v4733 = vld [vmem:[#allocation2 + $0x18] sm:$0xff]
        %v4734 = vld [vmem:[#allocation2 + $0x20] sm:$0xff]
        %v4735 = vld [vmem:[#allocation2 + $0x28] sm:$0xff]
        %v4736 = vld [vmem:[#allocation2 + $0x30] sm:$0xff]
        %v4737 = vld [vmem:[#allocation2 + $0x38] sm:$0xff]
        %v4738 = vld [vmem:[#allocation2 + $0x40] sm:$0xff]
        %v4739 = vld [vmem:[#allocation2 + $0x48] sm:$0xff]
        %v4740 = vld [vmem:[#allocation2 + $0x50] sm:$0xff]
        %v4741 = vld [vmem:[#allocation2 + $0x58] sm:$0xff]
        %v4742 = vld [vmem:[#allocation2 + $0x60] sm:$0xff]
        %v4743 = vld [vmem:[#allocation2 + $0x68] sm:$0xff]
        %v4744 = vld [vmem:[#allocation2 + $0x70] sm:$0xff]
        %v4745 = vld [vmem:[#allocation2 + $0x78] sm:$0xff]
        %v4746 = vld [vmem:[#allocation2 + $0x80] sm:$0xff]
        %v4747 = vld [vmem:[#allocation2 + $0x88] sm:$0xff]
        %v4748 = vld [vmem:[#allocation2 + $0x90] sm:$0xff]
        %v4749 = vld [vmem:[#allocation2 + $0x98] sm:$0xff]
        %v4750 = vld [vmem:[#allocation2 + $0xa0] sm:$0xff]
        %v4751 = vld [vmem:[#allocation2 + $0xa8] sm:$0xff]
        %v4752 = vld [vmem:[#allocation2 + $0xb0] sm:$0xff]
        %v4753 = vld [vmem:[#allocation2 + $0xb8] sm:$0xff]
        %v4754 = vld [vmem:[#allocation2 + $0xc0] sm:$0xff]
        %v4755 = vld [vmem:[#allocation2 + $0xc8] sm:$0xff]
        %v4756 = vld [vmem:[#allocation2 + $0xd0] sm:$0xff]
        %v4757 = vld [vmem:[#allocation2 + $0xd8] sm:$0xff]
        %v4758 = vld [vmem:[#allocation2 + $0xe0] sm:$0xff]
        %v4759 = vld [vmem:[#allocation2 + $0xe8] sm:$0xff]
        %v4760 = vld [vmem:[#allocation2 + $0xf0] sm:$0xff]
        %v4761 = vld [vmem:[#allocation2 + $0xf8] sm:$0xff]
        %v4762 = vadd.f32 %v4730, %v4651
        %v4763 = vadd.f32 %v4731, %v4653
        %v4764 = vadd.f32 %v4732, %v4656
        %v4765 = vadd.f32 %v4733, %v4658
        %v4766 = vadd.f32 %v4734, %v4661
        %v4767 = vadd.f32 %v4735, %v4663
        %v4768 = vadd.f32 %v4736, %v4666
        %v4769 = vadd.f32 %v4737, %v4668
        %v4770 = vadd.f32 %v4738, %v4671
        %v4771 = vadd.f32 %v4739, %v4673
        %v4772 = vadd.f32 %v4740, %v4676
        %v4773 = vadd.f32 %v4741, %v4678
        %v4774 = vadd.f32 %v4742, %v4681
        %v4775 = vadd.f32 %v4743, %v4683
        %v4776 = vadd.f32 %v4744, %v4686
        %v4777 = vadd.f32 %v4745, %v4688
        %v4778 = vadd.f32 %v4746, %v4691
        %v4779 = vadd.f32 %v4747, %v4693
        %v4780 = vadd.f32 %v4748, %v4696
        %v4781 = vadd.f32 %v4749, %v4698
        %v4782 = vadd.f32 %v4750, %v4701
        %v4783 = vadd.f32 %v4751, %v4703
        %v4784 = vadd.f32 %v4752, %v4706
        %v4785 = vadd.f32 %v4753, %v4708
        %v4786 = vadd.f32 %v4754, %v4711
        %v4787 = vadd.f32 %v4755, %v4713
        %v4788 = vadd.f32 %v4756, %v4716
        %v4789 = vadd.f32 %v4757, %v4718
        %v4790 = vadd.f32 %v4758, %v4721
        %v4791 = vadd.f32 %v4759, %v4723
        %v4792 = vadd.f32 %v4760, %v4726
        %v4793 = vadd.f32 %v4761, %v4728
        %4794 = vst [vmem:[#allocation2] sm:$0xff] %v4762
        %4795 = vst [vmem:[#allocation2 + $0x8] sm:$0xff] %v4763
        %4796 = vst [vmem:[#allocation2 + $0x10] sm:$0xff] %v4764
        %4797 = vst [vmem:[#allocation2 + $0x18] sm:$0xff] %v4765
        %4798 = vst [vmem:[#allocation2 + $0x20] sm:$0xff] %v4766
        %4799 = vst [vmem:[#allocation2 + $0x28] sm:$0xff] %v4767
        %4800 = vst [vmem:[#allocation2 + $0x30] sm:$0xff] %v4768
        %4801 = vst [vmem:[#allocation2 + $0x38] sm:$0xff] %v4769
        %4802 = vst [vmem:[#allocation2 + $0x40] sm:$0xff] %v4770
        %4803 = vst [vmem:[#allocation2 + $0x48] sm:$0xff] %v4771
        %4804 = vst [vmem:[#allocation2 + $0x50] sm:$0xff] %v4772
        %4805 = vst [vmem:[#allocation2 + $0x58] sm:$0xff] %v4773
        %4806 = vst [vmem:[#allocation2 + $0x60] sm:$0xff] %v4774
        %4807 = vst [vmem:[#allocation2 + $0x68] sm:$0xff] %v4775
        %4808 = vst [vmem:[#allocation2 + $0x70] sm:$0xff] %v4776
        %4809 = vst [vmem:[#allocation2 + $0x78] sm:$0xff] %v4777
        %4810 = vst [vmem:[#allocation2 + $0x80] sm:$0xff] %v4778
        %4811 = vst [vmem:[#allocation2 + $0x88] sm:$0xff] %v4779
        %4812 = vst [vmem:[#allocation2 + $0x90] sm:$0xff] %v4780
        %4813 = vst [vmem:[#allocation2 + $0x98] sm:$0xff] %v4781
        %4814 = vst [vmem:[#allocation2 + $0xa0] sm:$0xff] %v4782
        %4815 = vst [vmem:[#allocation2 + $0xa8] sm:$0xff] %v4783
        %4816 = vst [vmem:[#allocation2 + $0xb0] sm:$0xff] %v4784
        %4817 = vst [vmem:[#allocation2 + $0xb8] sm:$0xff] %v4785
        %4818 = vst [vmem:[#allocation2 + $0xc0] sm:$0xff] %v4786
        %4819 = vst [vmem:[#allocation2 + $0xc8] sm:$0xff] %v4787
        %4820 = vst [vmem:[#allocation2 + $0xd0] sm:$0xff] %v4788
        %4821 = vst [vmem:[#allocation2 + $0xd8] sm:$0xff] %v4789
        %4822 = vst [vmem:[#allocation2 + $0xe0] sm:$0xff] %v4790
        %4823 = vst [vmem:[#allocation2 + $0xe8] sm:$0xff] %v4791
        %4824 = vst [vmem:[#allocation2 + $0xf0] sm:$0xff] %v4792
        %4825 = vst [vmem:[#allocation2 + $0xf8] sm:$0xff] %v4793
        %v4826 = vld [vmem:[#allocation2] sm:$0xff]
        %v4827 = vld [vmem:[#allocation2 + $0x8] sm:$0xff]
        %v4828 = vld [vmem:[#allocation2 + $0x10] sm:$0xff]
        %v4829 = vld [vmem:[#allocation2 + $0x18] sm:$0xff]
        %v4830 = vld [vmem:[#allocation2 + $0x20] sm:$0xff]
        %v4831 = vld [vmem:[#allocation2 + $0x28] sm:$0xff]
        %v4832 = vld [vmem:[#allocation2 + $0x30] sm:$0xff]
        %v4833 = vld [vmem:[#allocation2 + $0x38] sm:$0xff]
        %v4834 = vld [vmem:[#allocation2 + $0x40] sm:$0xff]
        %v4835 = vld [vmem:[#allocation2 + $0x48] sm:$0xff]
        %v4836 = vld [vmem:[#allocation2 + $0x50] sm:$0xff]
        %v4837 = vld [vmem:[#allocation2 + $0x58] sm:$0xff]
        %v4838 = vld [vmem:[#allocation2 + $0x60] sm:$0xff]
        %v4839 = vld [vmem:[#allocation2 + $0x68] sm:$0xff]
        %v4840 = vld [vmem:[#allocation2 + $0x70] sm:$0xff]
        %v4841 = vld [vmem:[#allocation2 + $0x78] sm:$0xff]
        %v4842 = vld [vmem:[#allocation2 + $0x80] sm:$0xff]
        %v4843 = vld [vmem:[#allocation2 + $0x88] sm:$0xff]
        %v4844 = vld [vmem:[#allocation2 + $0x90] sm:$0xff]
        %v4845 = vld [vmem:[#allocation2 + $0x98] sm:$0xff]
        %v4846 = vld [vmem:[#allocation2 + $0xa0] sm:$0xff]
        %v4847 = vld [vmem:[#allocation2 + $0xa8] sm:$0xff]
        %v4848 = vld [vmem:[#allocation2 + $0xb0] sm:$0xff]
        %v4849 = vld [vmem:[#allocation2 + $0xb8] sm:$0xff]
        %v4850 = vld [vmem:[#allocation2 + $0xc0] sm:$0xff]
        %v4851 = vld [vmem:[#allocation2 + $0xc8] sm:$0xff]
        %v4852 = vld [vmem:[#allocation2 + $0xd0] sm:$0xff]
        %v4853 = vld [vmem:[#allocation2 + $0xd8] sm:$0xff]
        %v4854 = vld [vmem:[#allocation2 + $0xe0] sm:$0xff]
        %v4855 = vld [vmem:[#allocation2 + $0xe8] sm:$0xff]
        %v4856 = vld [vmem:[#allocation2 + $0xf0] sm:$0xff]
        %v4857 = vld [vmem:[#allocation2 + $0xf8] sm:$0xff]
        %v4858 = vld [vmem:[%s2] sm:$0x1]
        %v4860 = vperm.slane %v4858, 0
        %v4862 = vadd.f32 %v4826, %v4860
        %v4863 = vadd.f32 %v4827, %v4860
        %v4864 = vadd.f32 %v4828, %v4860
        %v4865 = vadd.f32 %v4829, %v4860
        %v4866 = vadd.f32 %v4830, %v4860
        %v4867 = vadd.f32 %v4831, %v4860
        %v4868 = vadd.f32 %v4832, %v4860
        %v4869 = vadd.f32 %v4833, %v4860
        %v4870 = vadd.f32 %v4834, %v4860
        %v4871 = vadd.f32 %v4835, %v4860
        %v4872 = vadd.f32 %v4836, %v4860
        %v4873 = vadd.f32 %v4837, %v4860
        %v4874 = vadd.f32 %v4838, %v4860
        %v4875 = vadd.f32 %v4839, %v4860
        %v4876 = vadd.f32 %v4840, %v4860
        %v4877 = vadd.f32 %v4841, %v4860
        %v4878 = vadd.f32 %v4842, %v4860
        %v4879 = vadd.f32 %v4843, %v4860
        %v4880 = vadd.f32 %v4844, %v4860
        %v4881 = vadd.f32 %v4845, %v4860
        %v4882 = vadd.f32 %v4846, %v4860
        %v4883 = vadd.f32 %v4847, %v4860
        %v4884 = vadd.f32 %v4848, %v4860
        %v4885 = vadd.f32 %v4849, %v4860
        %v4886 = vadd.f32 %v4850, %v4860
        %v4887 = vadd.f32 %v4851, %v4860
        %v4888 = vadd.f32 %v4852, %v4860
        %v4889 = vadd.f32 %v4853, %v4860
        %v4890 = vadd.f32 %v4854, %v4860
        %v4891 = vadd.f32 %v4855, %v4860
        %v4892 = vadd.f32 %v4856, %v4860
        %v4893 = vadd.f32 %v4857, %v4860
        %4894 = vst [vmem:[%s177] sm:$0xff] %v4862
        %4895 = vst [vmem:[%s177 + $0x8] sm:$0xff] %v4863
        %4896 = vst [vmem:[%s177 + $0x10] sm:$0xff] %v4864
        %4897 = vst [vmem:[%s177 + $0x18] sm:$0xff] %v4865
        %4898 = vst [vmem:[%s177 + $0x20] sm:$0xff] %v4866
        %4899 = vst [vmem:[%s177 + $0x28] sm:$0xff] %v4867
        %4900 = vst [vmem:[%s177 + $0x30] sm:$0xff] %v4868
        %4901 = vst [vmem:[%s177 + $0x38] sm:$0xff] %v4869
        %4902 = vst [vmem:[%s177 + $0x40] sm:$0xff] %v4870
        %4903 = vst [vmem:[%s177 + $0x48] sm:$0xff] %v4871
        %4904 = vst [vmem:[%s177 + $0x50] sm:$0xff] %v4872
        %4905 = vst [vmem:[%s177 + $0x58] sm:$0xff] %v4873
        %4906 = vst [vmem:[%s177 + $0x60] sm:$0xff] %v4874
        %4907 = vst [vmem:[%s177 + $0x68] sm:$0xff] %v4875
        %4908 = vst [vmem:[%s177 + $0x70] sm:$0xff] %v4876
        %4909 = vst [vmem:[%s177 + $0x78] sm:$0xff] %v4877
        %4910 = vst [vmem:[%s177 + $0x80] sm:$0xff] %v4878
        %4911 = vst [vmem:[%s177 + $0x88] sm:$0xff] %v4879
        %4912 = vst [vmem:[%s177 + $0x90] sm:$0xff] %v4880
        %4913 = vst [vmem:[%s177 + $0x98] sm:$0xff] %v4881
        %4914 = vst [vmem:[%s177 + $0xa0] sm:$0xff] %v4882
        %4915 = vst [vmem:[%s177 + $0xa8] sm:$0xff] %v4883
        %4916 = vst [vmem:[%s177 + $0xb0] sm:$0xff] %v4884
        %4917 = vst [vmem:[%s177 + $0xb8] sm:$0xff] %v4885
        %4918 = vst [vmem:[%s177 + $0xc0] sm:$0xff] %v4886
        %4919 = vst [vmem:[%s177 + $0xc8] sm:$0xff] %v4887
        %4920 = vst [vmem:[%s177 + $0xd0] sm:$0xff] %v4888
        %4921 = vst [vmem:[%s177 + $0xd8] sm:$0xff] %v4889
        %4922 = vst [vmem:[%s177 + $0xe0] sm:$0xff] %v4890
        %4923 = vst [vmem:[%s177 + $0xe8] sm:$0xff] %v4891
        %4924 = vst [vmem:[%s177 + $0xf0] sm:$0xff] %v4892
        %4925 = vst [vmem:[%s177 + $0xf8] sm:$0xff] %v4893
        %s4926 = sand.u32 %s107, 1
        %s4927 = scalar_lea.sflag [#allocation4], %s4926
        %s4928 = sand.u32 %s107, 1
        %s4929 = smul.addr %s4928, 256
        %s4930 = scalar_lea.vmem [#allocation3], %s4929
        // Predicated region
        $region33: #{tpu_custom_call.1} parent=31 // pred_check
          %p4931 = pneg %p117
        $region34: #{tpu_custom_call.1} parent=31 // pred_check_branch
          %4933 = sbr.rel (%p4931) target = $region36
        $region35: #{tpu_custom_call.1} parent=31 // pred_region
          %s4934 = smul.u32 16, %s22
          %4936 = vsyncadd %s4927, 0
          %s4937 = smul.addr %s4934, 2
          %s4938 = smul.addr %s21, 32
          %s4939 = sadd.s32 %s4937, %s4938
          %s4940 = smul.addr %s4939, 8
          %s4941 = scalar_lea.hbm %s3, %s4940
          %s4942 = sshll.u32 %s4930, 4
          %s4943 = int_to_ptr.vmem [resolvable:$true] %s4942
          %s4944 = sshll.u32 %s4941, 4
          %s4945 = int_to_ptr.hbm [resolvable:$true] %s4944
          %4950 = dma.vmem_to_hbm [thread:$0]  %s4943, 4096, %s4945, %s4927, 128, 128, 8
        $region36: #{tpu_custom_call.1} parent=31 // pred_fallthru
          _
      $region32: #{tpu_custom_call.1} parent=5 // pred_fallthru
        _
      %p4951 = scmp.le.s32.totalorder 2, %s12
      // Predicated region
      $region37: #{tpu_custom_call.1} parent=5 // pred_check
        %p4952 = pneg %p4951
      $region38: #{tpu_custom_call.1} parent=5 // pred_check_branch
        %4954 = sbr.rel (%p4952) target = $region40
      $region39: #{tpu_custom_call.1} parent=5 // pred_region
        %s4955 = ssub.s32 %s12, 2
        // Predicated region
        $region41: #{tpu_custom_call.1} parent=39 // pred_check
          %p4956 = pneg %p123
        $region42: #{tpu_custom_call.1} parent=39 // pred_check_branch
          %4958 = sbr.rel (%p4956) target = $region44
        $region43: #{tpu_custom_call.1} parent=39 // pred_region
          %s4959 = sand.u32 %s108, 1
          %s4960 = scalar_lea.sflag [#allocation4], %s4959
          %s4961 = sand.u32 %s108, 1
          %s4962 = smul.addr %s4961, 256
          %s4963 = scalar_lea.vmem [#allocation3], %s4962
          %4965 = dma.done %s4960, 4096
        $region44: #{tpu_custom_call.1} parent=39 // pred_fallthru
          _
      $region40: #{tpu_custom_call.1} parent=5 // pred_fallthru
        _
    $region6: #{tpu_custom_call.1} parent=1 // loop_footer
      %s16 = sadd.s32 1, %s12
    $region7: #{tpu_custom_call.1} parent=1 // loop_footer_branch
      %11 = sbr.rel target = $region3
    $region8: #{tpu_custom_call.1} parent=1 // loop_exit
      _
    %4966 = vsyncpa [#allocation4], 1
    %s4967 = scalar_lea.sflag [#allocation4], 1
    %4968 = vsyncpa %s4967, 1

</llo_original>
